<compile_context>
chip_gen: v7x
topology: tpu7x:2x2x1
jax: 0.10.0
libtpu: 0.0.40
codegen_flags: <defaults>
</compile_context>

<pallas_src>
import jax
import jax.numpy as jnp
from jax import lax
from jax.experimental import pallas as pl
from jax.experimental.pallas import tpu as pltpu


# ------------------------------ Pallas kernel --------------------------------

def cnn_fused_kernel(p_ref, w1_ref, b1_ref, w2_ref, b2_ref, wfc_ref, bfc_ref,
                     o_ref):
    # p_ref : (7, 512, 48) conv1 im2col patches for one image.  Strip `pr`
    #         holds rows ordered  idx = r*64 + k*8 + pc  with r, k in 0..7
    #         (offsets inside the 8x8 pooling window), pc = pool column
    #         (pc == 7 is zero padding, never consumed downstream).
    # w1_ref: (48, 8)     b1_ref : (1, 8)
    # w2_ref: (4, 8, 16)  one (ci, co) matrix per conv2 tap (index 2*ki + kj)
    # b2_ref: (1, 16)     wfc_ref: (16, 6)    bfc_ref: (1, 6)
    # o_ref : (1, 6) logits for this image.

    # ---- conv1 + ReLU + maxpool1, one pool-row strip at a time -------------
    pooled1 = []                                   # 7 values of (8, 8): [pc, ch]
    for pr in range(7):
        strip = p_ref[pr]                                          # (512, 48)
        y = jnp.dot(strip, w1_ref[...], preferred_element_type=jnp.float32)
        y = jnp.maximum(y + b1_ref[...], 0.0)                      # (512, 8)
        # max over the 8 rows of every pooling window (sublane-aligned slices)
        rmax = y[0:64, :]
        for r in range(1, 8):
            rmax = jnp.maximum(rmax, y[64 * r:64 * r + 64, :])     # (64, 8)
        # max over the 8 columns of every pooling window
        cmax = rmax[0:8, :]
        for k in range(1, 8):
            cmax = jnp.maximum(cmax, rmax[8 * k:8 * k + 8, :])     # (8, 8)
        pooled1.append(cmax)            # maxpool1 row pr; column 7 is padding

    # ---- conv2 + ReLU + maxpool2 (only the 4x4 region the pool reads) ------
    pooled2 = None
    for i in range(4):                  # conv2 output row i, columns 0..3
        acc = None
        for ki in range(2):
            row = pooled1[i + ki]                                  # (8, 8)
            for kj in range(2):
                a = row[kj:kj + 4, :]                              # (4, 8)
                d = jnp.dot(a, w2_ref[2 * ki + kj],
                            preferred_element_type=jnp.float32)    # (4, 16)
                acc = d if acc is None else acc + d
        acc = jnp.maximum(acc + b2_ref[...], 0.0)                  # ReLU
        m = jnp.max(acc, axis=0, keepdims=True)                    # (1, 16)
        pooled2 = m if pooled2 is None else jnp.maximum(pooled2, m)

    # ---- flatten (1x1 spatial -> 16 channels) + fc --------------------------
    o_ref[...] = (jnp.dot(pooled2, wfc_ref[...],
                          preferred_element_type=jnp.float32) + bfc_ref[...])


# ------------------------------ host wrapper ----------------------------------

def _conv1_patches(x_nchw):
    """im2col for conv1, restricted to the 56x56 output region maxpool1 reads,
    rows ordered (pool_row, window_row r, window_col k, pool_col pc[7->8])."""
    B = x_nchw.shape[0]
    x = jnp.transpose(x_nchw, (0, 2, 3, 1))                        # NHWC
    xp = jnp.pad(x, ((0, 0), (1, 1), (1, 1), (0, 0)))              # (B, 66, 66, 3)
    cols = []
    for ki in range(4):
        for kj in range(4):
            cols.append(xp[:, ki:ki + 56, kj:kj + 56, :])          # (B, 56, 56, 3)
    p = jnp.stack(cols, axis=3).reshape(B, 56, 56, 48)             # K = (kh, kw, ci)
    p = p.reshape(B, 7, 8, 7, 8, 48)                               # (B, pr, r, pc, k, K)
    p = jnp.transpose(p, (0, 1, 2, 4, 3, 5))                       # (B, pr, r, k, pc, K)
    p = jnp.pad(p, ((0, 0), (0, 0), (0, 0), (0, 0), (0, 1), (0, 0)))  # pc: 7 -> 8
    return p.reshape(B, 7, 512, 48)


@jax.jit
def cnn_digit_forward(x_nchw, params):
    w1, b1, w2, b2, wfc, bfc = params
    B = x_nchw.shape[0]

    patches = _conv1_patches(x_nchw)                               # (B, 7, 512, 48)
    w1mat = jnp.transpose(w1, (2, 3, 1, 0)).reshape(48, 8)         # K=(kh,kw,ci) x co
    w2mat = jnp.transpose(w2, (2, 3, 1, 0)).reshape(4, 8, 16)      # [2ki+kj] -> (ci,co)
    wfct = jnp.transpose(wfc)                                      # (16, 6)

    out = pl.pallas_call(
        cnn_fused_kernel,
        out_shape=jax.ShapeDtypeStruct((B, 1, 6), jnp.float32),
        grid=(B,),
        in_specs=[
            pl.BlockSpec((None, 7, 512, 48), lambda b: (b, 0, 0, 0)),
            pl.BlockSpec((48, 8), lambda b: (0, 0)),
            pl.BlockSpec((1, 8), lambda b: (0, 0)),
            pl.BlockSpec((4, 8, 16), lambda b: (0, 0, 0)),
            pl.BlockSpec((1, 16), lambda b: (0, 0)),
            pl.BlockSpec((16, 6), lambda b: (0, 0)),
            pl.BlockSpec((1, 6), lambda b: (0, 0)),
        ],
        out_specs=pl.BlockSpec((None, 1, 6), lambda b: (b, 0, 0)),
        compiler_params=pltpu.CompilerParams(
            dimension_semantics=("parallel",)),
    )(patches, w1mat, b1.reshape(1, 8), w2mat, b2.reshape(1, 16),
      wfct, bfc.reshape(1, 6))
    return out.reshape(B, 6)


# --------------------------- reference & params --------------------------------

def reference_forward(x, params):
    w1, b1, w2, b2, wfc, bfc = params
    y = lax.conv_general_dilated(x, w1, (1, 1), ((1, 1), (1, 1)),
                                 dimension_numbers=("NCHW", "OIHW", "NCHW"))
    y = jnp.maximum(y + b1[None, :, None, None], 0.0)
    y = lax.reduce_window(y, -jnp.inf, lax.max, (1, 1, 8, 8), (1, 1, 8, 8), "VALID")
    y = lax.conv_general_dilated(y, w2, (1, 1), "VALID",
                                 dimension_numbers=("NCHW", "OIHW", "NCHW"))
    y = jnp.maximum(y + b2[None, :, None, None], 0.0)
    y = lax.reduce_window(y, -jnp.inf, lax.max, (1, 1, 4, 4), (1, 1, 4, 4), "VALID")
    y = y.reshape(y.shape[0], -1)
    return y @ wfc.T + bfc


def init_params(key):
    ks = jax.random.split(key, 6)

    def u(k, shape, fan_in):
        bound = 1.0 / (fan_in ** 0.5)
        return jax.random.uniform(k, shape, jnp.float32, -bound, bound)

    w1 = u(ks[0], (8, 3, 4, 4), 3 * 4 * 4)
    b1 = u(ks[1], (8,), 3 * 4 * 4)
    w2 = u(ks[2], (16, 8, 2, 2), 8 * 2 * 2)
    b2 = u(ks[3], (16,), 8 * 2 * 2)
    wfc = u(ks[4], (6, 16), 16)
    bfc = u(ks[5], (6,), 16)
    return (w1, b1, w2, b2, wfc, bfc)


if __name__ == "__main__":
    params = init_params(jax.random.PRNGKey(42))
    # Spatial size 64 is what the forward implies (flatten must yield 16 features).
    x = jax.random.normal(jax.random.PRNGKey(0), (2, 3, 64, 64), jnp.float32)

    out = jax.block_until_ready(cnn_digit_forward(x, params))
    ref = jax.block_until_ready(reference_forward(x, params))

    assert out.shape == (2, 6), out.shape
    err = float(jnp.max(jnp.abs(out - ref)))
    if err > 1e-3:
        raise AssertionError(f"Pallas output mismatch vs reference, max abs err = {err}")
    print("KERNEL_OK")
</pallas_src>

<mosaic_0001>
module attributes {stable_mosaic.version = 11 : i64} {
  func.func @cnn_fused_kernel(%arg0: i32, %arg1: memref<1x7x512x48xf32, #tpu.memory_space<vmem>>, %arg2: memref<48x8xf32, #tpu.memory_space<vmem>>, %arg3: memref<1x8xf32, #tpu.memory_space<vmem>>, %arg4: memref<4x8x16xf32, #tpu.memory_space<vmem>>, %arg5: memref<1x16xf32, #tpu.memory_space<vmem>>, %arg6: memref<16x6xf32, #tpu.memory_space<vmem>>, %arg7: memref<1x6xf32, #tpu.memory_space<vmem>>, %arg8: memref<1x1x6xf32, #tpu.memory_space<vmem>>) attributes {dimension_semantics = [#tpu.dimension_semantics<parallel>], iteration_bounds = array<i64: 2>, scalar_prefetch = 0 : i64, scratch_operands = 0 : i64, tpu.core_type = #tpu.core_type<tc>, window_params = [{transform_indices = @transform_0, window_bounds = array<i64: 1, 7, 512, 48>}, {pipeline_mode = #tpu.pipeline_mode<synchronous>, transform_indices = @transform_1, window_bounds = array<i64: 48, 8>}, {pipeline_mode = #tpu.pipeline_mode<synchronous>, transform_indices = @transform_2, window_bounds = array<i64: 1, 8>}, {pipeline_mode = #tpu.pipeline_mode<synchronous>, transform_indices = @transform_3, window_bounds = array<i64: 4, 8, 16>}, {pipeline_mode = #tpu.pipeline_mode<synchronous>, transform_indices = @transform_4, window_bounds = array<i64: 1, 16>}, {pipeline_mode = #tpu.pipeline_mode<synchronous>, transform_indices = @transform_5, window_bounds = array<i64: 16, 6>}, {pipeline_mode = #tpu.pipeline_mode<synchronous>, transform_indices = @transform_6, window_bounds = array<i64: 1, 6>}, {transform_indices = @transform_7, window_bounds = array<i64: 1, 1, 6>}]} {
    %c0 = arith.constant 0 : index
    %c0_0 = arith.constant 0 : index
    %c0_1 = arith.constant 0 : index
    %c0_2 = arith.constant 0 : index
    %0 = vector.load %arg1[%c0, %c0_0, %c0_1, %c0_2] : memref<1x7x512x48xf32, #tpu.memory_space<vmem>>, vector<1x1x512x48xf32>
    %1 = vector.shape_cast %0 : vector<1x1x512x48xf32> to vector<512x48xf32>
    %c0_3 = arith.constant 0 : index
    %c0_4 = arith.constant 0 : index
    %2 = vector.load %arg2[%c0_3, %c0_4] : memref<48x8xf32, #tpu.memory_space<vmem>>, vector<48x8xf32>
    %cst = arith.constant dense<0.000000e+00> : vector<512x8xf32>
    %3 = tpu.matmul %1, %2, %cst {dimension_numbers = #tpu.dot_dimension_numbers<[1], [0], [0], [1], [0, 0, 1, 1], [], []>} : vector<512x48xf32>, vector<48x8xf32>, vector<512x8xf32> -> vector<512x8xf32>
    %c0_5 = arith.constant 0 : index
    %c0_6 = arith.constant 0 : index
    %4 = vector.load %arg3[%c0_5, %c0_6] : memref<1x8xf32, #tpu.memory_space<vmem>>, vector<1x8xf32>
    %5 = vector.broadcast %4 : vector<1x8xf32> to vector<512x8xf32>
    %6 = arith.addf %3, %5 : vector<512x8xf32>
    %cst_7 = arith.constant 0.000000e+00 : f32
    %7 = vector.broadcast %cst_7 : f32 to vector<512x8xf32>
    %8 = arith.maximumf %6, %7 : vector<512x8xf32>
    %9 = vector.extract_strided_slice %8 {offsets = [0, 0], sizes = [64, 8], strides = [1, 1]} : vector<512x8xf32> to vector<64x8xf32>
    %10 = vector.extract_strided_slice %8 {offsets = [64, 0], sizes = [64, 8], strides = [1, 1]} : vector<512x8xf32> to vector<64x8xf32>
    %11 = arith.maximumf %9, %10 : vector<64x8xf32>
    %12 = vector.extract_strided_slice %8 {offsets = [128, 0], sizes = [64, 8], strides = [1, 1]} : vector<512x8xf32> to vector<64x8xf32>
    %13 = arith.maximumf %11, %12 : vector<64x8xf32>
    %14 = vector.extract_strided_slice %8 {offsets = [192, 0], sizes = [64, 8], strides = [1, 1]} : vector<512x8xf32> to vector<64x8xf32>
    %15 = arith.maximumf %13, %14 : vector<64x8xf32>
    %16 = vector.extract_strided_slice %8 {offsets = [256, 0], sizes = [64, 8], strides = [1, 1]} : vector<512x8xf32> to vector<64x8xf32>
    %17 = arith.maximumf %15, %16 : vector<64x8xf32>
    %18 = vector.extract_strided_slice %8 {offsets = [320, 0], sizes = [64, 8], strides = [1, 1]} : vector<512x8xf32> to vector<64x8xf32>
    %19 = arith.maximumf %17, %18 : vector<64x8xf32>
    %20 = vector.extract_strided_slice %8 {offsets = [384, 0], sizes = [64, 8], strides = [1, 1]} : vector<512x8xf32> to vector<64x8xf32>
    %21 = arith.maximumf %19, %20 : vector<64x8xf32>
    %22 = vector.extract_strided_slice %8 {offsets = [448, 0], sizes = [64, 8], strides = [1, 1]} : vector<512x8xf32> to vector<64x8xf32>
    %23 = arith.maximumf %21, %22 : vector<64x8xf32>
    %24 = vector.extract_strided_slice %23 {offsets = [0, 0], sizes = [8, 8], strides = [1, 1]} : vector<64x8xf32> to vector<8x8xf32>
    %25 = vector.extract_strided_slice %23 {offsets = [8, 0], sizes = [8, 8], strides = [1, 1]} : vector<64x8xf32> to vector<8x8xf32>
    %26 = arith.maximumf %24, %25 : vector<8x8xf32>
    %27 = vector.extract_strided_slice %23 {offsets = [16, 0], sizes = [8, 8], strides = [1, 1]} : vector<64x8xf32> to vector<8x8xf32>
    %28 = arith.maximumf %26, %27 : vector<8x8xf32>
    %29 = vector.extract_strided_slice %23 {offsets = [24, 0], sizes = [8, 8], strides = [1, 1]} : vector<64x8xf32> to vector<8x8xf32>
    %30 = arith.maximumf %28, %29 : vector<8x8xf32>
    %31 = vector.extract_strided_slice %23 {offsets = [32, 0], sizes = [8, 8], strides = [1, 1]} : vector<64x8xf32> to vector<8x8xf32>
    %32 = arith.maximumf %30, %31 : vector<8x8xf32>
    %33 = vector.extract_strided_slice %23 {offsets = [40, 0], sizes = [8, 8], strides = [1, 1]} : vector<64x8xf32> to vector<8x8xf32>
    %34 = arith.maximumf %32, %33 : vector<8x8xf32>
    %35 = vector.extract_strided_slice %23 {offsets = [48, 0], sizes = [8, 8], strides = [1, 1]} : vector<64x8xf32> to vector<8x8xf32>
    %36 = arith.maximumf %34, %35 : vector<8x8xf32>
    %37 = vector.extract_strided_slice %23 {offsets = [56, 0], sizes = [8, 8], strides = [1, 1]} : vector<64x8xf32> to vector<8x8xf32>
    %38 = arith.maximumf %36, %37 : vector<8x8xf32>
    %c0_8 = arith.constant 0 : index
    %c1 = arith.constant 1 : index
    %c0_9 = arith.constant 0 : index
    %c0_10 = arith.constant 0 : index
    %39 = vector.load %arg1[%c0_8, %c1, %c0_9, %c0_10] : memref<1x7x512x48xf32, #tpu.memory_space<vmem>>, vector<1x1x512x48xf32>
    %40 = vector.shape_cast %39 : vector<1x1x512x48xf32> to vector<512x48xf32>
    %c0_11 = arith.constant 0 : index
    %c0_12 = arith.constant 0 : index
    %41 = vector.load %arg2[%c0_11, %c0_12] : memref<48x8xf32, #tpu.memory_space<vmem>>, vector<48x8xf32>
    %cst_13 = arith.constant dense<0.000000e+00> : vector<512x8xf32>
    %42 = tpu.matmul %40, %41, %cst_13 {dimension_numbers = #tpu.dot_dimension_numbers<[1], [0], [0], [1], [0, 0, 1, 1], [], []>} : vector<512x48xf32>, vector<48x8xf32>, vector<512x8xf32> -> vector<512x8xf32>
    %c0_14 = arith.constant 0 : index
    %c0_15 = arith.constant 0 : index
    %43 = vector.load %arg3[%c0_14, %c0_15] : memref<1x8xf32, #tpu.memory_space<vmem>>, vector<1x8xf32>
    %44 = vector.broadcast %43 : vector<1x8xf32> to vector<512x8xf32>
    %45 = arith.addf %42, %44 : vector<512x8xf32>
    %cst_16 = arith.constant 0.000000e+00 : f32
    %46 = vector.broadcast %cst_16 : f32 to vector<512x8xf32>
    %47 = arith.maximumf %45, %46 : vector<512x8xf32>
    %48 = vector.extract_strided_slice %47 {offsets = [0, 0], sizes = [64, 8], strides = [1, 1]} : vector<512x8xf32> to vector<64x8xf32>
    %49 = vector.extract_strided_slice %47 {offsets = [64, 0], sizes = [64, 8], strides = [1, 1]} : vector<512x8xf32> to vector<64x8xf32>
    %50 = arith.maximumf %48, %49 : vector<64x8xf32>
    %51 = vector.extract_strided_slice %47 {offsets = [128, 0], sizes = [64, 8], strides = [1, 1]} : vector<512x8xf32> to vector<64x8xf32>
    %52 = arith.maximumf %50, %51 : vector<64x8xf32>
    %53 = vector.extract_strided_slice %47 {offsets = [192, 0], sizes = [64, 8], strides = [1, 1]} : vector<512x8xf32> to vector<64x8xf32>
    %54 = arith.maximumf %52, %53 : vector<64x8xf32>
    %55 = vector.extract_strided_slice %47 {offsets = [256, 0], sizes = [64, 8], strides = [1, 1]} : vector<512x8xf32> to vector<64x8xf32>
    %56 = arith.maximumf %54, %55 : vector<64x8xf32>
    %57 = vector.extract_strided_slice %47 {offsets = [320, 0], sizes = [64, 8], strides = [1, 1]} : vector<512x8xf32> to vector<64x8xf32>
    %58 = arith.maximumf %56, %57 : vector<64x8xf32>
    %59 = vector.extract_strided_slice %47 {offsets = [384, 0], sizes = [64, 8], strides = [1, 1]} : vector<512x8xf32> to vector<64x8xf32>
    %60 = arith.maximumf %58, %59 : vector<64x8xf32>
    %61 = vector.extract_strided_slice %47 {offsets = [448, 0], sizes = [64, 8], strides = [1, 1]} : vector<512x8xf32> to vector<64x8xf32>
    %62 = arith.maximumf %60, %61 : vector<64x8xf32>
    %63 = vector.extract_strided_slice %62 {offsets = [0, 0], sizes = [8, 8], strides = [1, 1]} : vector<64x8xf32> to vector<8x8xf32>
    %64 = vector.extract_strided_slice %62 {offsets = [8, 0], sizes = [8, 8], strides = [1, 1]} : vector<64x8xf32> to vector<8x8xf32>
    %65 = arith.maximumf %63, %64 : vector<8x8xf32>
    %66 = vector.extract_strided_slice %62 {offsets = [16, 0], sizes = [8, 8], strides = [1, 1]} : vector<64x8xf32> to vector<8x8xf32>
    %67 = arith.maximumf %65, %66 : vector<8x8xf32>
    %68 = vector.extract_strided_slice %62 {offsets = [24, 0], sizes = [8, 8], strides = [1, 1]} : vector<64x8xf32> to vector<8x8xf32>
    %69 = arith.maximumf %67, %68 : vector<8x8xf32>
    %70 = vector.extract_strided_slice %62 {offsets = [32, 0], sizes = [8, 8], strides = [1, 1]} : vector<64x8xf32> to vector<8x8xf32>
    %71 = arith.maximumf %69, %70 : vector<8x8xf32>
    %72 = vector.extract_strided_slice %62 {offsets = [40, 0], sizes = [8, 8], strides = [1, 1]} : vector<64x8xf32> to vector<8x8xf32>
    %73 = arith.maximumf %71, %72 : vector<8x8xf32>
    %74 = vector.extract_strided_slice %62 {offsets = [48, 0], sizes = [8, 8], strides = [1, 1]} : vector<64x8xf32> to vector<8x8xf32>
    %75 = arith.maximumf %73, %74 : vector<8x8xf32>
    %76 = vector.extract_strided_slice %62 {offsets = [56, 0], sizes = [8, 8], strides = [1, 1]} : vector<64x8xf32> to vector<8x8xf32>
    %77 = arith.maximumf %75, %76 : vector<8x8xf32>
    %c0_17 = arith.constant 0 : index
    %c2 = arith.constant 2 : index
    %c0_18 = arith.constant 0 : index
    %c0_19 = arith.constant 0 : index
    %78 = vector.load %arg1[%c0_17, %c2, %c0_18, %c0_19] : memref<1x7x512x48xf32, #tpu.memory_space<vmem>>, vector<1x1x512x48xf32>
    %79 = vector.shape_cast %78 : vector<1x1x512x48xf32> to vector<512x48xf32>
    %c0_20 = arith.constant 0 : index
    %c0_21 = arith.constant 0 : index
    %80 = vector.load %arg2[%c0_20, %c0_21] : memref<48x8xf32, #tpu.memory_space<vmem>>, vector<48x8xf32>
    %cst_22 = arith.constant dense<0.000000e+00> : vector<512x8xf32>
    %81 = tpu.matmul %79, %80, %cst_22 {dimension_numbers = #tpu.dot_dimension_numbers<[1], [0], [0], [1], [0, 0, 1, 1], [], []>} : vector<512x48xf32>, vector<48x8xf32>, vector<512x8xf32> -> vector<512x8xf32>
    %c0_23 = arith.constant 0 : index
    %c0_24 = arith.constant 0 : index
    %82 = vector.load %arg3[%c0_23, %c0_24] : memref<1x8xf32, #tpu.memory_space<vmem>>, vector<1x8xf32>
    %83 = vector.broadcast %82 : vector<1x8xf32> to vector<512x8xf32>
    %84 = arith.addf %81, %83 : vector<512x8xf32>
    %cst_25 = arith.constant 0.000000e+00 : f32
    %85 = vector.broadcast %cst_25 : f32 to vector<512x8xf32>
    %86 = arith.maximumf %84, %85 : vector<512x8xf32>
    %87 = vector.extract_strided_slice %86 {offsets = [0, 0], sizes = [64, 8], strides = [1, 1]} : vector<512x8xf32> to vector<64x8xf32>
    %88 = vector.extract_strided_slice %86 {offsets = [64, 0], sizes = [64, 8], strides = [1, 1]} : vector<512x8xf32> to vector<64x8xf32>
    %89 = arith.maximumf %87, %88 : vector<64x8xf32>
    %90 = vector.extract_strided_slice %86 {offsets = [128, 0], sizes = [64, 8], strides = [1, 1]} : vector<512x8xf32> to vector<64x8xf32>
    %91 = arith.maximumf %89, %90 : vector<64x8xf32>
    %92 = vector.extract_strided_slice %86 {offsets = [192, 0], sizes = [64, 8], strides = [1, 1]} : vector<512x8xf32> to vector<64x8xf32>
    %93 = arith.maximumf %91, %92 : vector<64x8xf32>
    %94 = vector.extract_strided_slice %86 {offsets = [256, 0], sizes = [64, 8], strides = [1, 1]} : vector<512x8xf32> to vector<64x8xf32>
    %95 = arith.maximumf %93, %94 : vector<64x8xf32>
    %96 = vector.extract_strided_slice %86 {offsets = [320, 0], sizes = [64, 8], strides = [1, 1]} : vector<512x8xf32> to vector<64x8xf32>
    %97 = arith.maximumf %95, %96 : vector<64x8xf32>
    %98 = vector.extract_strided_slice %86 {offsets = [384, 0], sizes = [64, 8], strides = [1, 1]} : vector<512x8xf32> to vector<64x8xf32>
    %99 = arith.maximumf %97, %98 : vector<64x8xf32>
    %100 = vector.extract_strided_slice %86 {offsets = [448, 0], sizes = [64, 8], strides = [1, 1]} : vector<512x8xf32> to vector<64x8xf32>
    %101 = arith.maximumf %99, %100 : vector<64x8xf32>
    %102 = vector.extract_strided_slice %101 {offsets = [0, 0], sizes = [8, 8], strides = [1, 1]} : vector<64x8xf32> to vector<8x8xf32>
    %103 = vector.extract_strided_slice %101 {offsets = [8, 0], sizes = [8, 8], strides = [1, 1]} : vector<64x8xf32> to vector<8x8xf32>
    %104 = arith.maximumf %102, %103 : vector<8x8xf32>
    %105 = vector.extract_strided_slice %101 {offsets = [16, 0], sizes = [8, 8], strides = [1, 1]} : vector<64x8xf32> to vector<8x8xf32>
    %106 = arith.maximumf %104, %105 : vector<8x8xf32>
    %107 = vector.extract_strided_slice %101 {offsets = [24, 0], sizes = [8, 8], strides = [1, 1]} : vector<64x8xf32> to vector<8x8xf32>
    %108 = arith.maximumf %106, %107 : vector<8x8xf32>
    %109 = vector.extract_strided_slice %101 {offsets = [32, 0], sizes = [8, 8], strides = [1, 1]} : vector<64x8xf32> to vector<8x8xf32>
    %110 = arith.maximumf %108, %109 : vector<8x8xf32>
    %111 = vector.extract_strided_slice %101 {offsets = [40, 0], sizes = [8, 8], strides = [1, 1]} : vector<64x8xf32> to vector<8x8xf32>
    %112 = arith.maximumf %110, %111 : vector<8x8xf32>
    %113 = vector.extract_strided_slice %101 {offsets = [48, 0], sizes = [8, 8], strides = [1, 1]} : vector<64x8xf32> to vector<8x8xf32>
    %114 = arith.maximumf %112, %113 : vector<8x8xf32>
    %115 = vector.extract_strided_slice %101 {offsets = [56, 0], sizes = [8, 8], strides = [1, 1]} : vector<64x8xf32> to vector<8x8xf32>
    %116 = arith.maximumf %114, %115 : vector<8x8xf32>
    %c0_26 = arith.constant 0 : index
    %c3 = arith.constant 3 : index
    %c0_27 = arith.constant 0 : index
    %c0_28 = arith.constant 0 : index
    %117 = vector.load %arg1[%c0_26, %c3, %c0_27, %c0_28] : memref<1x7x512x48xf32, #tpu.memory_space<vmem>>, vector<1x1x512x48xf32>
    %118 = vector.shape_cast %117 : vector<1x1x512x48xf32> to vector<512x48xf32>
    %c0_29 = arith.constant 0 : index
    %c0_30 = arith.constant 0 : index
    %119 = vector.load %arg2[%c0_29, %c0_30] : memref<48x8xf32, #tpu.memory_space<vmem>>, vector<48x8xf32>
    %cst_31 = arith.constant dense<0.000000e+00> : vector<512x8xf32>
    %120 = tpu.matmul %118, %119, %cst_31 {dimension_numbers = #tpu.dot_dimension_numbers<[1], [0], [0], [1], [0, 0, 1, 1], [], []>} : vector<512x48xf32>, vector<48x8xf32>, vector<512x8xf32> -> vector<512x8xf32>
    %c0_32 = arith.constant 0 : index
    %c0_33 = arith.constant 0 : index
    %121 = vector.load %arg3[%c0_32, %c0_33] : memref<1x8xf32, #tpu.memory_space<vmem>>, vector<1x8xf32>
    %122 = vector.broadcast %121 : vector<1x8xf32> to vector<512x8xf32>
    %123 = arith.addf %120, %122 : vector<512x8xf32>
    %cst_34 = arith.constant 0.000000e+00 : f32
    %124 = vector.broadcast %cst_34 : f32 to vector<512x8xf32>
    %125 = arith.maximumf %123, %124 : vector<512x8xf32>
    %126 = vector.extract_strided_slice %125 {offsets = [0, 0], sizes = [64, 8], strides = [1, 1]} : vector<512x8xf32> to vector<64x8xf32>
    %127 = vector.extract_strided_slice %125 {offsets = [64, 0], sizes = [64, 8], strides = [1, 1]} : vector<512x8xf32> to vector<64x8xf32>
    %128 = arith.maximumf %126, %127 : vector<64x8xf32>
    %129 = vector.extract_strided_slice %125 {offsets = [128, 0], sizes = [64, 8], strides = [1, 1]} : vector<512x8xf32> to vector<64x8xf32>
    %130 = arith.maximumf %128, %129 : vector<64x8xf32>
    %131 = vector.extract_strided_slice %125 {offsets = [192, 0], sizes = [64, 8], strides = [1, 1]} : vector<512x8xf32> to vector<64x8xf32>
    %132 = arith.maximumf %130, %131 : vector<64x8xf32>
    %133 = vector.extract_strided_slice %125 {offsets = [256, 0], sizes = [64, 8], strides = [1, 1]} : vector<512x8xf32> to vector<64x8xf32>
    %134 = arith.maximumf %132, %133 : vector<64x8xf32>
    %135 = vector.extract_strided_slice %125 {offsets = [320, 0], sizes = [64, 8], strides = [1, 1]} : vector<512x8xf32> to vector<64x8xf32>
    %136 = arith.maximumf %134, %135 : vector<64x8xf32>
    %137 = vector.extract_strided_slice %125 {offsets = [384, 0], sizes = [64, 8], strides = [1, 1]} : vector<512x8xf32> to vector<64x8xf32>
    %138 = arith.maximumf %136, %137 : vector<64x8xf32>
    %139 = vector.extract_strided_slice %125 {offsets = [448, 0], sizes = [64, 8], strides = [1, 1]} : vector<512x8xf32> to vector<64x8xf32>
    %140 = arith.maximumf %138, %139 : vector<64x8xf32>
    %141 = vector.extract_strided_slice %140 {offsets = [0, 0], sizes = [8, 8], strides = [1, 1]} : vector<64x8xf32> to vector<8x8xf32>
    %142 = vector.extract_strided_slice %140 {offsets = [8, 0], sizes = [8, 8], strides = [1, 1]} : vector<64x8xf32> to vector<8x8xf32>
    %143 = arith.maximumf %141, %142 : vector<8x8xf32>
    %144 = vector.extract_strided_slice %140 {offsets = [16, 0], sizes = [8, 8], strides = [1, 1]} : vector<64x8xf32> to vector<8x8xf32>
    %145 = arith.maximumf %143, %144 : vector<8x8xf32>
    %146 = vector.extract_strided_slice %140 {offsets = [24, 0], sizes = [8, 8], strides = [1, 1]} : vector<64x8xf32> to vector<8x8xf32>
    %147 = arith.maximumf %145, %146 : vector<8x8xf32>
    %148 = vector.extract_strided_slice %140 {offsets = [32, 0], sizes = [8, 8], strides = [1, 1]} : vector<64x8xf32> to vector<8x8xf32>
    %149 = arith.maximumf %147, %148 : vector<8x8xf32>
    %150 = vector.extract_strided_slice %140 {offsets = [40, 0], sizes = [8, 8], strides = [1, 1]} : vector<64x8xf32> to vector<8x8xf32>
    %151 = arith.maximumf %149, %150 : vector<8x8xf32>
    %152 = vector.extract_strided_slice %140 {offsets = [48, 0], sizes = [8, 8], strides = [1, 1]} : vector<64x8xf32> to vector<8x8xf32>
    %153 = arith.maximumf %151, %152 : vector<8x8xf32>
    %154 = vector.extract_strided_slice %140 {offsets = [56, 0], sizes = [8, 8], strides = [1, 1]} : vector<64x8xf32> to vector<8x8xf32>
    %155 = arith.maximumf %153, %154 : vector<8x8xf32>
    %c0_35 = arith.constant 0 : index
    %c4 = arith.constant 4 : index
    %c0_36 = arith.constant 0 : index
    %c0_37 = arith.constant 0 : index
    %156 = vector.load %arg1[%c0_35, %c4, %c0_36, %c0_37] : memref<1x7x512x48xf32, #tpu.memory_space<vmem>>, vector<1x1x512x48xf32>
    %157 = vector.shape_cast %156 : vector<1x1x512x48xf32> to vector<512x48xf32>
    %c0_38 = arith.constant 0 : index
    %c0_39 = arith.constant 0 : index
    %158 = vector.load %arg2[%c0_38, %c0_39] : memref<48x8xf32, #tpu.memory_space<vmem>>, vector<48x8xf32>
    %cst_40 = arith.constant dense<0.000000e+00> : vector<512x8xf32>
    %159 = tpu.matmul %157, %158, %cst_40 {dimension_numbers = #tpu.dot_dimension_numbers<[1], [0], [0], [1], [0, 0, 1, 1], [], []>} : vector<512x48xf32>, vector<48x8xf32>, vector<512x8xf32> -> vector<512x8xf32>
    %c0_41 = arith.constant 0 : index
    %c0_42 = arith.constant 0 : index
    %160 = vector.load %arg3[%c0_41, %c0_42] : memref<1x8xf32, #tpu.memory_space<vmem>>, vector<1x8xf32>
    %161 = vector.broadcast %160 : vector<1x8xf32> to vector<512x8xf32>
    %162 = arith.addf %159, %161 : vector<512x8xf32>
    %cst_43 = arith.constant 0.000000e+00 : f32
    %163 = vector.broadcast %cst_43 : f32 to vector<512x8xf32>
    %164 = arith.maximumf %162, %163 : vector<512x8xf32>
    %165 = vector.extract_strided_slice %164 {offsets = [0, 0], sizes = [64, 8], strides = [1, 1]} : vector<512x8xf32> to vector<64x8xf32>
    %166 = vector.extract_strided_slice %164 {offsets = [64, 0], sizes = [64, 8], strides = [1, 1]} : vector<512x8xf32> to vector<64x8xf32>
    %167 = arith.maximumf %165, %166 : vector<64x8xf32>
    %168 = vector.extract_strided_slice %164 {offsets = [128, 0], sizes = [64, 8], strides = [1, 1]} : vector<512x8xf32> to vector<64x8xf32>
    %169 = arith.maximumf %167, %168 : vector<64x8xf32>
    %170 = vector.extract_strided_slice %164 {offsets = [192, 0], sizes = [64, 8], strides = [1, 1]} : vector<512x8xf32> to vector<64x8xf32>
    %171 = arith.maximumf %169, %170 : vector<64x8xf32>
    %172 = vector.extract_strided_slice %164 {offsets = [256, 0], sizes = [64, 8], strides = [1, 1]} : vector<512x8xf32> to vector<64x8xf32>
    %173 = arith.maximumf %171, %172 : vector<64x8xf32>
    %174 = vector.extract_strided_slice %164 {offsets = [320, 0], sizes = [64, 8], strides = [1, 1]} : vector<512x8xf32> to vector<64x8xf32>
    %175 = arith.maximumf %173, %174 : vector<64x8xf32>
    %176 = vector.extract_strided_slice %164 {offsets = [384, 0], sizes = [64, 8], strides = [1, 1]} : vector<512x8xf32> to vector<64x8xf32>
    %177 = arith.maximumf %175, %176 : vector<64x8xf32>
    %178 = vector.extract_strided_slice %164 {offsets = [448, 0], sizes = [64, 8], strides = [1, 1]} : vector<512x8xf32> to vector<64x8xf32>
    %179 = arith.maximumf %177, %178 : vector<64x8xf32>
    %180 = vector.extract_strided_slice %179 {offsets = [0, 0], sizes = [8, 8], strides = [1, 1]} : vector<64x8xf32> to vector<8x8xf32>
    %181 = vector.extract_strided_slice %179 {offsets = [8, 0], sizes = [8, 8], strides = [1, 1]} : vector<64x8xf32> to vector<8x8xf32>
    %182 = arith.maximumf %180, %181 : vector<8x8xf32>
    %183 = vector.extract_strided_slice %179 {offsets = [16, 0], sizes = [8, 8], strides = [1, 1]} : vector<64x8xf32> to vector<8x8xf32>
    %184 = arith.maximumf %182, %183 : vector<8x8xf32>
    %185 = vector.extract_strided_slice %179 {offsets = [24, 0], sizes = [8, 8], strides = [1, 1]} : vector<64x8xf32> to vector<8x8xf32>
    %186 = arith.maximumf %184, %185 : vector<8x8xf32>
    %187 = vector.extract_strided_slice %179 {offsets = [32, 0], sizes = [8, 8], strides = [1, 1]} : vector<64x8xf32> to vector<8x8xf32>
    %188 = arith.maximumf %186, %187 : vector<8x8xf32>
    %189 = vector.extract_strided_slice %179 {offsets = [40, 0], sizes = [8, 8], strides = [1, 1]} : vector<64x8xf32> to vector<8x8xf32>
    %190 = arith.maximumf %188, %189 : vector<8x8xf32>
    %191 = vector.extract_strided_slice %179 {offsets = [48, 0], sizes = [8, 8], strides = [1, 1]} : vector<64x8xf32> to vector<8x8xf32>
    %192 = arith.maximumf %190, %191 : vector<8x8xf32>
    %193 = vector.extract_strided_slice %179 {offsets = [56, 0], sizes = [8, 8], strides = [1, 1]} : vector<64x8xf32> to vector<8x8xf32>
    %194 = arith.maximumf %192, %193 : vector<8x8xf32>
    %195 = vector.extract_strided_slice %38 {offsets = [0, 0], sizes = [4, 8], strides = [1, 1]} : vector<8x8xf32> to vector<4x8xf32>
    %c0_44 = arith.constant 0 : index
    %c0_45 = arith.constant 0 : index
    %c0_46 = arith.constant 0 : index
    %196 = vector.load %arg4[%c0_44, %c0_45, %c0_46] : memref<4x8x16xf32, #tpu.memory_space<vmem>>, vector<1x8x16xf32>
    %197 = vector.shape_cast %196 : vector<1x8x16xf32> to vector<8x16xf32>
    %cst_47 = arith.constant dense<0.000000e+00> : vector<4x16xf32>
    %198 = tpu.matmul %195, %197, %cst_47 {dimension_numbers = #tpu.dot_dimension_numbers<[1], [0], [0], [1], [0, 0, 1, 1], [], []>} : vector<4x8xf32>, vector<8x16xf32>, vector<4x16xf32> -> vector<4x16xf32>
    %199 = vector.extract_strided_slice %38 {offsets = [1, 0], sizes = [4, 8], strides = [1, 1]} : vector<8x8xf32> to vector<4x8xf32>
    %c1_48 = arith.constant 1 : index
    %c0_49 = arith.constant 0 : index
    %c0_50 = arith.constant 0 : index
    %200 = vector.load %arg4[%c1_48, %c0_49, %c0_50] : memref<4x8x16xf32, #tpu.memory_space<vmem>>, vector<1x8x16xf32>
    %201 = vector.shape_cast %200 : vector<1x8x16xf32> to vector<8x16xf32>
    %cst_51 = arith.constant dense<0.000000e+00> : vector<4x16xf32>
    %202 = tpu.matmul %199, %201, %cst_51 {dimension_numbers = #tpu.dot_dimension_numbers<[1], [0], [0], [1], [0, 0, 1, 1], [], []>} : vector<4x8xf32>, vector<8x16xf32>, vector<4x16xf32> -> vector<4x16xf32>
    %203 = arith.addf %198, %202 : vector<4x16xf32>
    %204 = vector.extract_strided_slice %77 {offsets = [0, 0], sizes = [4, 8], strides = [1, 1]} : vector<8x8xf32> to vector<4x8xf32>
    %c2_52 = arith.constant 2 : index
    %c0_53 = arith.constant 0 : index
    %c0_54 = arith.constant 0 : index
    %205 = vector.load %arg4[%c2_52, %c0_53, %c0_54] : memref<4x8x16xf32, #tpu.memory_space<vmem>>, vector<1x8x16xf32>
    %206 = vector.shape_cast %205 : vector<1x8x16xf32> to vector<8x16xf32>
    %cst_55 = arith.constant dense<0.000000e+00> : vector<4x16xf32>
    %207 = tpu.matmul %204, %206, %cst_55 {dimension_numbers = #tpu.dot_dimension_numbers<[1], [0], [0], [1], [0, 0, 1, 1], [], []>} : vector<4x8xf32>, vector<8x16xf32>, vector<4x16xf32> -> vector<4x16xf32>
    %208 = arith.addf %203, %207 : vector<4x16xf32>
    %209 = vector.extract_strided_slice %77 {offsets = [1, 0], sizes = [4, 8], strides = [1, 1]} : vector<8x8xf32> to vector<4x8xf32>
    %c3_56 = arith.constant 3 : index
    %c0_57 = arith.constant 0 : index
    %c0_58 = arith.constant 0 : index
    %210 = vector.load %arg4[%c3_56, %c0_57, %c0_58] : memref<4x8x16xf32, #tpu.memory_space<vmem>>, vector<1x8x16xf32>
    %211 = vector.shape_cast %210 : vector<1x8x16xf32> to vector<8x16xf32>
    %cst_59 = arith.constant dense<0.000000e+00> : vector<4x16xf32>
    %212 = tpu.matmul %209, %211, %cst_59 {dimension_numbers = #tpu.dot_dimension_numbers<[1], [0], [0], [1], [0, 0, 1, 1], [], []>} : vector<4x8xf32>, vector<8x16xf32>, vector<4x16xf32> -> vector<4x16xf32>
    %213 = arith.addf %208, %212 : vector<4x16xf32>
    %c0_60 = arith.constant 0 : index
    %c0_61 = arith.constant 0 : index
    %214 = vector.load %arg5[%c0_60, %c0_61] : memref<1x16xf32, #tpu.memory_space<vmem>>, vector<1x16xf32>
    %215 = vector.broadcast %214 : vector<1x16xf32> to vector<4x16xf32>
    %216 = arith.addf %213, %215 : vector<4x16xf32>
    %cst_62 = arith.constant 0.000000e+00 : f32
    %217 = vector.broadcast %cst_62 : f32 to vector<4x16xf32>
    %218 = arith.maximumf %216, %217 : vector<4x16xf32>
    %cst_63 = arith.constant dense<0xFF800000> : vector<16xf32>
    %219 = vector.multi_reduction <maximumf>, %218, %cst_63 [0] : vector<4x16xf32> to vector<16xf32>
    %220 = vector.shape_cast %219 : vector<16xf32> to vector<1x16xf32>
    %221 = vector.extract_strided_slice %77 {offsets = [0, 0], sizes = [4, 8], strides = [1, 1]} : vector<8x8xf32> to vector<4x8xf32>
    %c0_64 = arith.constant 0 : index
    %c0_65 = arith.constant 0 : index
    %c0_66 = arith.constant 0 : index
    %222 = vector.load %arg4[%c0_64, %c0_65, %c0_66] : memref<4x8x16xf32, #tpu.memory_space<vmem>>, vector<1x8x16xf32>
    %223 = vector.shape_cast %222 : vector<1x8x16xf32> to vector<8x16xf32>
    %cst_67 = arith.constant dense<0.000000e+00> : vector<4x16xf32>
    %224 = tpu.matmul %221, %223, %cst_67 {dimension_numbers = #tpu.dot_dimension_numbers<[1], [0], [0], [1], [0, 0, 1, 1], [], []>} : vector<4x8xf32>, vector<8x16xf32>, vector<4x16xf32> -> vector<4x16xf32>
    %225 = vector.extract_strided_slice %77 {offsets = [1, 0], sizes = [4, 8], strides = [1, 1]} : vector<8x8xf32> to vector<4x8xf32>
    %c1_68 = arith.constant 1 : index
    %c0_69 = arith.constant 0 : index
    %c0_70 = arith.constant 0 : index
    %226 = vector.load %arg4[%c1_68, %c0_69, %c0_70] : memref<4x8x16xf32, #tpu.memory_space<vmem>>, vector<1x8x16xf32>
    %227 = vector.shape_cast %226 : vector<1x8x16xf32> to vector<8x16xf32>
    %cst_71 = arith.constant dense<0.000000e+00> : vector<4x16xf32>
    %228 = tpu.matmul %225, %227, %cst_71 {dimension_numbers = #tpu.dot_dimension_numbers<[1], [0], [0], [1], [0, 0, 1, 1], [], []>} : vector<4x8xf32>, vector<8x16xf32>, vector<4x16xf32> -> vector<4x16xf32>
    %229 = arith.addf %224, %228 : vector<4x16xf32>
    %230 = vector.extract_strided_slice %116 {offsets = [0, 0], sizes = [4, 8], strides = [1, 1]} : vector<8x8xf32> to vector<4x8xf32>
    %c2_72 = arith.constant 2 : index
    %c0_73 = arith.constant 0 : index
    %c0_74 = arith.constant 0 : index
    %231 = vector.load %arg4[%c2_72, %c0_73, %c0_74] : memref<4x8x16xf32, #tpu.memory_space<vmem>>, vector<1x8x16xf32>
    %232 = vector.shape_cast %231 : vector<1x8x16xf32> to vector<8x16xf32>
    %cst_75 = arith.constant dense<0.000000e+00> : vector<4x16xf32>
    %233 = tpu.matmul %230, %232, %cst_75 {dimension_numbers = #tpu.dot_dimension_numbers<[1], [0], [0], [1], [0, 0, 1, 1], [], []>} : vector<4x8xf32>, vector<8x16xf32>, vector<4x16xf32> -> vector<4x16xf32>
    %234 = arith.addf %229, %233 : vector<4x16xf32>
    %235 = vector.extract_strided_slice %116 {offsets = [1, 0], sizes = [4, 8], strides = [1, 1]} : vector<8x8xf32> to vector<4x8xf32>
    %c3_76 = arith.constant 3 : index
    %c0_77 = arith.constant 0 : index
    %c0_78 = arith.constant 0 : index
    %236 = vector.load %arg4[%c3_76, %c0_77, %c0_78] : memref<4x8x16xf32, #tpu.memory_space<vmem>>, vector<1x8x16xf32>
    %237 = vector.shape_cast %236 : vector<1x8x16xf32> to vector<8x16xf32>
    %cst_79 = arith.constant dense<0.000000e+00> : vector<4x16xf32>
    %238 = tpu.matmul %235, %237, %cst_79 {dimension_numbers = #tpu.dot_dimension_numbers<[1], [0], [0], [1], [0, 0, 1, 1], [], []>} : vector<4x8xf32>, vector<8x16xf32>, vector<4x16xf32> -> vector<4x16xf32>
    %239 = arith.addf %234, %238 : vector<4x16xf32>
    %c0_80 = arith.constant 0 : index
    %c0_81 = arith.constant 0 : index
    %240 = vector.load %arg5[%c0_80, %c0_81] : memref<1x16xf32, #tpu.memory_space<vmem>>, vector<1x16xf32>
    %241 = vector.broadcast %240 : vector<1x16xf32> to vector<4x16xf32>
    %242 = arith.addf %239, %241 : vector<4x16xf32>
    %cst_82 = arith.constant 0.000000e+00 : f32
    %243 = vector.broadcast %cst_82 : f32 to vector<4x16xf32>
    %244 = arith.maximumf %242, %243 : vector<4x16xf32>
    %cst_83 = arith.constant dense<0xFF800000> : vector<16xf32>
    %245 = vector.multi_reduction <maximumf>, %244, %cst_83 [0] : vector<4x16xf32> to vector<16xf32>
    %246 = vector.shape_cast %245 : vector<16xf32> to vector<1x16xf32>
    %247 = arith.maximumf %220, %246 : vector<1x16xf32>
    %248 = vector.extract_strided_slice %116 {offsets = [0, 0], sizes = [4, 8], strides = [1, 1]} : vector<8x8xf32> to vector<4x8xf32>
    %c0_84 = arith.constant 0 : index
    %c0_85 = arith.constant 0 : index
    %c0_86 = arith.constant 0 : index
    %249 = vector.load %arg4[%c0_84, %c0_85, %c0_86] : memref<4x8x16xf32, #tpu.memory_space<vmem>>, vector<1x8x16xf32>
    %250 = vector.shape_cast %249 : vector<1x8x16xf32> to vector<8x16xf32>
    %cst_87 = arith.constant dense<0.000000e+00> : vector<4x16xf32>
    %251 = tpu.matmul %248, %250, %cst_87 {dimension_numbers = #tpu.dot_dimension_numbers<[1], [0], [0], [1], [0, 0, 1, 1], [], []>} : vector<4x8xf32>, vector<8x16xf32>, vector<4x16xf32> -> vector<4x16xf32>
    %252 = vector.extract_strided_slice %116 {offsets = [1, 0], sizes = [4, 8], strides = [1, 1]} : vector<8x8xf32> to vector<4x8xf32>
    %c1_88 = arith.constant 1 : index
    %c0_89 = arith.constant 0 : index
    %c0_90 = arith.constant 0 : index
    %253 = vector.load %arg4[%c1_88, %c0_89, %c0_90] : memref<4x8x16xf32, #tpu.memory_space<vmem>>, vector<1x8x16xf32>
    %254 = vector.shape_cast %253 : vector<1x8x16xf32> to vector<8x16xf32>
    %cst_91 = arith.constant dense<0.000000e+00> : vector<4x16xf32>
    %255 = tpu.matmul %252, %254, %cst_91 {dimension_numbers = #tpu.dot_dimension_numbers<[1], [0], [0], [1], [0, 0, 1, 1], [], []>} : vector<4x8xf32>, vector<8x16xf32>, vector<4x16xf32> -> vector<4x16xf32>
    %256 = arith.addf %251, %255 : vector<4x16xf32>
    %257 = vector.extract_strided_slice %155 {offsets = [0, 0], sizes = [4, 8], strides = [1, 1]} : vector<8x8xf32> to vector<4x8xf32>
    %c2_92 = arith.constant 2 : index
    %c0_93 = arith.constant 0 : index
    %c0_94 = arith.constant 0 : index
    %258 = vector.load %arg4[%c2_92, %c0_93, %c0_94] : memref<4x8x16xf32, #tpu.memory_space<vmem>>, vector<1x8x16xf32>
    %259 = vector.shape_cast %258 : vector<1x8x16xf32> to vector<8x16xf32>
    %cst_95 = arith.constant dense<0.000000e+00> : vector<4x16xf32>
    %260 = tpu.matmul %257, %259, %cst_95 {dimension_numbers = #tpu.dot_dimension_numbers<[1], [0], [0], [1], [0, 0, 1, 1], [], []>} : vector<4x8xf32>, vector<8x16xf32>, vector<4x16xf32> -> vector<4x16xf32>
    %261 = arith.addf %256, %260 : vector<4x16xf32>
    %262 = vector.extract_strided_slice %155 {offsets = [1, 0], sizes = [4, 8], strides = [1, 1]} : vector<8x8xf32> to vector<4x8xf32>
    %c3_96 = arith.constant 3 : index
    %c0_97 = arith.constant 0 : index
    %c0_98 = arith.constant 0 : index
    %263 = vector.load %arg4[%c3_96, %c0_97, %c0_98] : memref<4x8x16xf32, #tpu.memory_space<vmem>>, vector<1x8x16xf32>
    %264 = vector.shape_cast %263 : vector<1x8x16xf32> to vector<8x16xf32>
    %cst_99 = arith.constant dense<0.000000e+00> : vector<4x16xf32>
    %265 = tpu.matmul %262, %264, %cst_99 {dimension_numbers = #tpu.dot_dimension_numbers<[1], [0], [0], [1], [0, 0, 1, 1], [], []>} : vector<4x8xf32>, vector<8x16xf32>, vector<4x16xf32> -> vector<4x16xf32>
    %266 = arith.addf %261, %265 : vector<4x16xf32>
    %c0_100 = arith.constant 0 : index
    %c0_101 = arith.constant 0 : index
    %267 = vector.load %arg5[%c0_100, %c0_101] : memref<1x16xf32, #tpu.memory_space<vmem>>, vector<1x16xf32>
    %268 = vector.broadcast %267 : vector<1x16xf32> to vector<4x16xf32>
    %269 = arith.addf %266, %268 : vector<4x16xf32>
    %cst_102 = arith.constant 0.000000e+00 : f32
    %270 = vector.broadcast %cst_102 : f32 to vector<4x16xf32>
    %271 = arith.maximumf %269, %270 : vector<4x16xf32>
    %cst_103 = arith.constant dense<0xFF800000> : vector<16xf32>
    %272 = vector.multi_reduction <maximumf>, %271, %cst_103 [0] : vector<4x16xf32> to vector<16xf32>
    %273 = vector.shape_cast %272 : vector<16xf32> to vector<1x16xf32>
    %274 = arith.maximumf %247, %273 : vector<1x16xf32>
    %275 = vector.extract_strided_slice %155 {offsets = [0, 0], sizes = [4, 8], strides = [1, 1]} : vector<8x8xf32> to vector<4x8xf32>
    %c0_104 = arith.constant 0 : index
    %c0_105 = arith.constant 0 : index
    %c0_106 = arith.constant 0 : index
    %276 = vector.load %arg4[%c0_104, %c0_105, %c0_106] : memref<4x8x16xf32, #tpu.memory_space<vmem>>, vector<1x8x16xf32>
    %277 = vector.shape_cast %276 : vector<1x8x16xf32> to vector<8x16xf32>
    %cst_107 = arith.constant dense<0.000000e+00> : vector<4x16xf32>
    %278 = tpu.matmul %275, %277, %cst_107 {dimension_numbers = #tpu.dot_dimension_numbers<[1], [0], [0], [1], [0, 0, 1, 1], [], []>} : vector<4x8xf32>, vector<8x16xf32>, vector<4x16xf32> -> vector<4x16xf32>
    %279 = vector.extract_strided_slice %155 {offsets = [1, 0], sizes = [4, 8], strides = [1, 1]} : vector<8x8xf32> to vector<4x8xf32>
    %c1_108 = arith.constant 1 : index
    %c0_109 = arith.constant 0 : index
    %c0_110 = arith.constant 0 : index
    %280 = vector.load %arg4[%c1_108, %c0_109, %c0_110] : memref<4x8x16xf32, #tpu.memory_space<vmem>>, vector<1x8x16xf32>
    %281 = vector.shape_cast %280 : vector<1x8x16xf32> to vector<8x16xf32>
    %cst_111 = arith.constant dense<0.000000e+00> : vector<4x16xf32>
    %282 = tpu.matmul %279, %281, %cst_111 {dimension_numbers = #tpu.dot_dimension_numbers<[1], [0], [0], [1], [0, 0, 1, 1], [], []>} : vector<4x8xf32>, vector<8x16xf32>, vector<4x16xf32> -> vector<4x16xf32>
    %283 = arith.addf %278, %282 : vector<4x16xf32>
    %284 = vector.extract_strided_slice %194 {offsets = [0, 0], sizes = [4, 8], strides = [1, 1]} : vector<8x8xf32> to vector<4x8xf32>
    %c2_112 = arith.constant 2 : index
    %c0_113 = arith.constant 0 : index
    %c0_114 = arith.constant 0 : index
    %285 = vector.load %arg4[%c2_112, %c0_113, %c0_114] : memref<4x8x16xf32, #tpu.memory_space<vmem>>, vector<1x8x16xf32>
    %286 = vector.shape_cast %285 : vector<1x8x16xf32> to vector<8x16xf32>
    %cst_115 = arith.constant dense<0.000000e+00> : vector<4x16xf32>
    %287 = tpu.matmul %284, %286, %cst_115 {dimension_numbers = #tpu.dot_dimension_numbers<[1], [0], [0], [1], [0, 0, 1, 1], [], []>} : vector<4x8xf32>, vector<8x16xf32>, vector<4x16xf32> -> vector<4x16xf32>
    %288 = arith.addf %283, %287 : vector<4x16xf32>
    %289 = vector.extract_strided_slice %194 {offsets = [1, 0], sizes = [4, 8], strides = [1, 1]} : vector<8x8xf32> to vector<4x8xf32>
    %c3_116 = arith.constant 3 : index
    %c0_117 = arith.constant 0 : index
    %c0_118 = arith.constant 0 : index
    %290 = vector.load %arg4[%c3_116, %c0_117, %c0_118] : memref<4x8x16xf32, #tpu.memory_space<vmem>>, vector<1x8x16xf32>
    %291 = vector.shape_cast %290 : vector<1x8x16xf32> to vector<8x16xf32>
    %cst_119 = arith.constant dense<0.000000e+00> : vector<4x16xf32>
    %292 = tpu.matmul %289, %291, %cst_119 {dimension_numbers = #tpu.dot_dimension_numbers<[1], [0], [0], [1], [0, 0, 1, 1], [], []>} : vector<4x8xf32>, vector<8x16xf32>, vector<4x16xf32> -> vector<4x16xf32>
    %293 = arith.addf %288, %292 : vector<4x16xf32>
    %c0_120 = arith.constant 0 : index
    %c0_121 = arith.constant 0 : index
    %294 = vector.load %arg5[%c0_120, %c0_121] : memref<1x16xf32, #tpu.memory_space<vmem>>, vector<1x16xf32>
    %295 = vector.broadcast %294 : vector<1x16xf32> to vector<4x16xf32>
    %296 = arith.addf %293, %295 : vector<4x16xf32>
    %cst_122 = arith.constant 0.000000e+00 : f32
    %297 = vector.broadcast %cst_122 : f32 to vector<4x16xf32>
    %298 = arith.maximumf %296, %297 : vector<4x16xf32>
    %cst_123 = arith.constant dense<0xFF800000> : vector<16xf32>
    %299 = vector.multi_reduction <maximumf>, %298, %cst_123 [0] : vector<4x16xf32> to vector<16xf32>
    %300 = vector.shape_cast %299 : vector<16xf32> to vector<1x16xf32>
    %301 = arith.maximumf %274, %300 : vector<1x16xf32>
    %c0_124 = arith.constant 0 : index
    %c0_125 = arith.constant 0 : index
    %302 = vector.load %arg6[%c0_124, %c0_125] : memref<16x6xf32, #tpu.memory_space<vmem>>, vector<16x6xf32>
    %cst_126 = arith.constant dense<0.000000e+00> : vector<1x6xf32>
    %303 = tpu.matmul %301, %302, %cst_126 {dimension_numbers = #tpu.dot_dimension_numbers<[1], [0], [0], [1], [0, 0, 1, 1], [], []>} : vector<1x16xf32>, vector<16x6xf32>, vector<1x6xf32> -> vector<1x6xf32>
    %c0_127 = arith.constant 0 : index
    %c0_128 = arith.constant 0 : index
    %304 = vector.load %arg7[%c0_127, %c0_128] : memref<1x6xf32, #tpu.memory_space<vmem>>, vector<1x6xf32>
    %305 = arith.addf %303, %304 : vector<1x6xf32>
    %c0_129 = arith.constant 0 : index
    %c0_130 = arith.constant 0 : index
    %c0_131 = arith.constant 0 : index
    %306 = vector.load %arg8[%c0_129, %c0_130, %c0_131] : memref<1x1x6xf32, #tpu.memory_space<vmem>>, vector<1x1x6xf32>
    %307 = vector.shape_cast %306 : vector<1x1x6xf32> to vector<1x6xf32>
    %308 = vector.shape_cast %305 : vector<1x6xf32> to vector<1x1x6xf32>
    tpu.vector_store %arg8[%c0_129, %c0_130, %c0_131], %308 {strides = array<i32>} : memref<1x1x6xf32, #tpu.memory_space<vmem>>, vector<1x1x6xf32>,
    return
  }
  func.func @transform_0(%arg0: i32) -> (i32, i32, i32, i32) {
    %c0_i32 = arith.constant 0 : i32
    %c0_i32_0 = arith.constant 0 : i32
    %c0_i32_1 = arith.constant 0 : i32
    %c0_i32_2 = arith.constant 0 : i32
    return %arg0, %c0_i32, %c0_i32_0, %c0_i32_1 : i32, i32, i32, i32
  }
  func.func @transform_1(%arg0: i32) -> (i32, i32) {
    %c0_i32 = arith.constant 0 : i32
    %c0_i32_0 = arith.constant 0 : i32
    %c0_i32_1 = arith.constant 0 : i32
    return %c0_i32, %c0_i32_0 : i32, i32
  }
  func.func @transform_2(%arg0: i32) -> (i32, i32) {
    %c0_i32 = arith.constant 0 : i32
    %c0_i32_0 = arith.constant 0 : i32
    %c0_i32_1 = arith.constant 0 : i32
    return %c0_i32, %c0_i32_0 : i32, i32
  }
  func.func @transform_3(%arg0: i32) -> (i32, i32, i32) {
    %c0_i32 = arith.constant 0 : i32
    %c0_i32_0 = arith.constant 0 : i32
    %c0_i32_1 = arith.constant 0 : i32
    %c0_i32_2 = arith.constant 0 : i32
    return %c0_i32, %c0_i32_0, %c0_i32_1 : i32, i32, i32
  }
  func.func @transform_4(%arg0: i32) -> (i32, i32) {
    %c0_i32 = arith.constant 0 : i32
    %c0_i32_0 = arith.constant 0 : i32
    %c0_i32_1 = arith.constant 0 : i32
    return %c0_i32, %c0_i32_0 : i32, i32
  }
  func.func @transform_5(%arg0: i32) -> (i32, i32) {
    %c0_i32 = arith.constant 0 : i32
    %c0_i32_0 = arith.constant 0 : i32
    %c0_i32_1 = arith.constant 0 : i32
    return %c0_i32, %c0_i32_0 : i32, i32
  }
  func.func @transform_6(%arg0: i32) -> (i32, i32) {
    %c0_i32 = arith.constant 0 : i32
    %c0_i32_0 = arith.constant 0 : i32
    %c0_i32_1 = arith.constant 0 : i32
    return %c0_i32, %c0_i32_0 : i32, i32
  }
  func.func @transform_7(%arg0: i32) -> (i32, i32, i32) {
    %c0_i32 = arith.constant 0 : i32
    %c0_i32_0 = arith.constant 0 : i32
    %c0_i32_1 = arith.constant 0 : i32
    return %arg0, %c0_i32, %c0_i32_0 : i32, i32, i32
  }
}

</mosaic_0001>

<llo_original>
// kernel: cnn_digit_forward.1
$region0: #{cnn_digit_forward.1}
  #allocation0 [shape = 'u32[]', space=smem, size = 0x4, offset = 0x4, fixed_abs, tag = 'smem constant byte address 0x4 - core index']
  #allocation1 [shape = 'u32[144,128]{1,0:T(1,128)}', space=vmem, size = 0x12000, scoped, tag = 'internal scratch']
  %s0 = inlined_call_operand.vmem [shape: f32[2,7,512,48], index: 0, kind: input, shape index: {}]
  %s1 = inlined_call_operand.vmem [shape: f32[48,8], index: 1, kind: input, shape index: {}]
  %s2 = inlined_call_operand.vmem [shape: f32[1,8], index: 2, kind: input, shape index: {}]
  %s3 = inlined_call_operand.vmem [shape: f32[4,8,16], index: 3, kind: input, shape index: {}]
  %s4 = inlined_call_operand.vmem [shape: f32[1,16], index: 4, kind: input, shape index: {}]
  %s5 = inlined_call_operand.vmem [shape: f32[16,6], index: 5, kind: input, shape index: {}]
  %s6 = inlined_call_operand.vmem [shape: f32[1,6], index: 6, kind: input, shape index: {}]
  %s7 = inlined_call_operand.hbm [shape: f32[2,1,6], index: 7, kind: output, shape index: {}]
  %s8 = sld [smem:[#allocation0]]
  $region61: #{cnn_digit_forward.1} parent=0
    _
  %s10 = ssub.s32 1, %s8
  %s11 = scalar_select 0, %s10, %s8
  $region1: #{cnn_digit_forward.1} parent=0
    #allocation2 [shape = 'u8[1024]{0}', space=vmem, size = 0x400, scoped, tag = 'output window, operand 0']
    #allocation3 [shape = 's32[2]{0}', space=sflag, size = 0x8, scoped, tag = 'scoped memory for cnn_digit_forward.1']
    %12 = vsyncpa [#allocation3], 0
    %s13 = scalar_lea.sflag [#allocation3], 1
    %14 = vsyncpa %s13, 0
    loop: start=0, step=1, limit=4
    $region2: #{cnn_digit_forward.1} parent=1 // loop_pre_header
      _
    $region3: #{cnn_digit_forward.1} parent=1 // loop_header
      %s16 = sphi 0, %s20
      %p17 = scmp.ge.s32.totalorder %s16, 4
      %s26 = sphi 0, %s28
      %s29 = sphi 0, %s26
      %s30 = sphi 0, %s29
      %s46 = sphi 0, %s30
      %s50 = sphi 0, %s50
      %s52 = sphi 0, %s50
      %s53 = sphi 0, %s52
      %s67 = sphi 0, %s53
      %s71 = sphi 0, %s71
      %s73 = sphi 0, %s71
      %s74 = sphi 0, %s73
      %s88 = sphi 0, %s74
      %s92 = sphi 0, %s92
      %s94 = sphi 0, %s92
      %s95 = sphi 0, %s94
      %s109 = sphi 0, %s95
      %s113 = sphi 0, %s113
      %s115 = sphi 0, %s113
      %s116 = sphi 0, %s115
      %s130 = sphi 0, %s116
      %s134 = sphi 0, %s134
      %s136 = sphi 0, %s134
      %s137 = sphi 0, %s136
      %s151 = sphi 0, %s137
      %s155 = sphi 0, %s155
      %s157 = sphi 0, %s155
      %s158 = sphi 0, %s157
      %s172 = sphi 0, %s158
      %s178 = sphi 0, %s180
      %s181 = sphi 0, %s178
      %s182 = sphi 0, %s181
      %s198 = sphi 0, %s182
    $region4: #{cnn_digit_forward.1} parent=1 // loop_header_branch
      %19 = sbr.rel (%p17) target = $region8
    $region5: #{cnn_digit_forward.1} parent=1 // loop_body
      %s21 = ssub.s32 %s16, 1
      %s22 = ssub.s32 %s16, 2
      %s23 = sadd.s32 %s16, 1
      %s24 = ssub.s32 %s16, %s23
      %p25 = scmp.eq.s32.totalorder %s24, 0
      %s27 = sadd.s32 %s26, 1
      %s28 = scalar_select %p25, %s26, %s27
      %p31 = pneg %p25
      %p32 = scmp.eq.s32.totalorder %s16, 1
      %p33 = por %p31, %p32
      %p34 = scmp.ne.s32.totalorder %s26, %s29
      %p35 = scmp.eq.s32.totalorder %s16, 0
      %p36 = por %p34, %p35
      %p37 = scmp.ne.s32.totalorder %s26, %s29
      %p38 = scmp.eq.s32.totalorder %s21, 1
      %p39 = por %p37, %p38
      %p40 = scmp.ne.s32.totalorder %s29, %s30
      %p41 = scmp.eq.s32.totalorder %s21, 0
      %p42 = por %p40, %p41
      %p43 = scmp.ne.s32.totalorder %s29, %s30
      %p44 = scmp.eq.s32.totalorder %s22, 1
      %p45 = por %p43, %p44
      %p47 = scmp.ne.s32.totalorder %s30, %s46
      %p48 = scmp.eq.s32.totalorder %s22, 0
      %p49 = por %p47, %p48
      %s51 = sadd.s32 %s50, 1
      %p54 = scmp.eq.s32.totalorder %s16, 1
      %p55 = scmp.ne.s32.totalorder %s50, %s52
      %p56 = scmp.eq.s32.totalorder %s16, 0
      %p57 = por %p55, %p56
      %p58 = scmp.ne.s32.totalorder %s50, %s52
      %p59 = scmp.eq.s32.totalorder %s21, 1
      %p60 = por %p58, %p59
      %p61 = scmp.ne.s32.totalorder %s52, %s53
      %p62 = scmp.eq.s32.totalorder %s21, 0
      %p63 = por %p61, %p62
      %p64 = scmp.ne.s32.totalorder %s52, %s53
      %p65 = scmp.eq.s32.totalorder %s22, 1
      %p66 = por %p64, %p65
      %p68 = scmp.ne.s32.totalorder %s53, %s67
      %p69 = scmp.eq.s32.totalorder %s22, 0
      %p70 = por %p68, %p69
      %s72 = sadd.s32 %s71, 1
      %p75 = scmp.eq.s32.totalorder %s16, 1
      %p76 = scmp.ne.s32.totalorder %s71, %s73
      %p77 = scmp.eq.s32.totalorder %s16, 0
      %p78 = por %p76, %p77
      %p79 = scmp.ne.s32.totalorder %s71, %s73
      %p80 = scmp.eq.s32.totalorder %s21, 1
      %p81 = por %p79, %p80
      %p82 = scmp.ne.s32.totalorder %s73, %s74
      %p83 = scmp.eq.s32.totalorder %s21, 0
      %p84 = por %p82, %p83
      %p85 = scmp.ne.s32.totalorder %s73, %s74
      %p86 = scmp.eq.s32.totalorder %s22, 1
      %p87 = por %p85, %p86
      %p89 = scmp.ne.s32.totalorder %s74, %s88
      %p90 = scmp.eq.s32.totalorder %s22, 0
      %p91 = por %p89, %p90
      %s93 = sadd.s32 %s92, 1
      %p96 = scmp.eq.s32.totalorder %s16, 1
      %p97 = scmp.ne.s32.totalorder %s92, %s94
      %p98 = scmp.eq.s32.totalorder %s16, 0
      %p99 = por %p97, %p98
      %p100 = scmp.ne.s32.totalorder %s92, %s94
      %p101 = scmp.eq.s32.totalorder %s21, 1
      %p102 = por %p100, %p101
      %p103 = scmp.ne.s32.totalorder %s94, %s95
      %p104 = scmp.eq.s32.totalorder %s21, 0
      %p105 = por %p103, %p104
      %p106 = scmp.ne.s32.totalorder %s94, %s95
      %p107 = scmp.eq.s32.totalorder %s22, 1
      %p108 = por %p106, %p107
      %p110 = scmp.ne.s32.totalorder %s95, %s109
      %p111 = scmp.eq.s32.totalorder %s22, 0
      %p112 = por %p110, %p111
      %s114 = sadd.s32 %s113, 1
      %p117 = scmp.eq.s32.totalorder %s16, 1
      %p118 = scmp.ne.s32.totalorder %s113, %s115
      %p119 = scmp.eq.s32.totalorder %s16, 0
      %p120 = por %p118, %p119
      %p121 = scmp.ne.s32.totalorder %s113, %s115
      %p122 = scmp.eq.s32.totalorder %s21, 1
      %p123 = por %p121, %p122
      %p124 = scmp.ne.s32.totalorder %s115, %s116
      %p125 = scmp.eq.s32.totalorder %s21, 0
      %p126 = por %p124, %p125
      %p127 = scmp.ne.s32.totalorder %s115, %s116
      %p128 = scmp.eq.s32.totalorder %s22, 1
      %p129 = por %p127, %p128
      %p131 = scmp.ne.s32.totalorder %s116, %s130
      %p132 = scmp.eq.s32.totalorder %s22, 0
      %p133 = por %p131, %p132
      %s135 = sadd.s32 %s134, 1
      %p138 = scmp.eq.s32.totalorder %s16, 1
      %p139 = scmp.ne.s32.totalorder %s134, %s136
      %p140 = scmp.eq.s32.totalorder %s16, 0
      %p141 = por %p139, %p140
      %p142 = scmp.ne.s32.totalorder %s134, %s136
      %p143 = scmp.eq.s32.totalorder %s21, 1
      %p144 = por %p142, %p143
      %p145 = scmp.ne.s32.totalorder %s136, %s137
      %p146 = scmp.eq.s32.totalorder %s21, 0
      %p147 = por %p145, %p146
      %p148 = scmp.ne.s32.totalorder %s136, %s137
      %p149 = scmp.eq.s32.totalorder %s22, 1
      %p150 = por %p148, %p149
      %p152 = scmp.ne.s32.totalorder %s137, %s151
      %p153 = scmp.eq.s32.totalorder %s22, 0
      %p154 = por %p152, %p153
      %s156 = sadd.s32 %s155, 1
      %p159 = scmp.eq.s32.totalorder %s16, 1
      %p160 = scmp.ne.s32.totalorder %s155, %s157
      %p161 = scmp.eq.s32.totalorder %s16, 0
      %p162 = por %p160, %p161
      %p163 = scmp.ne.s32.totalorder %s155, %s157
      %p164 = scmp.eq.s32.totalorder %s21, 1
      %p165 = por %p163, %p164
      %p166 = scmp.ne.s32.totalorder %s157, %s158
      %p167 = scmp.eq.s32.totalorder %s21, 0
      %p168 = por %p166, %p167
      %p169 = scmp.ne.s32.totalorder %s157, %s158
      %p170 = scmp.eq.s32.totalorder %s22, 1
      %p171 = por %p169, %p170
      %p173 = scmp.ne.s32.totalorder %s158, %s172
      %p174 = scmp.eq.s32.totalorder %s22, 0
      %p175 = por %p173, %p174
      %s176 = ssub.s32 %s16, %s23
      %p177 = scmp.eq.s32.totalorder %s176, 0
      %s179 = sadd.s32 %s178, 1
      %s180 = scalar_select %p177, %s178, %s179
      %p183 = pneg %p177
      %p184 = scmp.eq.s32.totalorder %s16, 1
      %p185 = por %p183, %p184
      %p186 = scmp.ne.s32.totalorder %s178, %s181
      %p187 = scmp.eq.s32.totalorder %s16, 0
      %p188 = por %p186, %p187
      %p189 = scmp.ne.s32.totalorder %s178, %s181
      %p190 = scmp.eq.s32.totalorder %s21, 1
      %p191 = por %p189, %p190
      %p192 = scmp.ne.s32.totalorder %s181, %s182
      %p193 = scmp.eq.s32.totalorder %s21, 0
      %p194 = por %p192, %p193
      %p195 = scmp.ne.s32.totalorder %s181, %s182
      %p196 = scmp.eq.s32.totalorder %s22, 1
      %p197 = por %p195, %p196
      %p199 = scmp.ne.s32.totalorder %s182, %s198
      %p200 = scmp.eq.s32.totalorder %s22, 0
      %p201 = por %p199, %p200
      %p202 = scmp.le.s32.totalorder 1, %s16
      %p203 = scmp.lt.s32.totalorder %s16, 3
      %p204 = pnand %p202, %p203
      %p205 = pneg %p204
      // Predicated region
      $region9: #{cnn_digit_forward.1} parent=5 // pred_check
        _
      $region10: #{cnn_digit_forward.1} parent=5 // pred_check_branch
        %207 = sbr.rel (%p204) target = $region12
      $region11: #{cnn_digit_forward.1} parent=5 // pred_region
        %s208 = ssub.s32 %s16, 1
        // Predicated region
        $region13: #{cnn_digit_forward.1} parent=11 // pred_check
          %p209 = pneg %p63
        $region14: #{cnn_digit_forward.1} parent=11 // pred_check_branch
          %211 = sbr.rel (%p209) target = $region16
        $region15: #{cnn_digit_forward.1} parent=11 // pred_region
          _
        $region16: #{cnn_digit_forward.1} parent=11 // pred_fallthru
          _
        // Predicated region
        $region17: #{cnn_digit_forward.1} parent=11 // pred_check
          %p212 = pneg %p84
        $region18: #{cnn_digit_forward.1} parent=11 // pred_check_branch
          %214 = sbr.rel (%p212) target = $region20
        $region19: #{cnn_digit_forward.1} parent=11 // pred_region
          _
        $region20: #{cnn_digit_forward.1} parent=11 // pred_fallthru
          _
        // Predicated region
        $region21: #{cnn_digit_forward.1} parent=11 // pred_check
          %p215 = pneg %p105
        $region22: #{cnn_digit_forward.1} parent=11 // pred_check_branch
          %217 = sbr.rel (%p215) target = $region24
        $region23: #{cnn_digit_forward.1} parent=11 // pred_region
          _
        $region24: #{cnn_digit_forward.1} parent=11 // pred_fallthru
          _
        // Predicated region
        $region25: #{cnn_digit_forward.1} parent=11 // pred_check
          %p218 = pneg %p126
        $region26: #{cnn_digit_forward.1} parent=11 // pred_check_branch
          %220 = sbr.rel (%p218) target = $region28
        $region27: #{cnn_digit_forward.1} parent=11 // pred_region
          _
        $region28: #{cnn_digit_forward.1} parent=11 // pred_fallthru
          _
        // Predicated region
        $region29: #{cnn_digit_forward.1} parent=11 // pred_check
          %p221 = pneg %p147
        $region30: #{cnn_digit_forward.1} parent=11 // pred_check_branch
          %223 = sbr.rel (%p221) target = $region32
        $region31: #{cnn_digit_forward.1} parent=11 // pred_region
          _
        $region32: #{cnn_digit_forward.1} parent=11 // pred_fallthru
          _
        // Predicated region
        $region33: #{cnn_digit_forward.1} parent=11 // pred_check
          %p224 = pneg %p168
        $region34: #{cnn_digit_forward.1} parent=11 // pred_check_branch
          %226 = sbr.rel (%p224) target = $region36
        $region35: #{cnn_digit_forward.1} parent=11 // pred_region
          _
        $region36: #{cnn_digit_forward.1} parent=11 // pred_fallthru
          _
      $region12: #{cnn_digit_forward.1} parent=5 // pred_fallthru
        _
      %p227 = scmp.lt.s32.totalorder %s16, 2
      // Predicated region
      $region37: #{cnn_digit_forward.1} parent=5 // pred_check
        %p228 = pneg %p227
      $region38: #{cnn_digit_forward.1} parent=5 // pred_check_branch
        %230 = sbr.rel (%p228) target = $region40
      $region39: #{cnn_digit_forward.1} parent=5 // pred_region
        // Predicated region
        $region41: #{cnn_digit_forward.1} parent=39 // pred_check
          %p231 = pneg %p36
        $region42: #{cnn_digit_forward.1} parent=39 // pred_check_branch
          %233 = sbr.rel (%p231) target = $region44
        $region43: #{cnn_digit_forward.1} parent=39 // pred_region
          %p234 = scmp.lt.s32.totalorder %s16, 1
          %s235 = scalar_select %p234, %s16, 1
          %s236 = smul.addr %s235, 448
          %s237 = smul.addr %s236, 8
          %s238 = scalar_lea.vmem %s0, %s237
        $region44: #{cnn_digit_forward.1} parent=39 // pred_fallthru
          _
      $region40: #{cnn_digit_forward.1} parent=5 // pred_fallthru
        _
      %p239 = scmp.le.s32.totalorder 1, %s16
      %p240 = scmp.lt.s32.totalorder %s16, 3
      %p241 = pnand %p239, %p240
      %p242 = pneg %p241
      // Predicated region
      $region45: #{cnn_digit_forward.1} parent=5 // pred_check
        _
      $region46: #{cnn_digit_forward.1} parent=5 // pred_check_branch
        %244 = sbr.rel (%p241) target = $region48
      $region47: #{cnn_digit_forward.1} parent=5 // pred_region
        %s245 = ssub.s32 %s16, 1
        %p246 = scmp.lt.s32.totalorder %s21, 1
        %s247 = scalar_select %p246, %s21, 1
        %s248 = smul.addr %s247, 448
        %s249 = smul.addr %s248, 8
        %s250 = scalar_lea.vmem %s0, %s249
        %p251 = pneg %p42
        %p252 = pneg %p39
        %p253 = pneg %p63
        %p254 = pneg %p60
        %p255 = pneg %p84
        %p256 = pneg %p81
        %p257 = pneg %p105
        %p258 = pneg %p102
        %p259 = pneg %p126
        %p260 = pneg %p123
        %p261 = pneg %p147
        %p262 = pneg %p144
        %p263 = pneg %p168
        %p264 = pneg %p165
        %p265 = pneg %p194
        %p266 = pneg %p191
        %s267 = sand.u32 %s181, 1
        %s268 = scalar_lea.sflag [#allocation3], %s267
        %s269 = sand.u32 %s181, 1
        %s270 = scalar_lea.vmem [#allocation2], %s269
        %p271 = scmp.lt.s32.totalorder %s21, 1
        %s272 = scalar_select %p271, %s21, 1
        %s273 = smul.addr %s272, 448
        %s274 = smul.addr %s273, 8
        %s275 = scalar_lea.vmem %s0, %s274
        %v276 = vld [vmem:[%s275] sm:$0xff]
        %v277 = vld [vmem:[%s275 + $0x8] sm:$0xff]
        %v278 = vld [vmem:[%s275 + $0x10] sm:$0xff]
        %v279 = vld [vmem:[%s275 + $0x18] sm:$0xff]
        %v280 = vld [vmem:[%s275 + $0x20] sm:$0xff]
        %v281 = vld [vmem:[%s275 + $0x28] sm:$0xff]
        %v282 = vld [vmem:[%s275 + $0x30] sm:$0xff]
        %v283 = vld [vmem:[%s275 + $0x38] sm:$0xff]
        %v284 = vld [vmem:[%s275 + $0x40] sm:$0xff]
        %v285 = vld [vmem:[%s275 + $0x48] sm:$0xff]
        %v286 = vld [vmem:[%s275 + $0x50] sm:$0xff]
        %v287 = vld [vmem:[%s275 + $0x58] sm:$0xff]
        %v288 = vld [vmem:[%s275 + $0x60] sm:$0xff]
        %v289 = vld [vmem:[%s275 + $0x68] sm:$0xff]
        %v290 = vld [vmem:[%s275 + $0x70] sm:$0xff]
        %v291 = vld [vmem:[%s275 + $0x78] sm:$0xff]
        %v292 = vld [vmem:[%s275 + $0x80] sm:$0xff]
        %v293 = vld [vmem:[%s275 + $0x88] sm:$0xff]
        %v294 = vld [vmem:[%s275 + $0x90] sm:$0xff]
        %v295 = vld [vmem:[%s275 + $0x98] sm:$0xff]
        %v296 = vld [vmem:[%s275 + $0xa0] sm:$0xff]
        %v297 = vld [vmem:[%s275 + $0xa8] sm:$0xff]
        %v298 = vld [vmem:[%s275 + $0xb0] sm:$0xff]
        %v299 = vld [vmem:[%s275 + $0xb8] sm:$0xff]
        %v300 = vld [vmem:[%s275 + $0xc0] sm:$0xff]
        %v301 = vld [vmem:[%s275 + $0xc8] sm:$0xff]
        %v302 = vld [vmem:[%s275 + $0xd0] sm:$0xff]
        %v303 = vld [vmem:[%s275 + $0xd8] sm:$0xff]
        %v304 = vld [vmem:[%s275 + $0xe0] sm:$0xff]
        %v305 = vld [vmem:[%s275 + $0xe8] sm:$0xff]
        %v306 = vld [vmem:[%s275 + $0xf0] sm:$0xff]
        %v307 = vld [vmem:[%s275 + $0xf8] sm:$0xff]
        %v308 = vld [vmem:[%s275 + $0x100] sm:$0xff]
        %v309 = vld [vmem:[%s275 + $0x108] sm:$0xff]
        %v310 = vld [vmem:[%s275 + $0x110] sm:$0xff]
        %v311 = vld [vmem:[%s275 + $0x118] sm:$0xff]
        %v312 = vld [vmem:[%s275 + $0x120] sm:$0xff]
        %v313 = vld [vmem:[%s275 + $0x128] sm:$0xff]
        %v314 = vld [vmem:[%s275 + $0x130] sm:$0xff]
        %v315 = vld [vmem:[%s275 + $0x138] sm:$0xff]
        %v316 = vld [vmem:[%s275 + $0x140] sm:$0xff]
        %v317 = vld [vmem:[%s275 + $0x148] sm:$0xff]
        %v318 = vld [vmem:[%s275 + $0x150] sm:$0xff]
        %v319 = vld [vmem:[%s275 + $0x158] sm:$0xff]
        %v320 = vld [vmem:[%s275 + $0x160] sm:$0xff]
        %v321 = vld [vmem:[%s275 + $0x168] sm:$0xff]
        %v322 = vld [vmem:[%s275 + $0x170] sm:$0xff]
        %v323 = vld [vmem:[%s275 + $0x178] sm:$0xff]
        %v324 = vld [vmem:[%s275 + $0x180] sm:$0xff]
        %v325 = vld [vmem:[%s275 + $0x188] sm:$0xff]
        %v326 = vld [vmem:[%s275 + $0x190] sm:$0xff]
        %v327 = vld [vmem:[%s275 + $0x198] sm:$0xff]
        %v328 = vld [vmem:[%s275 + $0x1a0] sm:$0xff]
        %v329 = vld [vmem:[%s275 + $0x1a8] sm:$0xff]
        %v330 = vld [vmem:[%s275 + $0x1b0] sm:$0xff]
        %v331 = vld [vmem:[%s275 + $0x1b8] sm:$0xff]
        %v332 = vld [vmem:[%s275 + $0x1c0] sm:$0xff]
        %v333 = vld [vmem:[%s275 + $0x1c8] sm:$0xff]
        %v334 = vld [vmem:[%s275 + $0x1d0] sm:$0xff]
        %v335 = vld [vmem:[%s275 + $0x1d8] sm:$0xff]
        %v336 = vld [vmem:[%s275 + $0x1e0] sm:$0xff]
        %v337 = vld [vmem:[%s275 + $0x1e8] sm:$0xff]
        %v338 = vld [vmem:[%s275 + $0x1f0] sm:$0xff]
        %v339 = vld [vmem:[%s275 + $0x1f8] sm:$0xff]
        %v340 = vld [vmem:[%s1] sm:$0xff]
        %v341 = vld [vmem:[%s1 + $0x8] sm:$0xff]
        %v342 = vld [vmem:[%s1 + $0x10] sm:$0xff]
        %v343 = vld [vmem:[%s1 + $0x18] sm:$0xff]
        %v344 = vld [vmem:[%s1 + $0x20] sm:$0xff]
        %v345 = vld [vmem:[%s1 + $0x28] sm:$0xff]
        %v346 = vld [vmem:[%s2] sm:$0x1]
        %v348 = vlaneseq
        %v349 = vshrl.u32 %v348, 7
        %v350 = vsub.s32 0, %v349
        %v351 = vrot.slane %v346, %v350
        %vm353 = vcmask 392192
        %v355 = vsel %vm353, %v276, 0
        %v358 = vsel %vm353, %v277, 0
        %v361 = vsel %vm353, %v278, 0
        %v364 = vsel %vm353, %v279, 0
        %v367 = vsel %vm353, %v280, 0
        %v370 = vsel %vm353, %v281, 0
        %v373 = vsel %vm353, %v282, 0
        %v376 = vsel %vm353, %v283, 0
        %v379 = vsel %vm353, %v284, 0
        %v382 = vsel %vm353, %v285, 0
        %v385 = vsel %vm353, %v286, 0
        %v388 = vsel %vm353, %v287, 0
        %v391 = vsel %vm353, %v288, 0
        %v394 = vsel %vm353, %v289, 0
        %v397 = vsel %vm353, %v290, 0
        %v400 = vsel %vm353, %v291, 0
        %v403 = vsel %vm353, %v292, 0
        %v406 = vsel %vm353, %v293, 0
        %v409 = vsel %vm353, %v294, 0
        %v412 = vsel %vm353, %v295, 0
        %v415 = vsel %vm353, %v296, 0
        %v418 = vsel %vm353, %v297, 0
        %v421 = vsel %vm353, %v298, 0
        %v424 = vsel %vm353, %v299, 0
        %v427 = vsel %vm353, %v300, 0
        %v430 = vsel %vm353, %v301, 0
        %v433 = vsel %vm353, %v302, 0
        %v436 = vsel %vm353, %v303, 0
        %v439 = vsel %vm353, %v304, 0
        %v442 = vsel %vm353, %v305, 0
        %v445 = vsel %vm353, %v306, 0
        %v448 = vsel %vm353, %v307, 0
        %v451 = vsel %vm353, %v308, 0
        %v454 = vsel %vm353, %v309, 0
        %v457 = vsel %vm353, %v310, 0
        %v460 = vsel %vm353, %v311, 0
        %v463 = vsel %vm353, %v312, 0
        %v466 = vsel %vm353, %v313, 0
        %v469 = vsel %vm353, %v314, 0
        %v472 = vsel %vm353, %v315, 0
        %v475 = vsel %vm353, %v316, 0
        %v478 = vsel %vm353, %v317, 0
        %v481 = vsel %vm353, %v318, 0
        %v484 = vsel %vm353, %v319, 0
        %v487 = vsel %vm353, %v320, 0
        %v490 = vsel %vm353, %v321, 0
        %v493 = vsel %vm353, %v322, 0
        %v496 = vsel %vm353, %v323, 0
        %v499 = vsel %vm353, %v324, 0
        %v502 = vsel %vm353, %v325, 0
        %v505 = vsel %vm353, %v326, 0
        %v508 = vsel %vm353, %v327, 0
        %v511 = vsel %vm353, %v328, 0
        %v514 = vsel %vm353, %v329, 0
        %v517 = vsel %vm353, %v330, 0
        %v520 = vsel %vm353, %v331, 0
        %v523 = vsel %vm353, %v332, 0
        %v526 = vsel %vm353, %v333, 0
        %v529 = vsel %vm353, %v334, 0
        %v532 = vsel %vm353, %v335, 0
        %v535 = vsel %vm353, %v336, 0
        %v538 = vsel %vm353, %v337, 0
        %v541 = vsel %vm353, %v338, 0
        %v544 = vsel %vm353, %v339, 0
        %546 = vmatprep.subr.mxu0 0.0
        %547 = vmatpush1.msra.mxu0 %v340
        %548 = vmatprep.subr.mxu0 0.0
        %549 = vmatpush1.msra.mxu0 %v341
        %550 = vmatprep.subr.mxu0 0.0
        %551 = vmatpush1.msra.mxu0 %v342
        %552 = vmatprep.subr.mxu0 0.0
        %553 = vmatpush1.msra.mxu0 %v343
        %554 = vmatprep.subr.mxu0 0.0
        %555 = vmatpush1.msra.mxu0 %v344
        %556 = vmatprep.subr.mxu0 0.0
        %557 = vmatpush1.msra.mxu0 %v345
        %558 = vmatprep.subr.mxu0 0.0
        %559 = vmatpush1.msra.mxu0 0.0
        %560 = vmatprep.subr.mxu0 0.0
        %561 = vmatpush1.msra.mxu0 0.0
        %562 = vmatprep.subr.mxu0 0.0
        %563 = vmatpush1.msra.mxu0 0.0
        %564 = vmatprep.subr.mxu0 0.0
        %565 = vmatpush1.msra.mxu0 0.0
        %566 = vmatprep.subr.mxu0 0.0
        %567 = vmatpush1.msra.mxu0 0.0
        %568 = vmatprep.subr.mxu0 0.0
        %569 = vmatpush1.msra.mxu0 0.0
        %570 = vmatprep.subr.mxu0 0.0
        %571 = vmatpush1.msra.mxu0 0.0
        %572 = vmatprep.subr.mxu0 0.0
        %573 = vmatpush1.msra.mxu0 0.0
        %574 = vmatprep.subr.mxu0 0.0
        %575 = vmatpush1.msra.mxu0 0.0
        %576 = vmatprep.subr.mxu0 0.0
        %577 = vmatpush1.msra.mxu0 0.0
        %578 = vmatprep.subr.mxu0 0.0
        %579 = vmatpush1.msra.mxu0 0.0
        %580 = vmatprep.subr.mxu0 0.0
        %581 = vmatpush1.msra.mxu0 0.0
        %582 = vmatprep.subr.mxu0 0.0
        %583 = vmatpush1.msra.mxu0 0.0
        %584 = vmatprep.subr.mxu0 0.0
        %585 = vmatpush1.msra.mxu0 0.0
        %586 = vmatprep.subr.mxu0 0.0
        %587 = vmatpush1.msra.mxu0 0.0
        %588 = vmatprep.subr.mxu0 0.0
        %589 = vmatpush1.msra.mxu0 0.0
        %590 = vmatprep.subr.mxu0 0.0
        %591 = vmatpush1.msra.mxu0 0.0
        %592 = vmatprep.subr.mxu0 0.0
        %593 = vmatpush1.msra.mxu0 0.0
        %594 = vmatprep.subr.mxu0 0.0
        %595 = vmatpush1.msra.mxu0 0.0
        %596 = vmatprep.subr.mxu0 0.0
        %597 = vmatpush1.msra.mxu0 0.0
        %598 = vmatprep.subr.mxu0 0.0
        %599 = vmatpush1.msra.mxu0 0.0
        %600 = vmatprep.subr.mxu0 0.0
        %601 = vmatpush1.msra.mxu0 0.0
        %602 = vmatprep.subr.mxu0 0.0
        %603 = vmatpush1.msra.mxu0 0.0
        %604 = vmatprep.subr.mxu0 0.0
        %605 = vmatpush1.msra.mxu0 0.0
        %606 = vmatprep.subr.mxu0 0.0
        %607 = vmatpush1.msra.mxu0 0.0
        %608 = vmatprep.subr.mxu0 0.0
        %609 = vmatpush1.msra.mxu0 0.0
        %610 = vmatprep.mubr.f32.mxu0 0.0
        %611 = vmatmul.mubr.f32.gmra.mrb[0].mxu0 %v355
        %v612 = vpop.f32.mrb[0].mxu0
        %v613 = vadd.f32 %v351, %v612
        %v614 = vpop.f32.mrb[0].mxu0
        %615 = vmatprep.mubr.f32.mxu0 0.0
        %616 = vmatmul.mubr.f32.gmra.mrb[0].mxu0 %v358
        %v617 = vpop.f32.mrb[0].mxu0
        %v618 = vadd.f32 %v351, %v617
        %v619 = vpop.f32.mrb[0].mxu0
        %620 = vmatprep.mubr.f32.mxu0 0.0
        %621 = vmatmul.mubr.f32.gmra.mrb[0].mxu0 %v361
        %v622 = vpop.f32.mrb[0].mxu0
        %v623 = vadd.f32 %v351, %v622
        %v624 = vpop.f32.mrb[0].mxu0
        %625 = vmatprep.mubr.f32.mxu0 0.0
        %626 = vmatmul.mubr.f32.gmra.mrb[0].mxu0 %v364
        %v627 = vpop.f32.mrb[0].mxu0
        %v628 = vadd.f32 %v351, %v627
        %v629 = vpop.f32.mrb[0].mxu0
        %630 = vmatprep.mubr.f32.mxu0 0.0
        %631 = vmatmul.mubr.f32.gmra.mrb[0].mxu0 %v367
        %v632 = vpop.f32.mrb[0].mxu0
        %v633 = vadd.f32 %v351, %v632
        %v634 = vpop.f32.mrb[0].mxu0
        %635 = vmatprep.mubr.f32.mxu0 0.0
        %636 = vmatmul.mubr.f32.gmra.mrb[0].mxu0 %v370
        %v637 = vpop.f32.mrb[0].mxu0
        %v638 = vadd.f32 %v351, %v637
        %v639 = vpop.f32.mrb[0].mxu0
        %640 = vmatprep.mubr.f32.mxu0 0.0
        %641 = vmatmul.mubr.f32.gmra.mrb[0].mxu0 %v373
        %v642 = vpop.f32.mrb[0].mxu0
        %v643 = vadd.f32 %v351, %v642
        %v644 = vpop.f32.mrb[0].mxu0
        %645 = vmatprep.mubr.f32.mxu0 0.0
        %646 = vmatmul.mubr.f32.gmra.mrb[0].mxu0 %v376
        %v647 = vpop.f32.mrb[0].mxu0
        %v648 = vadd.f32 %v351, %v647
        %v649 = vpop.f32.mrb[0].mxu0
        %650 = vmatprep.mubr.f32.mxu0 0.0
        %651 = vmatmul.mubr.f32.gmra.mrb[0].mxu0 %v379
        %v652 = vpop.f32.mrb[0].mxu0
        %v653 = vadd.f32 %v351, %v652
        %v654 = vpop.f32.mrb[0].mxu0
        %655 = vmatprep.mubr.f32.mxu0 0.0
        %656 = vmatmul.mubr.f32.gmra.mrb[0].mxu0 %v382
        %v657 = vpop.f32.mrb[0].mxu0
        %v658 = vadd.f32 %v351, %v657
        %v659 = vpop.f32.mrb[0].mxu0
        %660 = vmatprep.mubr.f32.mxu0 0.0
        %661 = vmatmul.mubr.f32.gmra.mrb[0].mxu0 %v385
        %v662 = vpop.f32.mrb[0].mxu0
        %v663 = vadd.f32 %v351, %v662
        %v664 = vpop.f32.mrb[0].mxu0
        %665 = vmatprep.mubr.f32.mxu0 0.0
        %666 = vmatmul.mubr.f32.gmra.mrb[0].mxu0 %v388
        %v667 = vpop.f32.mrb[0].mxu0
        %v668 = vadd.f32 %v351, %v667
        %v669 = vpop.f32.mrb[0].mxu0
        %670 = vmatprep.mubr.f32.mxu0 0.0
        %671 = vmatmul.mubr.f32.gmra.mrb[0].mxu0 %v391
        %v672 = vpop.f32.mrb[0].mxu0
        %v673 = vadd.f32 %v351, %v672
        %v674 = vpop.f32.mrb[0].mxu0
        %675 = vmatprep.mubr.f32.mxu0 0.0
        %676 = vmatmul.mubr.f32.gmra.mrb[0].mxu0 %v394
        %v677 = vpop.f32.mrb[0].mxu0
        %v678 = vadd.f32 %v351, %v677
        %v679 = vpop.f32.mrb[0].mxu0
        %680 = vmatprep.mubr.f32.mxu0 0.0
        %681 = vmatmul.mubr.f32.gmra.mrb[0].mxu0 %v397
        %v682 = vpop.f32.mrb[0].mxu0
        %v683 = vadd.f32 %v351, %v682
        %v684 = vpop.f32.mrb[0].mxu0
        %685 = vmatprep.mubr.f32.mxu0 0.0
        %686 = vmatmul.mubr.f32.gmra.mrb[0].mxu0 %v400
        %v687 = vpop.f32.mrb[0].mxu0
        %v688 = vadd.f32 %v351, %v687
        %v689 = vpop.f32.mrb[0].mxu0
        %690 = vmatprep.mubr.f32.mxu0 0.0
        %691 = vmatmul.mubr.f32.gmra.mrb[0].mxu0 %v403
        %v692 = vpop.f32.mrb[0].mxu0
        %v693 = vadd.f32 %v351, %v692
        %v694 = vpop.f32.mrb[0].mxu0
        %695 = vmatprep.mubr.f32.mxu0 0.0
        %696 = vmatmul.mubr.f32.gmra.mrb[0].mxu0 %v406
        %v697 = vpop.f32.mrb[0].mxu0
        %v698 = vadd.f32 %v351, %v697
        %v699 = vpop.f32.mrb[0].mxu0
        %700 = vmatprep.mubr.f32.mxu0 0.0
        %701 = vmatmul.mubr.f32.gmra.mrb[0].mxu0 %v409
        %v702 = vpop.f32.mrb[0].mxu0
        %v703 = vadd.f32 %v351, %v702
        %v704 = vpop.f32.mrb[0].mxu0
        %705 = vmatprep.mubr.f32.mxu0 0.0
        %706 = vmatmul.mubr.f32.gmra.mrb[0].mxu0 %v412
        %v707 = vpop.f32.mrb[0].mxu0
        %v708 = vadd.f32 %v351, %v707
        %v709 = vpop.f32.mrb[0].mxu0
        %710 = vmatprep.mubr.f32.mxu0 0.0
        %711 = vmatmul.mubr.f32.gmra.mrb[0].mxu0 %v415
        %v712 = vpop.f32.mrb[0].mxu0
        %v713 = vadd.f32 %v351, %v712
        %v714 = vpop.f32.mrb[0].mxu0
        %715 = vmatprep.mubr.f32.mxu0 0.0
        %716 = vmatmul.mubr.f32.gmra.mrb[0].mxu0 %v418
        %v717 = vpop.f32.mrb[0].mxu0
        %v718 = vadd.f32 %v351, %v717
        %v719 = vpop.f32.mrb[0].mxu0
        %720 = vmatprep.mubr.f32.mxu0 0.0
        %721 = vmatmul.mubr.f32.gmra.mrb[0].mxu0 %v421
        %v722 = vpop.f32.mrb[0].mxu0
        %v723 = vadd.f32 %v351, %v722
        %v724 = vpop.f32.mrb[0].mxu0
        %725 = vmatprep.mubr.f32.mxu0 0.0
        %726 = vmatmul.mubr.f32.gmra.mrb[0].mxu0 %v424
        %v727 = vpop.f32.mrb[0].mxu0
        %v728 = vadd.f32 %v351, %v727
        %v729 = vpop.f32.mrb[0].mxu0
        %730 = vmatprep.mubr.f32.mxu0 0.0
        %731 = vmatmul.mubr.f32.gmra.mrb[0].mxu0 %v427
        %v732 = vpop.f32.mrb[0].mxu0
        %v733 = vadd.f32 %v351, %v732
        %v734 = vpop.f32.mrb[0].mxu0
        %735 = vmatprep.mubr.f32.mxu0 0.0
        %736 = vmatmul.mubr.f32.gmra.mrb[0].mxu0 %v430
        %v737 = vpop.f32.mrb[0].mxu0
        %v738 = vadd.f32 %v351, %v737
        %v739 = vpop.f32.mrb[0].mxu0
        %740 = vmatprep.mubr.f32.mxu0 0.0
        %741 = vmatmul.mubr.f32.gmra.mrb[0].mxu0 %v433
        %v742 = vpop.f32.mrb[0].mxu0
        %v743 = vadd.f32 %v351, %v742
        %v744 = vpop.f32.mrb[0].mxu0
        %745 = vmatprep.mubr.f32.mxu0 0.0
        %746 = vmatmul.mubr.f32.gmra.mrb[0].mxu0 %v436
        %v747 = vpop.f32.mrb[0].mxu0
        %v748 = vadd.f32 %v351, %v747
        %v749 = vpop.f32.mrb[0].mxu0
        %750 = vmatprep.mubr.f32.mxu0 0.0
        %751 = vmatmul.mubr.f32.gmra.mrb[0].mxu0 %v439
        %v752 = vpop.f32.mrb[0].mxu0
        %v753 = vadd.f32 %v351, %v752
        %v754 = vpop.f32.mrb[0].mxu0
        %755 = vmatprep.mubr.f32.mxu0 0.0
        %756 = vmatmul.mubr.f32.gmra.mrb[0].mxu0 %v442
        %v757 = vpop.f32.mrb[0].mxu0
        %v758 = vadd.f32 %v351, %v757
        %v759 = vpop.f32.mrb[0].mxu0
        %760 = vmatprep.mubr.f32.mxu0 0.0
        %761 = vmatmul.mubr.f32.gmra.mrb[0].mxu0 %v445
        %v762 = vpop.f32.mrb[0].mxu0
        %v763 = vadd.f32 %v351, %v762
        %v764 = vpop.f32.mrb[0].mxu0
        %765 = vmatprep.mubr.f32.mxu0 0.0
        %766 = vmatmul.mubr.f32.gmra.mrb[0].mxu0 %v448
        %v767 = vpop.f32.mrb[0].mxu0
        %v768 = vadd.f32 %v351, %v767
        %v769 = vpop.f32.mrb[0].mxu0
        %770 = vmatprep.mubr.f32.mxu0 0.0
        %771 = vmatmul.mubr.f32.gmra.mrb[0].mxu0 %v451
        %v772 = vpop.f32.mrb[0].mxu0
        %v773 = vadd.f32 %v351, %v772
        %v774 = vpop.f32.mrb[0].mxu0
        %775 = vmatprep.mubr.f32.mxu0 0.0
        %776 = vmatmul.mubr.f32.gmra.mrb[0].mxu0 %v454
        %v777 = vpop.f32.mrb[0].mxu0
        %v778 = vadd.f32 %v351, %v777
        %v779 = vpop.f32.mrb[0].mxu0
        %780 = vmatprep.mubr.f32.mxu0 0.0
        %781 = vmatmul.mubr.f32.gmra.mrb[0].mxu0 %v457
        %v782 = vpop.f32.mrb[0].mxu0
        %v783 = vadd.f32 %v351, %v782
        %v784 = vpop.f32.mrb[0].mxu0
        %785 = vmatprep.mubr.f32.mxu0 0.0
        %786 = vmatmul.mubr.f32.gmra.mrb[0].mxu0 %v460
        %v787 = vpop.f32.mrb[0].mxu0
        %v788 = vadd.f32 %v351, %v787
        %v789 = vpop.f32.mrb[0].mxu0
        %790 = vmatprep.mubr.f32.mxu0 0.0
        %791 = vmatmul.mubr.f32.gmra.mrb[0].mxu0 %v463
        %v792 = vpop.f32.mrb[0].mxu0
        %v793 = vadd.f32 %v351, %v792
        %v794 = vpop.f32.mrb[0].mxu0
        %795 = vmatprep.mubr.f32.mxu0 0.0
        %796 = vmatmul.mubr.f32.gmra.mrb[0].mxu0 %v466
        %v797 = vpop.f32.mrb[0].mxu0
        %v798 = vadd.f32 %v351, %v797
        %v799 = vpop.f32.mrb[0].mxu0
        %800 = vmatprep.mubr.f32.mxu0 0.0
        %801 = vmatmul.mubr.f32.gmra.mrb[0].mxu0 %v469
        %v802 = vpop.f32.mrb[0].mxu0
        %v803 = vadd.f32 %v351, %v802
        %v804 = vpop.f32.mrb[0].mxu0
        %805 = vmatprep.mubr.f32.mxu0 0.0
        %806 = vmatmul.mubr.f32.gmra.mrb[0].mxu0 %v472
        %v807 = vpop.f32.mrb[0].mxu0
        %v808 = vadd.f32 %v351, %v807
        %v809 = vpop.f32.mrb[0].mxu0
        %810 = vmatprep.mubr.f32.mxu0 0.0
        %811 = vmatmul.mubr.f32.gmra.mrb[0].mxu0 %v475
        %v812 = vpop.f32.mrb[0].mxu0
        %v813 = vadd.f32 %v351, %v812
        %v814 = vpop.f32.mrb[0].mxu0
        %815 = vmatprep.mubr.f32.mxu0 0.0
        %816 = vmatmul.mubr.f32.gmra.mrb[0].mxu0 %v478
        %v817 = vpop.f32.mrb[0].mxu0
        %v818 = vadd.f32 %v351, %v817
        %v819 = vpop.f32.mrb[0].mxu0
        %820 = vmatprep.mubr.f32.mxu0 0.0
        %821 = vmatmul.mubr.f32.gmra.mrb[0].mxu0 %v481
        %v822 = vpop.f32.mrb[0].mxu0
        %v823 = vadd.f32 %v351, %v822
        %v824 = vpop.f32.mrb[0].mxu0
        %825 = vmatprep.mubr.f32.mxu0 0.0
        %826 = vmatmul.mubr.f32.gmra.mrb[0].mxu0 %v484
        %v827 = vpop.f32.mrb[0].mxu0
        %v828 = vadd.f32 %v351, %v827
        %v829 = vpop.f32.mrb[0].mxu0
        %830 = vmatprep.mubr.f32.mxu0 0.0
        %831 = vmatmul.mubr.f32.gmra.mrb[0].mxu0 %v487
        %v832 = vpop.f32.mrb[0].mxu0
        %v833 = vadd.f32 %v351, %v832
        %v834 = vpop.f32.mrb[0].mxu0
        %835 = vmatprep.mubr.f32.mxu0 0.0
        %836 = vmatmul.mubr.f32.gmra.mrb[0].mxu0 %v490
        %v837 = vpop.f32.mrb[0].mxu0
        %v838 = vadd.f32 %v351, %v837
        %v839 = vpop.f32.mrb[0].mxu0
        %840 = vmatprep.mubr.f32.mxu0 0.0
        %841 = vmatmul.mubr.f32.gmra.mrb[0].mxu0 %v493
        %v842 = vpop.f32.mrb[0].mxu0
        %v843 = vadd.f32 %v351, %v842
        %v844 = vpop.f32.mrb[0].mxu0
        %845 = vmatprep.mubr.f32.mxu0 0.0
        %846 = vmatmul.mubr.f32.gmra.mrb[0].mxu0 %v496
        %v847 = vpop.f32.mrb[0].mxu0
        %v848 = vadd.f32 %v351, %v847
        %v849 = vpop.f32.mrb[0].mxu0
        %850 = vmatprep.mubr.f32.mxu0 0.0
        %851 = vmatmul.mubr.f32.gmra.mrb[0].mxu0 %v499
        %v852 = vpop.f32.mrb[0].mxu0
        %v853 = vadd.f32 %v351, %v852
        %v854 = vpop.f32.mrb[0].mxu0
        %855 = vmatprep.mubr.f32.mxu0 0.0
        %856 = vmatmul.mubr.f32.gmra.mrb[0].mxu0 %v502
        %v857 = vpop.f32.mrb[0].mxu0
        %v858 = vadd.f32 %v351, %v857
        %v859 = vpop.f32.mrb[0].mxu0
        %860 = vmatprep.mubr.f32.mxu0 0.0
        %861 = vmatmul.mubr.f32.gmra.mrb[0].mxu0 %v505
        %v862 = vpop.f32.mrb[0].mxu0
        %v863 = vadd.f32 %v351, %v862
        %v864 = vpop.f32.mrb[0].mxu0
        %865 = vmatprep.mubr.f32.mxu0 0.0
        %866 = vmatmul.mubr.f32.gmra.mrb[0].mxu0 %v508
        %v867 = vpop.f32.mrb[0].mxu0
        %v868 = vadd.f32 %v351, %v867
        %v869 = vpop.f32.mrb[0].mxu0
        %870 = vmatprep.mubr.f32.mxu0 0.0
        %871 = vmatmul.mubr.f32.gmra.mrb[0].mxu0 %v511
        %v872 = vpop.f32.mrb[0].mxu0
        %v873 = vadd.f32 %v351, %v872
        %v874 = vpop.f32.mrb[0].mxu0
        %875 = vmatprep.mubr.f32.mxu0 0.0
        %876 = vmatmul.mubr.f32.gmra.mrb[0].mxu0 %v514
        %v877 = vpop.f32.mrb[0].mxu0
        %v878 = vadd.f32 %v351, %v877
        %v879 = vpop.f32.mrb[0].mxu0
        %880 = vmatprep.mubr.f32.mxu0 0.0
        %881 = vmatmul.mubr.f32.gmra.mrb[0].mxu0 %v517
        %v882 = vpop.f32.mrb[0].mxu0
        %v883 = vadd.f32 %v351, %v882
        %v884 = vpop.f32.mrb[0].mxu0
        %885 = vmatprep.mubr.f32.mxu0 0.0
        %886 = vmatmul.mubr.f32.gmra.mrb[0].mxu0 %v520
        %v887 = vpop.f32.mrb[0].mxu0
        %v888 = vadd.f32 %v351, %v887
        %v889 = vpop.f32.mrb[0].mxu0
        %890 = vmatprep.mubr.f32.mxu0 0.0
        %891 = vmatmul.mubr.f32.gmra.mrb[0].mxu0 %v523
        %v892 = vpop.f32.mrb[0].mxu0
        %v893 = vadd.f32 %v351, %v892
        %v894 = vpop.f32.mrb[0].mxu0
        %895 = vmatprep.mubr.f32.mxu0 0.0
        %896 = vmatmul.mubr.f32.gmra.mrb[0].mxu0 %v526
        %v897 = vpop.f32.mrb[0].mxu0
        %v898 = vadd.f32 %v351, %v897
        %v899 = vpop.f32.mrb[0].mxu0
        %900 = vmatprep.mubr.f32.mxu0 0.0
        %901 = vmatmul.mubr.f32.gmra.mrb[0].mxu0 %v529
        %v902 = vpop.f32.mrb[0].mxu0
        %v903 = vadd.f32 %v351, %v902
        %v904 = vpop.f32.mrb[0].mxu0
        %905 = vmatprep.mubr.f32.mxu0 0.0
        %906 = vmatmul.mubr.f32.gmra.mrb[0].mxu0 %v532
        %v907 = vpop.f32.mrb[0].mxu0
        %v908 = vadd.f32 %v351, %v907
        %v909 = vpop.f32.mrb[0].mxu0
        %910 = vmatprep.mubr.f32.mxu0 0.0
        %911 = vmatmul.mubr.f32.gmra.mrb[0].mxu0 %v535
        %v912 = vpop.f32.mrb[0].mxu0
        %v913 = vadd.f32 %v351, %v912
        %v914 = vpop.f32.mrb[0].mxu0
        %915 = vmatprep.mubr.f32.mxu0 0.0
        %916 = vmatmul.mubr.f32.gmra.mrb[0].mxu0 %v538
        %v917 = vpop.f32.mrb[0].mxu0
        %v918 = vadd.f32 %v351, %v917
        %v919 = vpop.f32.mrb[0].mxu0
        %920 = vmatprep.mubr.f32.mxu0 0.0
        %921 = vmatmul.mubr.f32.gmra.mrb[0].mxu0 %v541
        %v922 = vpop.f32.mrb[0].mxu0
        %v923 = vadd.f32 %v351, %v922
        %v924 = vpop.f32.mrb[0].mxu0
        %925 = vmatprep.mubr.f32.mxu0 0.0
        %926 = vmatmul.mubr.f32.gmra.mrb[0].mxu0 %v544
        %v927 = vpop.f32.mrb[0].mxu0
        %v928 = vadd.f32 %v351, %v927
        %v929 = vpop.f32.mrb[0].mxu0
        %930 = vdwg.mxu0
        %v931 = vmax.f32 %v613, 0.0
        %v932 = vmax.f32 %v618, 0.0
        %v933 = vmax.f32 %v623, 0.0
        %v934 = vmax.f32 %v628, 0.0
        %v935 = vmax.f32 %v633, 0.0
        %v936 = vmax.f32 %v638, 0.0
        %v937 = vmax.f32 %v643, 0.0
        %v938 = vmax.f32 %v648, 0.0
        %v939 = vmax.f32 %v653, 0.0
        %v940 = vmax.f32 %v658, 0.0
        %v941 = vmax.f32 %v663, 0.0
        %v942 = vmax.f32 %v668, 0.0
        %v943 = vmax.f32 %v673, 0.0
        %v944 = vmax.f32 %v678, 0.0
        %v945 = vmax.f32 %v683, 0.0
        %v946 = vmax.f32 %v688, 0.0
        %v947 = vmax.f32 %v693, 0.0
        %v948 = vmax.f32 %v698, 0.0
        %v949 = vmax.f32 %v703, 0.0
        %v950 = vmax.f32 %v708, 0.0
        %v951 = vmax.f32 %v713, 0.0
        %v952 = vmax.f32 %v718, 0.0
        %v953 = vmax.f32 %v723, 0.0
        %v954 = vmax.f32 %v728, 0.0
        %v955 = vmax.f32 %v733, 0.0
        %v956 = vmax.f32 %v738, 0.0
        %v957 = vmax.f32 %v743, 0.0
        %v958 = vmax.f32 %v748, 0.0
        %v959 = vmax.f32 %v753, 0.0
        %v960 = vmax.f32 %v758, 0.0
        %v961 = vmax.f32 %v763, 0.0
        %v962 = vmax.f32 %v768, 0.0
        %v963 = vmax.f32 %v773, 0.0
        %v964 = vmax.f32 %v778, 0.0
        %v965 = vmax.f32 %v783, 0.0
        %v966 = vmax.f32 %v788, 0.0
        %v967 = vmax.f32 %v793, 0.0
        %v968 = vmax.f32 %v798, 0.0
        %v969 = vmax.f32 %v803, 0.0
        %v970 = vmax.f32 %v808, 0.0
        %v971 = vmax.f32 %v813, 0.0
        %v972 = vmax.f32 %v818, 0.0
        %v973 = vmax.f32 %v823, 0.0
        %v974 = vmax.f32 %v828, 0.0
        %v975 = vmax.f32 %v833, 0.0
        %v976 = vmax.f32 %v838, 0.0
        %v977 = vmax.f32 %v843, 0.0
        %v978 = vmax.f32 %v848, 0.0
        %v979 = vmax.f32 %v853, 0.0
        %v980 = vmax.f32 %v858, 0.0
        %v981 = vmax.f32 %v863, 0.0
        %v982 = vmax.f32 %v868, 0.0
        %v983 = vmax.f32 %v873, 0.0
        %v984 = vmax.f32 %v878, 0.0
        %v985 = vmax.f32 %v883, 0.0
        %v986 = vmax.f32 %v888, 0.0
        %v987 = vmax.f32 %v893, 0.0
        %v988 = vmax.f32 %v898, 0.0
        %v989 = vmax.f32 %v903, 0.0
        %v990 = vmax.f32 %v908, 0.0
        %v991 = vmax.f32 %v913, 0.0
        %v992 = vmax.f32 %v918, 0.0
        %v993 = vmax.f32 %v923, 0.0
        %v994 = vmax.f32 %v928, 0.0
        %v995 = vmax.f32 %v931, %v939
        %v996 = vmax.f32 %v932, %v940
        %v997 = vmax.f32 %v933, %v941
        %v998 = vmax.f32 %v934, %v942
        %v999 = vmax.f32 %v935, %v943
        %v1000 = vmax.f32 %v936, %v944
        %v1001 = vmax.f32 %v937, %v945
        %v1002 = vmax.f32 %v938, %v946
        %v1003 = vmax.f32 %v995, %v947
        %v1004 = vmax.f32 %v996, %v948
        %v1005 = vmax.f32 %v997, %v949
        %v1006 = vmax.f32 %v998, %v950
        %v1007 = vmax.f32 %v999, %v951
        %v1008 = vmax.f32 %v1000, %v952
        %v1009 = vmax.f32 %v1001, %v953
        %v1010 = vmax.f32 %v1002, %v954
        %v1011 = vmax.f32 %v1003, %v955
        %v1012 = vmax.f32 %v1004, %v956
        %v1013 = vmax.f32 %v1005, %v957
        %v1014 = vmax.f32 %v1006, %v958
        %v1015 = vmax.f32 %v1007, %v959
        %v1016 = vmax.f32 %v1008, %v960
        %v1017 = vmax.f32 %v1009, %v961
        %v1018 = vmax.f32 %v1010, %v962
        %v1019 = vmax.f32 %v1011, %v963
        %v1020 = vmax.f32 %v1012, %v964
        %v1021 = vmax.f32 %v1013, %v965
        %v1022 = vmax.f32 %v1014, %v966
        %v1023 = vmax.f32 %v1015, %v967
        %v1024 = vmax.f32 %v1016, %v968
        %v1025 = vmax.f32 %v1017, %v969
        %v1026 = vmax.f32 %v1018, %v970
        %v1027 = vmax.f32 %v1019, %v971
        %v1028 = vmax.f32 %v1020, %v972
        %v1029 = vmax.f32 %v1021, %v973
        %v1030 = vmax.f32 %v1022, %v974
        %v1031 = vmax.f32 %v1023, %v975
        %v1032 = vmax.f32 %v1024, %v976
        %v1033 = vmax.f32 %v1025, %v977
        %v1034 = vmax.f32 %v1026, %v978
        %v1035 = vmax.f32 %v1027, %v979
        %v1036 = vmax.f32 %v1028, %v980
        %v1037 = vmax.f32 %v1029, %v981
        %v1038 = vmax.f32 %v1030, %v982
        %v1039 = vmax.f32 %v1031, %v983
        %v1040 = vmax.f32 %v1032, %v984
        %v1041 = vmax.f32 %v1033, %v985
        %v1042 = vmax.f32 %v1034, %v986
        %v1043 = vmax.f32 %v1035, %v987
        %v1044 = vmax.f32 %v1036, %v988
        %v1045 = vmax.f32 %v1037, %v989
        %v1046 = vmax.f32 %v1038, %v990
        %v1047 = vmax.f32 %v1039, %v991
        %v1048 = vmax.f32 %v1040, %v992
        %v1049 = vmax.f32 %v1041, %v993
        %v1050 = vmax.f32 %v1042, %v994
        %v1051 = vmax.f32 %v1043, %v1044
        %v1052 = vmax.f32 %v1051, %v1045
        %v1053 = vmax.f32 %v1052, %v1046
        %v1054 = vmax.f32 %v1053, %v1047
        %v1055 = vmax.f32 %v1054, %v1048
        %v1056 = vmax.f32 %v1055, %v1049
        %v1057 = vmax.f32 %v1056, %v1050
        %s1058 = scalar_lea.vmem %s275, 512
        %v1059 = vld [vmem:[%s1058] sm:$0xff]
        %v1060 = vld [vmem:[%s1058 + $0x8] sm:$0xff]
        %v1061 = vld [vmem:[%s1058 + $0x10] sm:$0xff]
        %v1062 = vld [vmem:[%s1058 + $0x18] sm:$0xff]
        %v1063 = vld [vmem:[%s1058 + $0x20] sm:$0xff]
        %v1064 = vld [vmem:[%s1058 + $0x28] sm:$0xff]
        %v1065 = vld [vmem:[%s1058 + $0x30] sm:$0xff]
        %v1066 = vld [vmem:[%s1058 + $0x38] sm:$0xff]
        %v1067 = vld [vmem:[%s1058 + $0x40] sm:$0xff]
        %v1068 = vld [vmem:[%s1058 + $0x48] sm:$0xff]
        %v1069 = vld [vmem:[%s1058 + $0x50] sm:$0xff]
        %v1070 = vld [vmem:[%s1058 + $0x58] sm:$0xff]
        %v1071 = vld [vmem:[%s1058 + $0x60] sm:$0xff]
        %v1072 = vld [vmem:[%s1058 + $0x68] sm:$0xff]
        %v1073 = vld [vmem:[%s1058 + $0x70] sm:$0xff]
        %v1074 = vld [vmem:[%s1058 + $0x78] sm:$0xff]
        %v1075 = vld [vmem:[%s1058 + $0x80] sm:$0xff]
        %v1076 = vld [vmem:[%s1058 + $0x88] sm:$0xff]
        %v1077 = vld [vmem:[%s1058 + $0x90] sm:$0xff]
        %v1078 = vld [vmem:[%s1058 + $0x98] sm:$0xff]
        %v1079 = vld [vmem:[%s1058 + $0xa0] sm:$0xff]
        %v1080 = vld [vmem:[%s1058 + $0xa8] sm:$0xff]
        %v1081 = vld [vmem:[%s1058 + $0xb0] sm:$0xff]
        %v1082 = vld [vmem:[%s1058 + $0xb8] sm:$0xff]
        %v1083 = vld [vmem:[%s1058 + $0xc0] sm:$0xff]
        %v1084 = vld [vmem:[%s1058 + $0xc8] sm:$0xff]
        %v1085 = vld [vmem:[%s1058 + $0xd0] sm:$0xff]
        %v1086 = vld [vmem:[%s1058 + $0xd8] sm:$0xff]
        %v1087 = vld [vmem:[%s1058 + $0xe0] sm:$0xff]
        %v1088 = vld [vmem:[%s1058 + $0xe8] sm:$0xff]
        %v1089 = vld [vmem:[%s1058 + $0xf0] sm:$0xff]
        %v1090 = vld [vmem:[%s1058 + $0xf8] sm:$0xff]
        %v1091 = vld [vmem:[%s1058 + $0x100] sm:$0xff]
        %v1092 = vld [vmem:[%s1058 + $0x108] sm:$0xff]
        %v1093 = vld [vmem:[%s1058 + $0x110] sm:$0xff]
        %v1094 = vld [vmem:[%s1058 + $0x118] sm:$0xff]
        %v1095 = vld [vmem:[%s1058 + $0x120] sm:$0xff]
        %v1096 = vld [vmem:[%s1058 + $0x128] sm:$0xff]
        %v1097 = vld [vmem:[%s1058 + $0x130] sm:$0xff]
        %v1098 = vld [vmem:[%s1058 + $0x138] sm:$0xff]
        %v1099 = vld [vmem:[%s1058 + $0x140] sm:$0xff]
        %v1100 = vld [vmem:[%s1058 + $0x148] sm:$0xff]
        %v1101 = vld [vmem:[%s1058 + $0x150] sm:$0xff]
        %v1102 = vld [vmem:[%s1058 + $0x158] sm:$0xff]
        %v1103 = vld [vmem:[%s1058 + $0x160] sm:$0xff]
        %v1104 = vld [vmem:[%s1058 + $0x168] sm:$0xff]
        %v1105 = vld [vmem:[%s1058 + $0x170] sm:$0xff]
        %v1106 = vld [vmem:[%s1058 + $0x178] sm:$0xff]
        %v1107 = vld [vmem:[%s1058 + $0x180] sm:$0xff]
        %v1108 = vld [vmem:[%s1058 + $0x188] sm:$0xff]
        %v1109 = vld [vmem:[%s1058 + $0x190] sm:$0xff]
        %v1110 = vld [vmem:[%s1058 + $0x198] sm:$0xff]
        %v1111 = vld [vmem:[%s1058 + $0x1a0] sm:$0xff]
        %v1112 = vld [vmem:[%s1058 + $0x1a8] sm:$0xff]
        %v1113 = vld [vmem:[%s1058 + $0x1b0] sm:$0xff]
        %v1114 = vld [vmem:[%s1058 + $0x1b8] sm:$0xff]
        %v1115 = vld [vmem:[%s1058 + $0x1c0] sm:$0xff]
        %v1116 = vld [vmem:[%s1058 + $0x1c8] sm:$0xff]
        %v1117 = vld [vmem:[%s1058 + $0x1d0] sm:$0xff]
        %v1118 = vld [vmem:[%s1058 + $0x1d8] sm:$0xff]
        %v1119 = vld [vmem:[%s1058 + $0x1e0] sm:$0xff]
        %v1120 = vld [vmem:[%s1058 + $0x1e8] sm:$0xff]
        %v1121 = vld [vmem:[%s1058 + $0x1f0] sm:$0xff]
        %v1122 = vld [vmem:[%s1058 + $0x1f8] sm:$0xff]
        %v1124 = vsel %vm353, %v1059, 0
        %v1127 = vsel %vm353, %v1060, 0
        %v1130 = vsel %vm353, %v1061, 0
        %v1133 = vsel %vm353, %v1062, 0
        %v1136 = vsel %vm353, %v1063, 0
        %v1139 = vsel %vm353, %v1064, 0
        %v1142 = vsel %vm353, %v1065, 0
        %v1145 = vsel %vm353, %v1066, 0
        %v1148 = vsel %vm353, %v1067, 0
        %v1151 = vsel %vm353, %v1068, 0
        %v1154 = vsel %vm353, %v1069, 0
        %v1157 = vsel %vm353, %v1070, 0
        %v1160 = vsel %vm353, %v1071, 0
        %v1163 = vsel %vm353, %v1072, 0
        %v1166 = vsel %vm353, %v1073, 0
        %v1169 = vsel %vm353, %v1074, 0
        %v1172 = vsel %vm353, %v1075, 0
        %v1175 = vsel %vm353, %v1076, 0
        %v1178 = vsel %vm353, %v1077, 0
        %v1181 = vsel %vm353, %v1078, 0
        %v1184 = vsel %vm353, %v1079, 0
        %v1187 = vsel %vm353, %v1080, 0
        %v1190 = vsel %vm353, %v1081, 0
        %v1193 = vsel %vm353, %v1082, 0
        %v1196 = vsel %vm353, %v1083, 0
        %v1199 = vsel %vm353, %v1084, 0
        %v1202 = vsel %vm353, %v1085, 0
        %v1205 = vsel %vm353, %v1086, 0
        %v1208 = vsel %vm353, %v1087, 0
        %v1211 = vsel %vm353, %v1088, 0
        %v1214 = vsel %vm353, %v1089, 0
        %v1217 = vsel %vm353, %v1090, 0
        %v1220 = vsel %vm353, %v1091, 0
        %v1223 = vsel %vm353, %v1092, 0
        %v1226 = vsel %vm353, %v1093, 0
        %v1229 = vsel %vm353, %v1094, 0
        %v1232 = vsel %vm353, %v1095, 0
        %v1235 = vsel %vm353, %v1096, 0
        %v1238 = vsel %vm353, %v1097, 0
        %v1241 = vsel %vm353, %v1098, 0
        %v1244 = vsel %vm353, %v1099, 0
        %v1247 = vsel %vm353, %v1100, 0
        %v1250 = vsel %vm353, %v1101, 0
        %v1253 = vsel %vm353, %v1102, 0
        %v1256 = vsel %vm353, %v1103, 0
        %v1259 = vsel %vm353, %v1104, 0
        %v1262 = vsel %vm353, %v1105, 0
        %v1265 = vsel %vm353, %v1106, 0
        %v1268 = vsel %vm353, %v1107, 0
        %v1271 = vsel %vm353, %v1108, 0
        %v1274 = vsel %vm353, %v1109, 0
        %v1277 = vsel %vm353, %v1110, 0
        %v1280 = vsel %vm353, %v1111, 0
        %v1283 = vsel %vm353, %v1112, 0
        %v1286 = vsel %vm353, %v1113, 0
        %v1289 = vsel %vm353, %v1114, 0
        %v1292 = vsel %vm353, %v1115, 0
        %v1295 = vsel %vm353, %v1116, 0
        %v1298 = vsel %vm353, %v1117, 0
        %v1301 = vsel %vm353, %v1118, 0
        %v1304 = vsel %vm353, %v1119, 0
        %v1307 = vsel %vm353, %v1120, 0
        %v1310 = vsel %vm353, %v1121, 0
        %v1313 = vsel %vm353, %v1122, 0
        %1315 = vmatprep.subr.mxu0 0.0
        %1316 = vmatpush1.msra.mxu0 %v340
        %1317 = vmatprep.subr.mxu0 0.0
        %1318 = vmatpush1.msra.mxu0 %v341
        %1319 = vmatprep.subr.mxu0 0.0
        %1320 = vmatpush1.msra.mxu0 %v342
        %1321 = vmatprep.subr.mxu0 0.0
        %1322 = vmatpush1.msra.mxu0 %v343
        %1323 = vmatprep.subr.mxu0 0.0
        %1324 = vmatpush1.msra.mxu0 %v344
        %1325 = vmatprep.subr.mxu0 0.0
        %1326 = vmatpush1.msra.mxu0 %v345
        %1327 = vmatprep.subr.mxu0 0.0
        %1328 = vmatpush1.msra.mxu0 0.0
        %1329 = vmatprep.subr.mxu0 0.0
        %1330 = vmatpush1.msra.mxu0 0.0
        %1331 = vmatprep.subr.mxu0 0.0
        %1332 = vmatpush1.msra.mxu0 0.0
        %1333 = vmatprep.subr.mxu0 0.0
        %1334 = vmatpush1.msra.mxu0 0.0
        %1335 = vmatprep.subr.mxu0 0.0
        %1336 = vmatpush1.msra.mxu0 0.0
        %1337 = vmatprep.subr.mxu0 0.0
        %1338 = vmatpush1.msra.mxu0 0.0
        %1339 = vmatprep.subr.mxu0 0.0
        %1340 = vmatpush1.msra.mxu0 0.0
        %1341 = vmatprep.subr.mxu0 0.0
        %1342 = vmatpush1.msra.mxu0 0.0
        %1343 = vmatprep.subr.mxu0 0.0
        %1344 = vmatpush1.msra.mxu0 0.0
        %1345 = vmatprep.subr.mxu0 0.0
        %1346 = vmatpush1.msra.mxu0 0.0
        %1347 = vmatprep.subr.mxu0 0.0
        %1348 = vmatpush1.msra.mxu0 0.0
        %1349 = vmatprep.subr.mxu0 0.0
        %1350 = vmatpush1.msra.mxu0 0.0
        %1351 = vmatprep.subr.mxu0 0.0
        %1352 = vmatpush1.msra.mxu0 0.0
        %1353 = vmatprep.subr.mxu0 0.0
        %1354 = vmatpush1.msra.mxu0 0.0
        %1355 = vmatprep.subr.mxu0 0.0
        %1356 = vmatpush1.msra.mxu0 0.0
        %1357 = vmatprep.subr.mxu0 0.0
        %1358 = vmatpush1.msra.mxu0 0.0
        %1359 = vmatprep.subr.mxu0 0.0
        %1360 = vmatpush1.msra.mxu0 0.0
        %1361 = vmatprep.subr.mxu0 0.0
        %1362 = vmatpush1.msra.mxu0 0.0
        %1363 = vmatprep.subr.mxu0 0.0
        %1364 = vmatpush1.msra.mxu0 0.0
        %1365 = vmatprep.subr.mxu0 0.0
        %1366 = vmatpush1.msra.mxu0 0.0
        %1367 = vmatprep.subr.mxu0 0.0
        %1368 = vmatpush1.msra.mxu0 0.0
        %1369 = vmatprep.subr.mxu0 0.0
        %1370 = vmatpush1.msra.mxu0 0.0
        %1371 = vmatprep.subr.mxu0 0.0
        %1372 = vmatpush1.msra.mxu0 0.0
        %1373 = vmatprep.subr.mxu0 0.0
        %1374 = vmatpush1.msra.mxu0 0.0
        %1375 = vmatprep.subr.mxu0 0.0
        %1376 = vmatpush1.msra.mxu0 0.0
        %1377 = vmatprep.subr.mxu0 0.0
        %1378 = vmatpush1.msra.mxu0 0.0
        %1379 = vmatprep.mubr.f32.mxu0 0.0
        %1380 = vmatmul.mubr.f32.gmra.mrb[0].mxu0 %v1124
        %v1381 = vpop.f32.mrb[0].mxu0
        %v1382 = vadd.f32 %v351, %v1381
        %v1383 = vpop.f32.mrb[0].mxu0
        %1384 = vmatprep.mubr.f32.mxu0 0.0
        %1385 = vmatmul.mubr.f32.gmra.mrb[0].mxu0 %v1127
        %v1386 = vpop.f32.mrb[0].mxu0
        %v1387 = vadd.f32 %v351, %v1386
        %v1388 = vpop.f32.mrb[0].mxu0
        %1389 = vmatprep.mubr.f32.mxu0 0.0
        %1390 = vmatmul.mubr.f32.gmra.mrb[0].mxu0 %v1130
        %v1391 = vpop.f32.mrb[0].mxu0
        %v1392 = vadd.f32 %v351, %v1391
        %v1393 = vpop.f32.mrb[0].mxu0
        %1394 = vmatprep.mubr.f32.mxu0 0.0
        %1395 = vmatmul.mubr.f32.gmra.mrb[0].mxu0 %v1133
        %v1396 = vpop.f32.mrb[0].mxu0
        %v1397 = vadd.f32 %v351, %v1396
        %v1398 = vpop.f32.mrb[0].mxu0
        %1399 = vmatprep.mubr.f32.mxu0 0.0
        %1400 = vmatmul.mubr.f32.gmra.mrb[0].mxu0 %v1136
        %v1401 = vpop.f32.mrb[0].mxu0
        %v1402 = vadd.f32 %v351, %v1401
        %v1403 = vpop.f32.mrb[0].mxu0
        %1404 = vmatprep.mubr.f32.mxu0 0.0
        %1405 = vmatmul.mubr.f32.gmra.mrb[0].mxu0 %v1139
        %v1406 = vpop.f32.mrb[0].mxu0
        %v1407 = vadd.f32 %v351, %v1406
        %v1408 = vpop.f32.mrb[0].mxu0
        %1409 = vmatprep.mubr.f32.mxu0 0.0
        %1410 = vmatmul.mubr.f32.gmra.mrb[0].mxu0 %v1142
        %v1411 = vpop.f32.mrb[0].mxu0
        %v1412 = vadd.f32 %v351, %v1411
        %v1413 = vpop.f32.mrb[0].mxu0
        %1414 = vmatprep.mubr.f32.mxu0 0.0
        %1415 = vmatmul.mubr.f32.gmra.mrb[0].mxu0 %v1145
        %v1416 = vpop.f32.mrb[0].mxu0
        %v1417 = vadd.f32 %v351, %v1416
        %v1418 = vpop.f32.mrb[0].mxu0
        %1419 = vmatprep.mubr.f32.mxu0 0.0
        %1420 = vmatmul.mubr.f32.gmra.mrb[0].mxu0 %v1148
        %v1421 = vpop.f32.mrb[0].mxu0
        %v1422 = vadd.f32 %v351, %v1421
        %v1423 = vpop.f32.mrb[0].mxu0
        %1424 = vmatprep.mubr.f32.mxu0 0.0
        %1425 = vmatmul.mubr.f32.gmra.mrb[0].mxu0 %v1151
        %v1426 = vpop.f32.mrb[0].mxu0
        %v1427 = vadd.f32 %v351, %v1426
        %v1428 = vpop.f32.mrb[0].mxu0
        %1429 = vmatprep.mubr.f32.mxu0 0.0
        %1430 = vmatmul.mubr.f32.gmra.mrb[0].mxu0 %v1154
        %v1431 = vpop.f32.mrb[0].mxu0
        %v1432 = vadd.f32 %v351, %v1431
        %v1433 = vpop.f32.mrb[0].mxu0
        %1434 = vmatprep.mubr.f32.mxu0 0.0
        %1435 = vmatmul.mubr.f32.gmra.mrb[0].mxu0 %v1157
        %v1436 = vpop.f32.mrb[0].mxu0
        %v1437 = vadd.f32 %v351, %v1436
        %v1438 = vpop.f32.mrb[0].mxu0
        %1439 = vmatprep.mubr.f32.mxu0 0.0
        %1440 = vmatmul.mubr.f32.gmra.mrb[0].mxu0 %v1160
        %v1441 = vpop.f32.mrb[0].mxu0
        %v1442 = vadd.f32 %v351, %v1441
        %v1443 = vpop.f32.mrb[0].mxu0
        %1444 = vmatprep.mubr.f32.mxu0 0.0
        %1445 = vmatmul.mubr.f32.gmra.mrb[0].mxu0 %v1163
        %v1446 = vpop.f32.mrb[0].mxu0
        %v1447 = vadd.f32 %v351, %v1446
        %v1448 = vpop.f32.mrb[0].mxu0
        %1449 = vmatprep.mubr.f32.mxu0 0.0
        %1450 = vmatmul.mubr.f32.gmra.mrb[0].mxu0 %v1166
        %v1451 = vpop.f32.mrb[0].mxu0
        %v1452 = vadd.f32 %v351, %v1451
        %v1453 = vpop.f32.mrb[0].mxu0
        %1454 = vmatprep.mubr.f32.mxu0 0.0
        %1455 = vmatmul.mubr.f32.gmra.mrb[0].mxu0 %v1169
        %v1456 = vpop.f32.mrb[0].mxu0
        %v1457 = vadd.f32 %v351, %v1456
        %v1458 = vpop.f32.mrb[0].mxu0
        %1459 = vmatprep.mubr.f32.mxu0 0.0
        %1460 = vmatmul.mubr.f32.gmra.mrb[0].mxu0 %v1172
        %v1461 = vpop.f32.mrb[0].mxu0
        %v1462 = vadd.f32 %v351, %v1461
        %v1463 = vpop.f32.mrb[0].mxu0
        %1464 = vmatprep.mubr.f32.mxu0 0.0
        %1465 = vmatmul.mubr.f32.gmra.mrb[0].mxu0 %v1175
        %v1466 = vpop.f32.mrb[0].mxu0
        %v1467 = vadd.f32 %v351, %v1466
        %v1468 = vpop.f32.mrb[0].mxu0
        %1469 = vmatprep.mubr.f32.mxu0 0.0
        %1470 = vmatmul.mubr.f32.gmra.mrb[0].mxu0 %v1178
        %v1471 = vpop.f32.mrb[0].mxu0
        %v1472 = vadd.f32 %v351, %v1471
        %v1473 = vpop.f32.mrb[0].mxu0
        %1474 = vmatprep.mubr.f32.mxu0 0.0
        %1475 = vmatmul.mubr.f32.gmra.mrb[0].mxu0 %v1181
        %v1476 = vpop.f32.mrb[0].mxu0
        %v1477 = vadd.f32 %v351, %v1476
        %v1478 = vpop.f32.mrb[0].mxu0
        %1479 = vmatprep.mubr.f32.mxu0 0.0
        %1480 = vmatmul.mubr.f32.gmra.mrb[0].mxu0 %v1184
        %v1481 = vpop.f32.mrb[0].mxu0
        %v1482 = vadd.f32 %v351, %v1481
        %v1483 = vpop.f32.mrb[0].mxu0
        %1484 = vmatprep.mubr.f32.mxu0 0.0
        %1485 = vmatmul.mubr.f32.gmra.mrb[0].mxu0 %v1187
        %v1486 = vpop.f32.mrb[0].mxu0
        %v1487 = vadd.f32 %v351, %v1486
        %v1488 = vpop.f32.mrb[0].mxu0
        %1489 = vmatprep.mubr.f32.mxu0 0.0
        %1490 = vmatmul.mubr.f32.gmra.mrb[0].mxu0 %v1190
        %v1491 = vpop.f32.mrb[0].mxu0
        %v1492 = vadd.f32 %v351, %v1491
        %v1493 = vpop.f32.mrb[0].mxu0
        %1494 = vmatprep.mubr.f32.mxu0 0.0
        %1495 = vmatmul.mubr.f32.gmra.mrb[0].mxu0 %v1193
        %v1496 = vpop.f32.mrb[0].mxu0
        %v1497 = vadd.f32 %v351, %v1496
        %v1498 = vpop.f32.mrb[0].mxu0
        %1499 = vmatprep.mubr.f32.mxu0 0.0
        %1500 = vmatmul.mubr.f32.gmra.mrb[0].mxu0 %v1196
        %v1501 = vpop.f32.mrb[0].mxu0
        %v1502 = vadd.f32 %v351, %v1501
        %v1503 = vpop.f32.mrb[0].mxu0
        %1504 = vmatprep.mubr.f32.mxu0 0.0
        %1505 = vmatmul.mubr.f32.gmra.mrb[0].mxu0 %v1199
        %v1506 = vpop.f32.mrb[0].mxu0
        %v1507 = vadd.f32 %v351, %v1506
        %v1508 = vpop.f32.mrb[0].mxu0
        %1509 = vmatprep.mubr.f32.mxu0 0.0
        %1510 = vmatmul.mubr.f32.gmra.mrb[0].mxu0 %v1202
        %v1511 = vpop.f32.mrb[0].mxu0
        %v1512 = vadd.f32 %v351, %v1511
        %v1513 = vpop.f32.mrb[0].mxu0
        %1514 = vmatprep.mubr.f32.mxu0 0.0
        %1515 = vmatmul.mubr.f32.gmra.mrb[0].mxu0 %v1205
        %v1516 = vpop.f32.mrb[0].mxu0
        %v1517 = vadd.f32 %v351, %v1516
        %v1518 = vpop.f32.mrb[0].mxu0
        %1519 = vmatprep.mubr.f32.mxu0 0.0
        %1520 = vmatmul.mubr.f32.gmra.mrb[0].mxu0 %v1208
        %v1521 = vpop.f32.mrb[0].mxu0
        %v1522 = vadd.f32 %v351, %v1521
        %v1523 = vpop.f32.mrb[0].mxu0
        %1524 = vmatprep.mubr.f32.mxu0 0.0
        %1525 = vmatmul.mubr.f32.gmra.mrb[0].mxu0 %v1211
        %v1526 = vpop.f32.mrb[0].mxu0
        %v1527 = vadd.f32 %v351, %v1526
        %v1528 = vpop.f32.mrb[0].mxu0
        %1529 = vmatprep.mubr.f32.mxu0 0.0
        %1530 = vmatmul.mubr.f32.gmra.mrb[0].mxu0 %v1214
        %v1531 = vpop.f32.mrb[0].mxu0
        %v1532 = vadd.f32 %v351, %v1531
        %v1533 = vpop.f32.mrb[0].mxu0
        %1534 = vmatprep.mubr.f32.mxu0 0.0
        %1535 = vmatmul.mubr.f32.gmra.mrb[0].mxu0 %v1217
        %v1536 = vpop.f32.mrb[0].mxu0
        %v1537 = vadd.f32 %v351, %v1536
        %v1538 = vpop.f32.mrb[0].mxu0
        %1539 = vmatprep.mubr.f32.mxu0 0.0
        %1540 = vmatmul.mubr.f32.gmra.mrb[0].mxu0 %v1220
        %v1541 = vpop.f32.mrb[0].mxu0
        %v1542 = vadd.f32 %v351, %v1541
        %v1543 = vpop.f32.mrb[0].mxu0
        %1544 = vmatprep.mubr.f32.mxu0 0.0
        %1545 = vmatmul.mubr.f32.gmra.mrb[0].mxu0 %v1223
        %v1546 = vpop.f32.mrb[0].mxu0
        %v1547 = vadd.f32 %v351, %v1546
        %v1548 = vpop.f32.mrb[0].mxu0
        %1549 = vmatprep.mubr.f32.mxu0 0.0
        %1550 = vmatmul.mubr.f32.gmra.mrb[0].mxu0 %v1226
        %v1551 = vpop.f32.mrb[0].mxu0
        %v1552 = vadd.f32 %v351, %v1551
        %v1553 = vpop.f32.mrb[0].mxu0
        %1554 = vmatprep.mubr.f32.mxu0 0.0
        %1555 = vmatmul.mubr.f32.gmra.mrb[0].mxu0 %v1229
        %v1556 = vpop.f32.mrb[0].mxu0
        %v1557 = vadd.f32 %v351, %v1556
        %v1558 = vpop.f32.mrb[0].mxu0
        %1559 = vmatprep.mubr.f32.mxu0 0.0
        %1560 = vmatmul.mubr.f32.gmra.mrb[0].mxu0 %v1232
        %v1561 = vpop.f32.mrb[0].mxu0
        %v1562 = vadd.f32 %v351, %v1561
        %v1563 = vpop.f32.mrb[0].mxu0
        %1564 = vmatprep.mubr.f32.mxu0 0.0
        %1565 = vmatmul.mubr.f32.gmra.mrb[0].mxu0 %v1235
        %v1566 = vpop.f32.mrb[0].mxu0
        %v1567 = vadd.f32 %v351, %v1566
        %v1568 = vpop.f32.mrb[0].mxu0
        %1569 = vmatprep.mubr.f32.mxu0 0.0
        %1570 = vmatmul.mubr.f32.gmra.mrb[0].mxu0 %v1238
        %v1571 = vpop.f32.mrb[0].mxu0
        %v1572 = vadd.f32 %v351, %v1571
        %v1573 = vpop.f32.mrb[0].mxu0
        %1574 = vmatprep.mubr.f32.mxu0 0.0
        %1575 = vmatmul.mubr.f32.gmra.mrb[0].mxu0 %v1241
        %v1576 = vpop.f32.mrb[0].mxu0
        %v1577 = vadd.f32 %v351, %v1576
        %v1578 = vpop.f32.mrb[0].mxu0
        %1579 = vmatprep.mubr.f32.mxu0 0.0
        %1580 = vmatmul.mubr.f32.gmra.mrb[0].mxu0 %v1244
        %v1581 = vpop.f32.mrb[0].mxu0
        %v1582 = vadd.f32 %v351, %v1581
        %v1583 = vpop.f32.mrb[0].mxu0
        %1584 = vmatprep.mubr.f32.mxu0 0.0
        %1585 = vmatmul.mubr.f32.gmra.mrb[0].mxu0 %v1247
        %v1586 = vpop.f32.mrb[0].mxu0
        %v1587 = vadd.f32 %v351, %v1586
        %v1588 = vpop.f32.mrb[0].mxu0
        %1589 = vmatprep.mubr.f32.mxu0 0.0
        %1590 = vmatmul.mubr.f32.gmra.mrb[0].mxu0 %v1250
        %v1591 = vpop.f32.mrb[0].mxu0
        %v1592 = vadd.f32 %v351, %v1591
        %v1593 = vpop.f32.mrb[0].mxu0
        %1594 = vmatprep.mubr.f32.mxu0 0.0
        %1595 = vmatmul.mubr.f32.gmra.mrb[0].mxu0 %v1253
        %v1596 = vpop.f32.mrb[0].mxu0
        %v1597 = vadd.f32 %v351, %v1596
        %v1598 = vpop.f32.mrb[0].mxu0
        %1599 = vmatprep.mubr.f32.mxu0 0.0
        %1600 = vmatmul.mubr.f32.gmra.mrb[0].mxu0 %v1256
        %v1601 = vpop.f32.mrb[0].mxu0
        %v1602 = vadd.f32 %v351, %v1601
        %v1603 = vpop.f32.mrb[0].mxu0
        %1604 = vmatprep.mubr.f32.mxu0 0.0
        %1605 = vmatmul.mubr.f32.gmra.mrb[0].mxu0 %v1259
        %v1606 = vpop.f32.mrb[0].mxu0
        %v1607 = vadd.f32 %v351, %v1606
        %v1608 = vpop.f32.mrb[0].mxu0
        %1609 = vmatprep.mubr.f32.mxu0 0.0
        %1610 = vmatmul.mubr.f32.gmra.mrb[0].mxu0 %v1262
        %v1611 = vpop.f32.mrb[0].mxu0
        %v1612 = vadd.f32 %v351, %v1611
        %v1613 = vpop.f32.mrb[0].mxu0
        %1614 = vmatprep.mubr.f32.mxu0 0.0
        %1615 = vmatmul.mubr.f32.gmra.mrb[0].mxu0 %v1265
        %v1616 = vpop.f32.mrb[0].mxu0
        %v1617 = vadd.f32 %v351, %v1616
        %v1618 = vpop.f32.mrb[0].mxu0
        %1619 = vmatprep.mubr.f32.mxu0 0.0
        %1620 = vmatmul.mubr.f32.gmra.mrb[0].mxu0 %v1268
        %v1621 = vpop.f32.mrb[0].mxu0
        %v1622 = vadd.f32 %v351, %v1621
        %v1623 = vpop.f32.mrb[0].mxu0
        %1624 = vmatprep.mubr.f32.mxu0 0.0
        %1625 = vmatmul.mubr.f32.gmra.mrb[0].mxu0 %v1271
        %v1626 = vpop.f32.mrb[0].mxu0
        %v1627 = vadd.f32 %v351, %v1626
        %v1628 = vpop.f32.mrb[0].mxu0
        %1629 = vmatprep.mubr.f32.mxu0 0.0
        %1630 = vmatmul.mubr.f32.gmra.mrb[0].mxu0 %v1274
        %v1631 = vpop.f32.mrb[0].mxu0
        %v1632 = vadd.f32 %v351, %v1631
        %v1633 = vpop.f32.mrb[0].mxu0
        %1634 = vmatprep.mubr.f32.mxu0 0.0
        %1635 = vmatmul.mubr.f32.gmra.mrb[0].mxu0 %v1277
        %v1636 = vpop.f32.mrb[0].mxu0
        %v1637 = vadd.f32 %v351, %v1636
        %v1638 = vpop.f32.mrb[0].mxu0
        %1639 = vmatprep.mubr.f32.mxu0 0.0
        %1640 = vmatmul.mubr.f32.gmra.mrb[0].mxu0 %v1280
        %v1641 = vpop.f32.mrb[0].mxu0
        %v1642 = vadd.f32 %v351, %v1641
        %v1643 = vpop.f32.mrb[0].mxu0
        %1644 = vmatprep.mubr.f32.mxu0 0.0
        %1645 = vmatmul.mubr.f32.gmra.mrb[0].mxu0 %v1283
        %v1646 = vpop.f32.mrb[0].mxu0
        %v1647 = vadd.f32 %v351, %v1646
        %v1648 = vpop.f32.mrb[0].mxu0
        %1649 = vmatprep.mubr.f32.mxu0 0.0
        %1650 = vmatmul.mubr.f32.gmra.mrb[0].mxu0 %v1286
        %v1651 = vpop.f32.mrb[0].mxu0
        %v1652 = vadd.f32 %v351, %v1651
        %v1653 = vpop.f32.mrb[0].mxu0
        %1654 = vmatprep.mubr.f32.mxu0 0.0
        %1655 = vmatmul.mubr.f32.gmra.mrb[0].mxu0 %v1289
        %v1656 = vpop.f32.mrb[0].mxu0
        %v1657 = vadd.f32 %v351, %v1656
        %v1658 = vpop.f32.mrb[0].mxu0
        %1659 = vmatprep.mubr.f32.mxu0 0.0
        %1660 = vmatmul.mubr.f32.gmra.mrb[0].mxu0 %v1292
        %v1661 = vpop.f32.mrb[0].mxu0
        %v1662 = vadd.f32 %v351, %v1661
        %v1663 = vpop.f32.mrb[0].mxu0
        %1664 = vmatprep.mubr.f32.mxu0 0.0
        %1665 = vmatmul.mubr.f32.gmra.mrb[0].mxu0 %v1295
        %v1666 = vpop.f32.mrb[0].mxu0
        %v1667 = vadd.f32 %v351, %v1666
        %v1668 = vpop.f32.mrb[0].mxu0
        %1669 = vmatprep.mubr.f32.mxu0 0.0
        %1670 = vmatmul.mubr.f32.gmra.mrb[0].mxu0 %v1298
        %v1671 = vpop.f32.mrb[0].mxu0
        %v1672 = vadd.f32 %v351, %v1671
        %v1673 = vpop.f32.mrb[0].mxu0
        %1674 = vmatprep.mubr.f32.mxu0 0.0
        %1675 = vmatmul.mubr.f32.gmra.mrb[0].mxu0 %v1301
        %v1676 = vpop.f32.mrb[0].mxu0
        %v1677 = vadd.f32 %v351, %v1676
        %v1678 = vpop.f32.mrb[0].mxu0
        %1679 = vmatprep.mubr.f32.mxu0 0.0
        %1680 = vmatmul.mubr.f32.gmra.mrb[0].mxu0 %v1304
        %v1681 = vpop.f32.mrb[0].mxu0
        %v1682 = vadd.f32 %v351, %v1681
        %v1683 = vpop.f32.mrb[0].mxu0
        %1684 = vmatprep.mubr.f32.mxu0 0.0
        %1685 = vmatmul.mubr.f32.gmra.mrb[0].mxu0 %v1307
        %v1686 = vpop.f32.mrb[0].mxu0
        %v1687 = vadd.f32 %v351, %v1686
        %v1688 = vpop.f32.mrb[0].mxu0
        %1689 = vmatprep.mubr.f32.mxu0 0.0
        %1690 = vmatmul.mubr.f32.gmra.mrb[0].mxu0 %v1310
        %v1691 = vpop.f32.mrb[0].mxu0
        %v1692 = vadd.f32 %v351, %v1691
        %v1693 = vpop.f32.mrb[0].mxu0
        %1694 = vmatprep.mubr.f32.mxu0 0.0
        %1695 = vmatmul.mubr.f32.gmra.mrb[0].mxu0 %v1313
        %v1696 = vpop.f32.mrb[0].mxu0
        %v1697 = vadd.f32 %v351, %v1696
        %v1698 = vpop.f32.mrb[0].mxu0
        %1699 = vdwg.mxu0
        %v1700 = vmax.f32 %v1382, 0.0
        %v1701 = vmax.f32 %v1387, 0.0
        %v1702 = vmax.f32 %v1392, 0.0
        %v1703 = vmax.f32 %v1397, 0.0
        %v1704 = vmax.f32 %v1402, 0.0
        %v1705 = vmax.f32 %v1407, 0.0
        %v1706 = vmax.f32 %v1412, 0.0
        %v1707 = vmax.f32 %v1417, 0.0
        %v1708 = vmax.f32 %v1422, 0.0
        %v1709 = vmax.f32 %v1427, 0.0
        %v1710 = vmax.f32 %v1432, 0.0
        %v1711 = vmax.f32 %v1437, 0.0
        %v1712 = vmax.f32 %v1442, 0.0
        %v1713 = vmax.f32 %v1447, 0.0
        %v1714 = vmax.f32 %v1452, 0.0
        %v1715 = vmax.f32 %v1457, 0.0
        %v1716 = vmax.f32 %v1462, 0.0
        %v1717 = vmax.f32 %v1467, 0.0
        %v1718 = vmax.f32 %v1472, 0.0
        %v1719 = vmax.f32 %v1477, 0.0
        %v1720 = vmax.f32 %v1482, 0.0
        %v1721 = vmax.f32 %v1487, 0.0
        %v1722 = vmax.f32 %v1492, 0.0
        %v1723 = vmax.f32 %v1497, 0.0
        %v1724 = vmax.f32 %v1502, 0.0
        %v1725 = vmax.f32 %v1507, 0.0
        %v1726 = vmax.f32 %v1512, 0.0
        %v1727 = vmax.f32 %v1517, 0.0
        %v1728 = vmax.f32 %v1522, 0.0
        %v1729 = vmax.f32 %v1527, 0.0
        %v1730 = vmax.f32 %v1532, 0.0
        %v1731 = vmax.f32 %v1537, 0.0
        %v1732 = vmax.f32 %v1542, 0.0
        %v1733 = vmax.f32 %v1547, 0.0
        %v1734 = vmax.f32 %v1552, 0.0
        %v1735 = vmax.f32 %v1557, 0.0
        %v1736 = vmax.f32 %v1562, 0.0
        %v1737 = vmax.f32 %v1567, 0.0
        %v1738 = vmax.f32 %v1572, 0.0
        %v1739 = vmax.f32 %v1577, 0.0
        %v1740 = vmax.f32 %v1582, 0.0
        %v1741 = vmax.f32 %v1587, 0.0
        %v1742 = vmax.f32 %v1592, 0.0
        %v1743 = vmax.f32 %v1597, 0.0
        %v1744 = vmax.f32 %v1602, 0.0
        %v1745 = vmax.f32 %v1607, 0.0
        %v1746 = vmax.f32 %v1612, 0.0
        %v1747 = vmax.f32 %v1617, 0.0
        %v1748 = vmax.f32 %v1622, 0.0
        %v1749 = vmax.f32 %v1627, 0.0
        %v1750 = vmax.f32 %v1632, 0.0
        %v1751 = vmax.f32 %v1637, 0.0
        %v1752 = vmax.f32 %v1642, 0.0
        %v1753 = vmax.f32 %v1647, 0.0
        %v1754 = vmax.f32 %v1652, 0.0
        %v1755 = vmax.f32 %v1657, 0.0
        %v1756 = vmax.f32 %v1662, 0.0
        %v1757 = vmax.f32 %v1667, 0.0
        %v1758 = vmax.f32 %v1672, 0.0
        %v1759 = vmax.f32 %v1677, 0.0
        %v1760 = vmax.f32 %v1682, 0.0
        %v1761 = vmax.f32 %v1687, 0.0
        %v1762 = vmax.f32 %v1692, 0.0
        %v1763 = vmax.f32 %v1697, 0.0
        %v1764 = vmax.f32 %v1700, %v1708
        %v1765 = vmax.f32 %v1701, %v1709
        %v1766 = vmax.f32 %v1702, %v1710
        %v1767 = vmax.f32 %v1703, %v1711
        %v1768 = vmax.f32 %v1704, %v1712
        %v1769 = vmax.f32 %v1705, %v1713
        %v1770 = vmax.f32 %v1706, %v1714
        %v1771 = vmax.f32 %v1707, %v1715
        %v1772 = vmax.f32 %v1764, %v1716
        %v1773 = vmax.f32 %v1765, %v1717
        %v1774 = vmax.f32 %v1766, %v1718
        %v1775 = vmax.f32 %v1767, %v1719
        %v1776 = vmax.f32 %v1768, %v1720
        %v1777 = vmax.f32 %v1769, %v1721
        %v1778 = vmax.f32 %v1770, %v1722
        %v1779 = vmax.f32 %v1771, %v1723
        %v1780 = vmax.f32 %v1772, %v1724
        %v1781 = vmax.f32 %v1773, %v1725
        %v1782 = vmax.f32 %v1774, %v1726
        %v1783 = vmax.f32 %v1775, %v1727
        %v1784 = vmax.f32 %v1776, %v1728
        %v1785 = vmax.f32 %v1777, %v1729
        %v1786 = vmax.f32 %v1778, %v1730
        %v1787 = vmax.f32 %v1779, %v1731
        %v1788 = vmax.f32 %v1780, %v1732
        %v1789 = vmax.f32 %v1781, %v1733
        %v1790 = vmax.f32 %v1782, %v1734
        %v1791 = vmax.f32 %v1783, %v1735
        %v1792 = vmax.f32 %v1784, %v1736
        %v1793 = vmax.f32 %v1785, %v1737
        %v1794 = vmax.f32 %v1786, %v1738
        %v1795 = vmax.f32 %v1787, %v1739
        %v1796 = vmax.f32 %v1788, %v1740
        %v1797 = vmax.f32 %v1789, %v1741
        %v1798 = vmax.f32 %v1790, %v1742
        %v1799 = vmax.f32 %v1791, %v1743
        %v1800 = vmax.f32 %v1792, %v1744
        %v1801 = vmax.f32 %v1793, %v1745
        %v1802 = vmax.f32 %v1794, %v1746
        %v1803 = vmax.f32 %v1795, %v1747
        %v1804 = vmax.f32 %v1796, %v1748
        %v1805 = vmax.f32 %v1797, %v1749
        %v1806 = vmax.f32 %v1798, %v1750
        %v1807 = vmax.f32 %v1799, %v1751
        %v1808 = vmax.f32 %v1800, %v1752
        %v1809 = vmax.f32 %v1801, %v1753
        %v1810 = vmax.f32 %v1802, %v1754
        %v1811 = vmax.f32 %v1803, %v1755
        %v1812 = vmax.f32 %v1804, %v1756
        %v1813 = vmax.f32 %v1805, %v1757
        %v1814 = vmax.f32 %v1806, %v1758
        %v1815 = vmax.f32 %v1807, %v1759
        %v1816 = vmax.f32 %v1808, %v1760
        %v1817 = vmax.f32 %v1809, %v1761
        %v1818 = vmax.f32 %v1810, %v1762
        %v1819 = vmax.f32 %v1811, %v1763
        %v1820 = vmax.f32 %v1812, %v1813
        %v1821 = vmax.f32 %v1820, %v1814
        %v1822 = vmax.f32 %v1821, %v1815
        %v1823 = vmax.f32 %v1822, %v1816
        %v1824 = vmax.f32 %v1823, %v1817
        %v1825 = vmax.f32 %v1824, %v1818
        %v1826 = vmax.f32 %v1825, %v1819
        %s1827 = scalar_lea.vmem %s275, 1024
        %v1828 = vld [vmem:[%s1827] sm:$0xff]
        %v1829 = vld [vmem:[%s1827 + $0x8] sm:$0xff]
        %v1830 = vld [vmem:[%s1827 + $0x10] sm:$0xff]
        %v1831 = vld [vmem:[%s1827 + $0x18] sm:$0xff]
        %v1832 = vld [vmem:[%s1827 + $0x20] sm:$0xff]
        %v1833 = vld [vmem:[%s1827 + $0x28] sm:$0xff]
        %v1834 = vld [vmem:[%s1827 + $0x30] sm:$0xff]
        %v1835 = vld [vmem:[%s1827 + $0x38] sm:$0xff]
        %v1836 = vld [vmem:[%s1827 + $0x40] sm:$0xff]
        %v1837 = vld [vmem:[%s1827 + $0x48] sm:$0xff]
        %v1838 = vld [vmem:[%s1827 + $0x50] sm:$0xff]
        %v1839 = vld [vmem:[%s1827 + $0x58] sm:$0xff]
        %v1840 = vld [vmem:[%s1827 + $0x60] sm:$0xff]
        %v1841 = vld [vmem:[%s1827 + $0x68] sm:$0xff]
        %v1842 = vld [vmem:[%s1827 + $0x70] sm:$0xff]
        %v1843 = vld [vmem:[%s1827 + $0x78] sm:$0xff]
        %v1844 = vld [vmem:[%s1827 + $0x80] sm:$0xff]
        %v1845 = vld [vmem:[%s1827 + $0x88] sm:$0xff]
        %v1846 = vld [vmem:[%s1827 + $0x90] sm:$0xff]
        %v1847 = vld [vmem:[%s1827 + $0x98] sm:$0xff]
        %v1848 = vld [vmem:[%s1827 + $0xa0] sm:$0xff]
        %v1849 = vld [vmem:[%s1827 + $0xa8] sm:$0xff]
        %v1850 = vld [vmem:[%s1827 + $0xb0] sm:$0xff]
        %v1851 = vld [vmem:[%s1827 + $0xb8] sm:$0xff]
        %v1852 = vld [vmem:[%s1827 + $0xc0] sm:$0xff]
        %v1853 = vld [vmem:[%s1827 + $0xc8] sm:$0xff]
        %v1854 = vld [vmem:[%s1827 + $0xd0] sm:$0xff]
        %v1855 = vld [vmem:[%s1827 + $0xd8] sm:$0xff]
        %v1856 = vld [vmem:[%s1827 + $0xe0] sm:$0xff]
        %v1857 = vld [vmem:[%s1827 + $0xe8] sm:$0xff]
        %v1858 = vld [vmem:[%s1827 + $0xf0] sm:$0xff]
        %v1859 = vld [vmem:[%s1827 + $0xf8] sm:$0xff]
        %v1860 = vld [vmem:[%s1827 + $0x100] sm:$0xff]
        %v1861 = vld [vmem:[%s1827 + $0x108] sm:$0xff]
        %v1862 = vld [vmem:[%s1827 + $0x110] sm:$0xff]
        %v1863 = vld [vmem:[%s1827 + $0x118] sm:$0xff]
        %v1864 = vld [vmem:[%s1827 + $0x120] sm:$0xff]
        %v1865 = vld [vmem:[%s1827 + $0x128] sm:$0xff]
        %v1866 = vld [vmem:[%s1827 + $0x130] sm:$0xff]
        %v1867 = vld [vmem:[%s1827 + $0x138] sm:$0xff]
        %v1868 = vld [vmem:[%s1827 + $0x140] sm:$0xff]
        %v1869 = vld [vmem:[%s1827 + $0x148] sm:$0xff]
        %v1870 = vld [vmem:[%s1827 + $0x150] sm:$0xff]
        %v1871 = vld [vmem:[%s1827 + $0x158] sm:$0xff]
        %v1872 = vld [vmem:[%s1827 + $0x160] sm:$0xff]
        %v1873 = vld [vmem:[%s1827 + $0x168] sm:$0xff]
        %v1874 = vld [vmem:[%s1827 + $0x170] sm:$0xff]
        %v1875 = vld [vmem:[%s1827 + $0x178] sm:$0xff]
        %v1876 = vld [vmem:[%s1827 + $0x180] sm:$0xff]
        %v1877 = vld [vmem:[%s1827 + $0x188] sm:$0xff]
        %v1878 = vld [vmem:[%s1827 + $0x190] sm:$0xff]
        %v1879 = vld [vmem:[%s1827 + $0x198] sm:$0xff]
        %v1880 = vld [vmem:[%s1827 + $0x1a0] sm:$0xff]
        %v1881 = vld [vmem:[%s1827 + $0x1a8] sm:$0xff]
        %v1882 = vld [vmem:[%s1827 + $0x1b0] sm:$0xff]
        %v1883 = vld [vmem:[%s1827 + $0x1b8] sm:$0xff]
        %v1884 = vld [vmem:[%s1827 + $0x1c0] sm:$0xff]
        %v1885 = vld [vmem:[%s1827 + $0x1c8] sm:$0xff]
        %v1886 = vld [vmem:[%s1827 + $0x1d0] sm:$0xff]
        %v1887 = vld [vmem:[%s1827 + $0x1d8] sm:$0xff]
        %v1888 = vld [vmem:[%s1827 + $0x1e0] sm:$0xff]
        %v1889 = vld [vmem:[%s1827 + $0x1e8] sm:$0xff]
        %v1890 = vld [vmem:[%s1827 + $0x1f0] sm:$0xff]
        %v1891 = vld [vmem:[%s1827 + $0x1f8] sm:$0xff]
        %v1893 = vsel %vm353, %v1828, 0
        %v1896 = vsel %vm353, %v1829, 0
        %v1899 = vsel %vm353, %v1830, 0
        %v1902 = vsel %vm353, %v1831, 0
        %v1905 = vsel %vm353, %v1832, 0
        %v1908 = vsel %vm353, %v1833, 0
        %v1911 = vsel %vm353, %v1834, 0
        %v1914 = vsel %vm353, %v1835, 0
        %v1917 = vsel %vm353, %v1836, 0
        %v1920 = vsel %vm353, %v1837, 0
        %v1923 = vsel %vm353, %v1838, 0
        %v1926 = vsel %vm353, %v1839, 0
        %v1929 = vsel %vm353, %v1840, 0
        %v1932 = vsel %vm353, %v1841, 0
        %v1935 = vsel %vm353, %v1842, 0
        %v1938 = vsel %vm353, %v1843, 0
        %v1941 = vsel %vm353, %v1844, 0
        %v1944 = vsel %vm353, %v1845, 0
        %v1947 = vsel %vm353, %v1846, 0
        %v1950 = vsel %vm353, %v1847, 0
        %v1953 = vsel %vm353, %v1848, 0
        %v1956 = vsel %vm353, %v1849, 0
        %v1959 = vsel %vm353, %v1850, 0
        %v1962 = vsel %vm353, %v1851, 0
        %v1965 = vsel %vm353, %v1852, 0
        %v1968 = vsel %vm353, %v1853, 0
        %v1971 = vsel %vm353, %v1854, 0
        %v1974 = vsel %vm353, %v1855, 0
        %v1977 = vsel %vm353, %v1856, 0
        %v1980 = vsel %vm353, %v1857, 0
        %v1983 = vsel %vm353, %v1858, 0
        %v1986 = vsel %vm353, %v1859, 0
        %v1989 = vsel %vm353, %v1860, 0
        %v1992 = vsel %vm353, %v1861, 0
        %v1995 = vsel %vm353, %v1862, 0
        %v1998 = vsel %vm353, %v1863, 0
        %v2001 = vsel %vm353, %v1864, 0
        %v2004 = vsel %vm353, %v1865, 0
        %v2007 = vsel %vm353, %v1866, 0
        %v2010 = vsel %vm353, %v1867, 0
        %v2013 = vsel %vm353, %v1868, 0
        %v2016 = vsel %vm353, %v1869, 0
        %v2019 = vsel %vm353, %v1870, 0
        %v2022 = vsel %vm353, %v1871, 0
        %v2025 = vsel %vm353, %v1872, 0
        %v2028 = vsel %vm353, %v1873, 0
        %v2031 = vsel %vm353, %v1874, 0
        %v2034 = vsel %vm353, %v1875, 0
        %v2037 = vsel %vm353, %v1876, 0
        %v2040 = vsel %vm353, %v1877, 0
        %v2043 = vsel %vm353, %v1878, 0
        %v2046 = vsel %vm353, %v1879, 0
        %v2049 = vsel %vm353, %v1880, 0
        %v2052 = vsel %vm353, %v1881, 0
        %v2055 = vsel %vm353, %v1882, 0
        %v2058 = vsel %vm353, %v1883, 0
        %v2061 = vsel %vm353, %v1884, 0
        %v2064 = vsel %vm353, %v1885, 0
        %v2067 = vsel %vm353, %v1886, 0
        %v2070 = vsel %vm353, %v1887, 0
        %v2073 = vsel %vm353, %v1888, 0
        %v2076 = vsel %vm353, %v1889, 0
        %v2079 = vsel %vm353, %v1890, 0
        %v2082 = vsel %vm353, %v1891, 0
        %2084 = vmatprep.subr.mxu0 0.0
        %2085 = vmatpush1.msra.mxu0 %v340
        %2086 = vmatprep.subr.mxu0 0.0
        %2087 = vmatpush1.msra.mxu0 %v341
        %2088 = vmatprep.subr.mxu0 0.0
        %2089 = vmatpush1.msra.mxu0 %v342
        %2090 = vmatprep.subr.mxu0 0.0
        %2091 = vmatpush1.msra.mxu0 %v343
        %2092 = vmatprep.subr.mxu0 0.0
        %2093 = vmatpush1.msra.mxu0 %v344
        %2094 = vmatprep.subr.mxu0 0.0
        %2095 = vmatpush1.msra.mxu0 %v345
        %2096 = vmatprep.subr.mxu0 0.0
        %2097 = vmatpush1.msra.mxu0 0.0
        %2098 = vmatprep.subr.mxu0 0.0
        %2099 = vmatpush1.msra.mxu0 0.0
        %2100 = vmatprep.subr.mxu0 0.0
        %2101 = vmatpush1.msra.mxu0 0.0
        %2102 = vmatprep.subr.mxu0 0.0
        %2103 = vmatpush1.msra.mxu0 0.0
        %2104 = vmatprep.subr.mxu0 0.0
        %2105 = vmatpush1.msra.mxu0 0.0
        %2106 = vmatprep.subr.mxu0 0.0
        %2107 = vmatpush1.msra.mxu0 0.0
        %2108 = vmatprep.subr.mxu0 0.0
        %2109 = vmatpush1.msra.mxu0 0.0
        %2110 = vmatprep.subr.mxu0 0.0
        %2111 = vmatpush1.msra.mxu0 0.0
        %2112 = vmatprep.subr.mxu0 0.0
        %2113 = vmatpush1.msra.mxu0 0.0
        %2114 = vmatprep.subr.mxu0 0.0
        %2115 = vmatpush1.msra.mxu0 0.0
        %2116 = vmatprep.subr.mxu0 0.0
        %2117 = vmatpush1.msra.mxu0 0.0
        %2118 = vmatprep.subr.mxu0 0.0
        %2119 = vmatpush1.msra.mxu0 0.0
        %2120 = vmatprep.subr.mxu0 0.0
        %2121 = vmatpush1.msra.mxu0 0.0
        %2122 = vmatprep.subr.mxu0 0.0
        %2123 = vmatpush1.msra.mxu0 0.0
        %2124 = vmatprep.subr.mxu0 0.0
        %2125 = vmatpush1.msra.mxu0 0.0
        %2126 = vmatprep.subr.mxu0 0.0
        %2127 = vmatpush1.msra.mxu0 0.0
        %2128 = vmatprep.subr.mxu0 0.0
        %2129 = vmatpush1.msra.mxu0 0.0
        %2130 = vmatprep.subr.mxu0 0.0
        %2131 = vmatpush1.msra.mxu0 0.0
        %2132 = vmatprep.subr.mxu0 0.0
        %2133 = vmatpush1.msra.mxu0 0.0
        %2134 = vmatprep.subr.mxu0 0.0
        %2135 = vmatpush1.msra.mxu0 0.0
        %2136 = vmatprep.subr.mxu0 0.0
        %2137 = vmatpush1.msra.mxu0 0.0
        %2138 = vmatprep.subr.mxu0 0.0
        %2139 = vmatpush1.msra.mxu0 0.0
        %2140 = vmatprep.subr.mxu0 0.0
        %2141 = vmatpush1.msra.mxu0 0.0
        %2142 = vmatprep.subr.mxu0 0.0
        %2143 = vmatpush1.msra.mxu0 0.0
        %2144 = vmatprep.subr.mxu0 0.0
        %2145 = vmatpush1.msra.mxu0 0.0
        %2146 = vmatprep.subr.mxu0 0.0
        %2147 = vmatpush1.msra.mxu0 0.0
        %2148 = vmatprep.mubr.f32.mxu0 0.0
        %2149 = vmatmul.mubr.f32.gmra.mrb[0].mxu0 %v1893
        %v2150 = vpop.f32.mrb[0].mxu0
        %v2151 = vadd.f32 %v351, %v2150
        %v2152 = vpop.f32.mrb[0].mxu0
        %2153 = vmatprep.mubr.f32.mxu0 0.0
        %2154 = vmatmul.mubr.f32.gmra.mrb[0].mxu0 %v1896
        %v2155 = vpop.f32.mrb[0].mxu0
        %v2156 = vadd.f32 %v351, %v2155
        %v2157 = vpop.f32.mrb[0].mxu0
        %2158 = vmatprep.mubr.f32.mxu0 0.0
        %2159 = vmatmul.mubr.f32.gmra.mrb[0].mxu0 %v1899
        %v2160 = vpop.f32.mrb[0].mxu0
        %v2161 = vadd.f32 %v351, %v2160
        %v2162 = vpop.f32.mrb[0].mxu0
        %2163 = vmatprep.mubr.f32.mxu0 0.0
        %2164 = vmatmul.mubr.f32.gmra.mrb[0].mxu0 %v1902
        %v2165 = vpop.f32.mrb[0].mxu0
        %v2166 = vadd.f32 %v351, %v2165
        %v2167 = vpop.f32.mrb[0].mxu0
        %2168 = vmatprep.mubr.f32.mxu0 0.0
        %2169 = vmatmul.mubr.f32.gmra.mrb[0].mxu0 %v1905
        %v2170 = vpop.f32.mrb[0].mxu0
        %v2171 = vadd.f32 %v351, %v2170
        %v2172 = vpop.f32.mrb[0].mxu0
        %2173 = vmatprep.mubr.f32.mxu0 0.0
        %2174 = vmatmul.mubr.f32.gmra.mrb[0].mxu0 %v1908
        %v2175 = vpop.f32.mrb[0].mxu0
        %v2176 = vadd.f32 %v351, %v2175
        %v2177 = vpop.f32.mrb[0].mxu0
        %2178 = vmatprep.mubr.f32.mxu0 0.0
        %2179 = vmatmul.mubr.f32.gmra.mrb[0].mxu0 %v1911
        %v2180 = vpop.f32.mrb[0].mxu0
        %v2181 = vadd.f32 %v351, %v2180
        %v2182 = vpop.f32.mrb[0].mxu0
        %2183 = vmatprep.mubr.f32.mxu0 0.0
        %2184 = vmatmul.mubr.f32.gmra.mrb[0].mxu0 %v1914
        %v2185 = vpop.f32.mrb[0].mxu0
        %v2186 = vadd.f32 %v351, %v2185
        %v2187 = vpop.f32.mrb[0].mxu0
        %2188 = vmatprep.mubr.f32.mxu0 0.0
        %2189 = vmatmul.mubr.f32.gmra.mrb[0].mxu0 %v1917
        %v2190 = vpop.f32.mrb[0].mxu0
        %v2191 = vadd.f32 %v351, %v2190
        %v2192 = vpop.f32.mrb[0].mxu0
        %2193 = vmatprep.mubr.f32.mxu0 0.0
        %2194 = vmatmul.mubr.f32.gmra.mrb[0].mxu0 %v1920
        %v2195 = vpop.f32.mrb[0].mxu0
        %v2196 = vadd.f32 %v351, %v2195
        %v2197 = vpop.f32.mrb[0].mxu0
        %2198 = vmatprep.mubr.f32.mxu0 0.0
        %2199 = vmatmul.mubr.f32.gmra.mrb[0].mxu0 %v1923
        %v2200 = vpop.f32.mrb[0].mxu0
        %v2201 = vadd.f32 %v351, %v2200
        %v2202 = vpop.f32.mrb[0].mxu0
        %2203 = vmatprep.mubr.f32.mxu0 0.0
        %2204 = vmatmul.mubr.f32.gmra.mrb[0].mxu0 %v1926
        %v2205 = vpop.f32.mrb[0].mxu0
        %v2206 = vadd.f32 %v351, %v2205
        %v2207 = vpop.f32.mrb[0].mxu0
        %2208 = vmatprep.mubr.f32.mxu0 0.0
        %2209 = vmatmul.mubr.f32.gmra.mrb[0].mxu0 %v1929
        %v2210 = vpop.f32.mrb[0].mxu0
        %v2211 = vadd.f32 %v351, %v2210
        %v2212 = vpop.f32.mrb[0].mxu0
        %2213 = vmatprep.mubr.f32.mxu0 0.0
        %2214 = vmatmul.mubr.f32.gmra.mrb[0].mxu0 %v1932
        %v2215 = vpop.f32.mrb[0].mxu0
        %v2216 = vadd.f32 %v351, %v2215
        %v2217 = vpop.f32.mrb[0].mxu0
        %2218 = vmatprep.mubr.f32.mxu0 0.0
        %2219 = vmatmul.mubr.f32.gmra.mrb[0].mxu0 %v1935
        %v2220 = vpop.f32.mrb[0].mxu0
        %v2221 = vadd.f32 %v351, %v2220
        %v2222 = vpop.f32.mrb[0].mxu0
        %2223 = vmatprep.mubr.f32.mxu0 0.0
        %2224 = vmatmul.mubr.f32.gmra.mrb[0].mxu0 %v1938
        %v2225 = vpop.f32.mrb[0].mxu0
        %v2226 = vadd.f32 %v351, %v2225
        %v2227 = vpop.f32.mrb[0].mxu0
        %2228 = vmatprep.mubr.f32.mxu0 0.0
        %2229 = vmatmul.mubr.f32.gmra.mrb[0].mxu0 %v1941
        %v2230 = vpop.f32.mrb[0].mxu0
        %v2231 = vadd.f32 %v351, %v2230
        %v2232 = vpop.f32.mrb[0].mxu0
        %2233 = vmatprep.mubr.f32.mxu0 0.0
        %2234 = vmatmul.mubr.f32.gmra.mrb[0].mxu0 %v1944
        %v2235 = vpop.f32.mrb[0].mxu0
        %v2236 = vadd.f32 %v351, %v2235
        %v2237 = vpop.f32.mrb[0].mxu0
        %2238 = vmatprep.mubr.f32.mxu0 0.0
        %2239 = vmatmul.mubr.f32.gmra.mrb[0].mxu0 %v1947
        %v2240 = vpop.f32.mrb[0].mxu0
        %v2241 = vadd.f32 %v351, %v2240
        %v2242 = vpop.f32.mrb[0].mxu0
        %2243 = vmatprep.mubr.f32.mxu0 0.0
        %2244 = vmatmul.mubr.f32.gmra.mrb[0].mxu0 %v1950
        %v2245 = vpop.f32.mrb[0].mxu0
        %v2246 = vadd.f32 %v351, %v2245
        %v2247 = vpop.f32.mrb[0].mxu0
        %2248 = vmatprep.mubr.f32.mxu0 0.0
        %2249 = vmatmul.mubr.f32.gmra.mrb[0].mxu0 %v1953
        %v2250 = vpop.f32.mrb[0].mxu0
        %v2251 = vadd.f32 %v351, %v2250
        %v2252 = vpop.f32.mrb[0].mxu0
        %2253 = vmatprep.mubr.f32.mxu0 0.0
        %2254 = vmatmul.mubr.f32.gmra.mrb[0].mxu0 %v1956
        %v2255 = vpop.f32.mrb[0].mxu0
        %v2256 = vadd.f32 %v351, %v2255
        %v2257 = vpop.f32.mrb[0].mxu0
        %2258 = vmatprep.mubr.f32.mxu0 0.0
        %2259 = vmatmul.mubr.f32.gmra.mrb[0].mxu0 %v1959
        %v2260 = vpop.f32.mrb[0].mxu0
        %v2261 = vadd.f32 %v351, %v2260
        %v2262 = vpop.f32.mrb[0].mxu0
        %2263 = vmatprep.mubr.f32.mxu0 0.0
        %2264 = vmatmul.mubr.f32.gmra.mrb[0].mxu0 %v1962
        %v2265 = vpop.f32.mrb[0].mxu0
        %v2266 = vadd.f32 %v351, %v2265
        %v2267 = vpop.f32.mrb[0].mxu0
        %2268 = vmatprep.mubr.f32.mxu0 0.0
        %2269 = vmatmul.mubr.f32.gmra.mrb[0].mxu0 %v1965
        %v2270 = vpop.f32.mrb[0].mxu0
        %v2271 = vadd.f32 %v351, %v2270
        %v2272 = vpop.f32.mrb[0].mxu0
        %2273 = vmatprep.mubr.f32.mxu0 0.0
        %2274 = vmatmul.mubr.f32.gmra.mrb[0].mxu0 %v1968
        %v2275 = vpop.f32.mrb[0].mxu0
        %v2276 = vadd.f32 %v351, %v2275
        %v2277 = vpop.f32.mrb[0].mxu0
        %2278 = vmatprep.mubr.f32.mxu0 0.0
        %2279 = vmatmul.mubr.f32.gmra.mrb[0].mxu0 %v1971
        %v2280 = vpop.f32.mrb[0].mxu0
        %v2281 = vadd.f32 %v351, %v2280
        %v2282 = vpop.f32.mrb[0].mxu0
        %2283 = vmatprep.mubr.f32.mxu0 0.0
        %2284 = vmatmul.mubr.f32.gmra.mrb[0].mxu0 %v1974
        %v2285 = vpop.f32.mrb[0].mxu0
        %v2286 = vadd.f32 %v351, %v2285
        %v2287 = vpop.f32.mrb[0].mxu0
        %2288 = vmatprep.mubr.f32.mxu0 0.0
        %2289 = vmatmul.mubr.f32.gmra.mrb[0].mxu0 %v1977
        %v2290 = vpop.f32.mrb[0].mxu0
        %v2291 = vadd.f32 %v351, %v2290
        %v2292 = vpop.f32.mrb[0].mxu0
        %2293 = vmatprep.mubr.f32.mxu0 0.0
        %2294 = vmatmul.mubr.f32.gmra.mrb[0].mxu0 %v1980
        %v2295 = vpop.f32.mrb[0].mxu0
        %v2296 = vadd.f32 %v351, %v2295
        %v2297 = vpop.f32.mrb[0].mxu0
        %2298 = vmatprep.mubr.f32.mxu0 0.0
        %2299 = vmatmul.mubr.f32.gmra.mrb[0].mxu0 %v1983
        %v2300 = vpop.f32.mrb[0].mxu0
        %v2301 = vadd.f32 %v351, %v2300
        %v2302 = vpop.f32.mrb[0].mxu0
        %2303 = vmatprep.mubr.f32.mxu0 0.0
        %2304 = vmatmul.mubr.f32.gmra.mrb[0].mxu0 %v1986
        %v2305 = vpop.f32.mrb[0].mxu0
        %v2306 = vadd.f32 %v351, %v2305
        %v2307 = vpop.f32.mrb[0].mxu0
        %2308 = vmatprep.mubr.f32.mxu0 0.0
        %2309 = vmatmul.mubr.f32.gmra.mrb[0].mxu0 %v1989
        %v2310 = vpop.f32.mrb[0].mxu0
        %v2311 = vadd.f32 %v351, %v2310
        %v2312 = vpop.f32.mrb[0].mxu0
        %2313 = vmatprep.mubr.f32.mxu0 0.0
        %2314 = vmatmul.mubr.f32.gmra.mrb[0].mxu0 %v1992
        %v2315 = vpop.f32.mrb[0].mxu0
        %v2316 = vadd.f32 %v351, %v2315
        %v2317 = vpop.f32.mrb[0].mxu0
        %2318 = vmatprep.mubr.f32.mxu0 0.0
        %2319 = vmatmul.mubr.f32.gmra.mrb[0].mxu0 %v1995
        %v2320 = vpop.f32.mrb[0].mxu0
        %v2321 = vadd.f32 %v351, %v2320
        %v2322 = vpop.f32.mrb[0].mxu0
        %2323 = vmatprep.mubr.f32.mxu0 0.0
        %2324 = vmatmul.mubr.f32.gmra.mrb[0].mxu0 %v1998
        %v2325 = vpop.f32.mrb[0].mxu0
        %v2326 = vadd.f32 %v351, %v2325
        %v2327 = vpop.f32.mrb[0].mxu0
        %2328 = vmatprep.mubr.f32.mxu0 0.0
        %2329 = vmatmul.mubr.f32.gmra.mrb[0].mxu0 %v2001
        %v2330 = vpop.f32.mrb[0].mxu0
        %v2331 = vadd.f32 %v351, %v2330
        %v2332 = vpop.f32.mrb[0].mxu0
        %2333 = vmatprep.mubr.f32.mxu0 0.0
        %2334 = vmatmul.mubr.f32.gmra.mrb[0].mxu0 %v2004
        %v2335 = vpop.f32.mrb[0].mxu0
        %v2336 = vadd.f32 %v351, %v2335
        %v2337 = vpop.f32.mrb[0].mxu0
        %2338 = vmatprep.mubr.f32.mxu0 0.0
        %2339 = vmatmul.mubr.f32.gmra.mrb[0].mxu0 %v2007
        %v2340 = vpop.f32.mrb[0].mxu0
        %v2341 = vadd.f32 %v351, %v2340
        %v2342 = vpop.f32.mrb[0].mxu0
        %2343 = vmatprep.mubr.f32.mxu0 0.0
        %2344 = vmatmul.mubr.f32.gmra.mrb[0].mxu0 %v2010
        %v2345 = vpop.f32.mrb[0].mxu0
        %v2346 = vadd.f32 %v351, %v2345
        %v2347 = vpop.f32.mrb[0].mxu0
        %2348 = vmatprep.mubr.f32.mxu0 0.0
        %2349 = vmatmul.mubr.f32.gmra.mrb[0].mxu0 %v2013
        %v2350 = vpop.f32.mrb[0].mxu0
        %v2351 = vadd.f32 %v351, %v2350
        %v2352 = vpop.f32.mrb[0].mxu0
        %2353 = vmatprep.mubr.f32.mxu0 0.0
        %2354 = vmatmul.mubr.f32.gmra.mrb[0].mxu0 %v2016
        %v2355 = vpop.f32.mrb[0].mxu0
        %v2356 = vadd.f32 %v351, %v2355
        %v2357 = vpop.f32.mrb[0].mxu0
        %2358 = vmatprep.mubr.f32.mxu0 0.0
        %2359 = vmatmul.mubr.f32.gmra.mrb[0].mxu0 %v2019
        %v2360 = vpop.f32.mrb[0].mxu0
        %v2361 = vadd.f32 %v351, %v2360
        %v2362 = vpop.f32.mrb[0].mxu0
        %2363 = vmatprep.mubr.f32.mxu0 0.0
        %2364 = vmatmul.mubr.f32.gmra.mrb[0].mxu0 %v2022
        %v2365 = vpop.f32.mrb[0].mxu0
        %v2366 = vadd.f32 %v351, %v2365
        %v2367 = vpop.f32.mrb[0].mxu0
        %2368 = vmatprep.mubr.f32.mxu0 0.0
        %2369 = vmatmul.mubr.f32.gmra.mrb[0].mxu0 %v2025
        %v2370 = vpop.f32.mrb[0].mxu0
        %v2371 = vadd.f32 %v351, %v2370
        %v2372 = vpop.f32.mrb[0].mxu0
        %2373 = vmatprep.mubr.f32.mxu0 0.0
        %2374 = vmatmul.mubr.f32.gmra.mrb[0].mxu0 %v2028
        %v2375 = vpop.f32.mrb[0].mxu0
        %v2376 = vadd.f32 %v351, %v2375
        %v2377 = vpop.f32.mrb[0].mxu0
        %2378 = vmatprep.mubr.f32.mxu0 0.0
        %2379 = vmatmul.mubr.f32.gmra.mrb[0].mxu0 %v2031
        %v2380 = vpop.f32.mrb[0].mxu0
        %v2381 = vadd.f32 %v351, %v2380
        %v2382 = vpop.f32.mrb[0].mxu0
        %2383 = vmatprep.mubr.f32.mxu0 0.0
        %2384 = vmatmul.mubr.f32.gmra.mrb[0].mxu0 %v2034
        %v2385 = vpop.f32.mrb[0].mxu0
        %v2386 = vadd.f32 %v351, %v2385
        %v2387 = vpop.f32.mrb[0].mxu0
        %2388 = vmatprep.mubr.f32.mxu0 0.0
        %2389 = vmatmul.mubr.f32.gmra.mrb[0].mxu0 %v2037
        %v2390 = vpop.f32.mrb[0].mxu0
        %v2391 = vadd.f32 %v351, %v2390
        %v2392 = vpop.f32.mrb[0].mxu0
        %2393 = vmatprep.mubr.f32.mxu0 0.0
        %2394 = vmatmul.mubr.f32.gmra.mrb[0].mxu0 %v2040
        %v2395 = vpop.f32.mrb[0].mxu0
        %v2396 = vadd.f32 %v351, %v2395
        %v2397 = vpop.f32.mrb[0].mxu0
        %2398 = vmatprep.mubr.f32.mxu0 0.0
        %2399 = vmatmul.mubr.f32.gmra.mrb[0].mxu0 %v2043
        %v2400 = vpop.f32.mrb[0].mxu0
        %v2401 = vadd.f32 %v351, %v2400
        %v2402 = vpop.f32.mrb[0].mxu0
        %2403 = vmatprep.mubr.f32.mxu0 0.0
        %2404 = vmatmul.mubr.f32.gmra.mrb[0].mxu0 %v2046
        %v2405 = vpop.f32.mrb[0].mxu0
        %v2406 = vadd.f32 %v351, %v2405
        %v2407 = vpop.f32.mrb[0].mxu0
        %2408 = vmatprep.mubr.f32.mxu0 0.0
        %2409 = vmatmul.mubr.f32.gmra.mrb[0].mxu0 %v2049
        %v2410 = vpop.f32.mrb[0].mxu0
        %v2411 = vadd.f32 %v351, %v2410
        %v2412 = vpop.f32.mrb[0].mxu0
        %2413 = vmatprep.mubr.f32.mxu0 0.0
        %2414 = vmatmul.mubr.f32.gmra.mrb[0].mxu0 %v2052
        %v2415 = vpop.f32.mrb[0].mxu0
        %v2416 = vadd.f32 %v351, %v2415
        %v2417 = vpop.f32.mrb[0].mxu0
        %2418 = vmatprep.mubr.f32.mxu0 0.0
        %2419 = vmatmul.mubr.f32.gmra.mrb[0].mxu0 %v2055
        %v2420 = vpop.f32.mrb[0].mxu0
        %v2421 = vadd.f32 %v351, %v2420
        %v2422 = vpop.f32.mrb[0].mxu0
        %2423 = vmatprep.mubr.f32.mxu0 0.0
        %2424 = vmatmul.mubr.f32.gmra.mrb[0].mxu0 %v2058
        %v2425 = vpop.f32.mrb[0].mxu0
        %v2426 = vadd.f32 %v351, %v2425
        %v2427 = vpop.f32.mrb[0].mxu0
        %2428 = vmatprep.mubr.f32.mxu0 0.0
        %2429 = vmatmul.mubr.f32.gmra.mrb[0].mxu0 %v2061
        %v2430 = vpop.f32.mrb[0].mxu0
        %v2431 = vadd.f32 %v351, %v2430
        %v2432 = vpop.f32.mrb[0].mxu0
        %2433 = vmatprep.mubr.f32.mxu0 0.0
        %2434 = vmatmul.mubr.f32.gmra.mrb[0].mxu0 %v2064
        %v2435 = vpop.f32.mrb[0].mxu0
        %v2436 = vadd.f32 %v351, %v2435
        %v2437 = vpop.f32.mrb[0].mxu0
        %2438 = vmatprep.mubr.f32.mxu0 0.0
        %2439 = vmatmul.mubr.f32.gmra.mrb[0].mxu0 %v2067
        %v2440 = vpop.f32.mrb[0].mxu0
        %v2441 = vadd.f32 %v351, %v2440
        %v2442 = vpop.f32.mrb[0].mxu0
        %2443 = vmatprep.mubr.f32.mxu0 0.0
        %2444 = vmatmul.mubr.f32.gmra.mrb[0].mxu0 %v2070
        %v2445 = vpop.f32.mrb[0].mxu0
        %v2446 = vadd.f32 %v351, %v2445
        %v2447 = vpop.f32.mrb[0].mxu0
        %2448 = vmatprep.mubr.f32.mxu0 0.0
        %2449 = vmatmul.mubr.f32.gmra.mrb[0].mxu0 %v2073
        %v2450 = vpop.f32.mrb[0].mxu0
        %v2451 = vadd.f32 %v351, %v2450
        %v2452 = vpop.f32.mrb[0].mxu0
        %2453 = vmatprep.mubr.f32.mxu0 0.0
        %2454 = vmatmul.mubr.f32.gmra.mrb[0].mxu0 %v2076
        %v2455 = vpop.f32.mrb[0].mxu0
        %v2456 = vadd.f32 %v351, %v2455
        %v2457 = vpop.f32.mrb[0].mxu0
        %2458 = vmatprep.mubr.f32.mxu0 0.0
        %2459 = vmatmul.mubr.f32.gmra.mrb[0].mxu0 %v2079
        %v2460 = vpop.f32.mrb[0].mxu0
        %v2461 = vadd.f32 %v351, %v2460
        %v2462 = vpop.f32.mrb[0].mxu0
        %2463 = vmatprep.mubr.f32.mxu0 0.0
        %2464 = vmatmul.mubr.f32.gmra.mrb[0].mxu0 %v2082
        %v2465 = vpop.f32.mrb[0].mxu0
        %v2466 = vadd.f32 %v351, %v2465
        %v2467 = vpop.f32.mrb[0].mxu0
        %2468 = vdwg.mxu0
        %v2469 = vmax.f32 %v2151, 0.0
        %v2470 = vmax.f32 %v2156, 0.0
        %v2471 = vmax.f32 %v2161, 0.0
        %v2472 = vmax.f32 %v2166, 0.0
        %v2473 = vmax.f32 %v2171, 0.0
        %v2474 = vmax.f32 %v2176, 0.0
        %v2475 = vmax.f32 %v2181, 0.0
        %v2476 = vmax.f32 %v2186, 0.0
        %v2477 = vmax.f32 %v2191, 0.0
        %v2478 = vmax.f32 %v2196, 0.0
        %v2479 = vmax.f32 %v2201, 0.0
        %v2480 = vmax.f32 %v2206, 0.0
        %v2481 = vmax.f32 %v2211, 0.0
        %v2482 = vmax.f32 %v2216, 0.0
        %v2483 = vmax.f32 %v2221, 0.0
        %v2484 = vmax.f32 %v2226, 0.0
        %v2485 = vmax.f32 %v2231, 0.0
        %v2486 = vmax.f32 %v2236, 0.0
        %v2487 = vmax.f32 %v2241, 0.0
        %v2488 = vmax.f32 %v2246, 0.0
        %v2489 = vmax.f32 %v2251, 0.0
        %v2490 = vmax.f32 %v2256, 0.0
        %v2491 = vmax.f32 %v2261, 0.0
        %v2492 = vmax.f32 %v2266, 0.0
        %v2493 = vmax.f32 %v2271, 0.0
        %v2494 = vmax.f32 %v2276, 0.0
        %v2495 = vmax.f32 %v2281, 0.0
        %v2496 = vmax.f32 %v2286, 0.0
        %v2497 = vmax.f32 %v2291, 0.0
        %v2498 = vmax.f32 %v2296, 0.0
        %v2499 = vmax.f32 %v2301, 0.0
        %v2500 = vmax.f32 %v2306, 0.0
        %v2501 = vmax.f32 %v2311, 0.0
        %v2502 = vmax.f32 %v2316, 0.0
        %v2503 = vmax.f32 %v2321, 0.0
        %v2504 = vmax.f32 %v2326, 0.0
        %v2505 = vmax.f32 %v2331, 0.0
        %v2506 = vmax.f32 %v2336, 0.0
        %v2507 = vmax.f32 %v2341, 0.0
        %v2508 = vmax.f32 %v2346, 0.0
        %v2509 = vmax.f32 %v2351, 0.0
        %v2510 = vmax.f32 %v2356, 0.0
        %v2511 = vmax.f32 %v2361, 0.0
        %v2512 = vmax.f32 %v2366, 0.0
        %v2513 = vmax.f32 %v2371, 0.0
        %v2514 = vmax.f32 %v2376, 0.0
        %v2515 = vmax.f32 %v2381, 0.0
        %v2516 = vmax.f32 %v2386, 0.0
        %v2517 = vmax.f32 %v2391, 0.0
        %v2518 = vmax.f32 %v2396, 0.0
        %v2519 = vmax.f32 %v2401, 0.0
        %v2520 = vmax.f32 %v2406, 0.0
        %v2521 = vmax.f32 %v2411, 0.0
        %v2522 = vmax.f32 %v2416, 0.0
        %v2523 = vmax.f32 %v2421, 0.0
        %v2524 = vmax.f32 %v2426, 0.0
        %v2525 = vmax.f32 %v2431, 0.0
        %v2526 = vmax.f32 %v2436, 0.0
        %v2527 = vmax.f32 %v2441, 0.0
        %v2528 = vmax.f32 %v2446, 0.0
        %v2529 = vmax.f32 %v2451, 0.0
        %v2530 = vmax.f32 %v2456, 0.0
        %v2531 = vmax.f32 %v2461, 0.0
        %v2532 = vmax.f32 %v2466, 0.0
        %v2533 = vmax.f32 %v2469, %v2477
        %v2534 = vmax.f32 %v2470, %v2478
        %v2535 = vmax.f32 %v2471, %v2479
        %v2536 = vmax.f32 %v2472, %v2480
        %v2537 = vmax.f32 %v2473, %v2481
        %v2538 = vmax.f32 %v2474, %v2482
        %v2539 = vmax.f32 %v2475, %v2483
        %v2540 = vmax.f32 %v2476, %v2484
        %v2541 = vmax.f32 %v2533, %v2485
        %v2542 = vmax.f32 %v2534, %v2486
        %v2543 = vmax.f32 %v2535, %v2487
        %v2544 = vmax.f32 %v2536, %v2488
        %v2545 = vmax.f32 %v2537, %v2489
        %v2546 = vmax.f32 %v2538, %v2490
        %v2547 = vmax.f32 %v2539, %v2491
        %v2548 = vmax.f32 %v2540, %v2492
        %v2549 = vmax.f32 %v2541, %v2493
        %v2550 = vmax.f32 %v2542, %v2494
        %v2551 = vmax.f32 %v2543, %v2495
        %v2552 = vmax.f32 %v2544, %v2496
        %v2553 = vmax.f32 %v2545, %v2497
        %v2554 = vmax.f32 %v2546, %v2498
        %v2555 = vmax.f32 %v2547, %v2499
        %v2556 = vmax.f32 %v2548, %v2500
        %v2557 = vmax.f32 %v2549, %v2501
        %v2558 = vmax.f32 %v2550, %v2502
        %v2559 = vmax.f32 %v2551, %v2503
        %v2560 = vmax.f32 %v2552, %v2504
        %v2561 = vmax.f32 %v2553, %v2505
        %v2562 = vmax.f32 %v2554, %v2506
        %v2563 = vmax.f32 %v2555, %v2507
        %v2564 = vmax.f32 %v2556, %v2508
        %v2565 = vmax.f32 %v2557, %v2509
        %v2566 = vmax.f32 %v2558, %v2510
        %v2567 = vmax.f32 %v2559, %v2511
        %v2568 = vmax.f32 %v2560, %v2512
        %v2569 = vmax.f32 %v2561, %v2513
        %v2570 = vmax.f32 %v2562, %v2514
        %v2571 = vmax.f32 %v2563, %v2515
        %v2572 = vmax.f32 %v2564, %v2516
        %v2573 = vmax.f32 %v2565, %v2517
        %v2574 = vmax.f32 %v2566, %v2518
        %v2575 = vmax.f32 %v2567, %v2519
        %v2576 = vmax.f32 %v2568, %v2520
        %v2577 = vmax.f32 %v2569, %v2521
        %v2578 = vmax.f32 %v2570, %v2522
        %v2579 = vmax.f32 %v2571, %v2523
        %v2580 = vmax.f32 %v2572, %v2524
        %v2581 = vmax.f32 %v2573, %v2525
        %v2582 = vmax.f32 %v2574, %v2526
        %v2583 = vmax.f32 %v2575, %v2527
        %v2584 = vmax.f32 %v2576, %v2528
        %v2585 = vmax.f32 %v2577, %v2529
        %v2586 = vmax.f32 %v2578, %v2530
        %v2587 = vmax.f32 %v2579, %v2531
        %v2588 = vmax.f32 %v2580, %v2532
        %v2589 = vmax.f32 %v2581, %v2582
        %v2590 = vmax.f32 %v2589, %v2583
        %v2591 = vmax.f32 %v2590, %v2584
        %v2592 = vmax.f32 %v2591, %v2585
        %v2593 = vmax.f32 %v2592, %v2586
        %v2594 = vmax.f32 %v2593, %v2587
        %v2595 = vmax.f32 %v2594, %v2588
        %s2596 = scalar_lea.vmem %s275, 1536
        %v2597 = vld [vmem:[%s2596] sm:$0xff]
        %v2598 = vld [vmem:[%s2596 + $0x8] sm:$0xff]
        %v2599 = vld [vmem:[%s2596 + $0x10] sm:$0xff]
        %v2600 = vld [vmem:[%s2596 + $0x18] sm:$0xff]
        %v2601 = vld [vmem:[%s2596 + $0x20] sm:$0xff]
        %v2602 = vld [vmem:[%s2596 + $0x28] sm:$0xff]
        %v2603 = vld [vmem:[%s2596 + $0x30] sm:$0xff]
        %v2604 = vld [vmem:[%s2596 + $0x38] sm:$0xff]
        %v2605 = vld [vmem:[%s2596 + $0x40] sm:$0xff]
        %v2606 = vld [vmem:[%s2596 + $0x48] sm:$0xff]
        %v2607 = vld [vmem:[%s2596 + $0x50] sm:$0xff]
        %v2608 = vld [vmem:[%s2596 + $0x58] sm:$0xff]
        %v2609 = vld [vmem:[%s2596 + $0x60] sm:$0xff]
        %v2610 = vld [vmem:[%s2596 + $0x68] sm:$0xff]
        %v2611 = vld [vmem:[%s2596 + $0x70] sm:$0xff]
        %v2612 = vld [vmem:[%s2596 + $0x78] sm:$0xff]
        %v2613 = vld [vmem:[%s2596 + $0x80] sm:$0xff]
        %v2614 = vld [vmem:[%s2596 + $0x88] sm:$0xff]
        %v2615 = vld [vmem:[%s2596 + $0x90] sm:$0xff]
        %v2616 = vld [vmem:[%s2596 + $0x98] sm:$0xff]
        %v2617 = vld [vmem:[%s2596 + $0xa0] sm:$0xff]
        %v2618 = vld [vmem:[%s2596 + $0xa8] sm:$0xff]
        %v2619 = vld [vmem:[%s2596 + $0xb0] sm:$0xff]
        %v2620 = vld [vmem:[%s2596 + $0xb8] sm:$0xff]
        %v2621 = vld [vmem:[%s2596 + $0xc0] sm:$0xff]
        %v2622 = vld [vmem:[%s2596 + $0xc8] sm:$0xff]
        %v2623 = vld [vmem:[%s2596 + $0xd0] sm:$0xff]
        %v2624 = vld [vmem:[%s2596 + $0xd8] sm:$0xff]
        %v2625 = vld [vmem:[%s2596 + $0xe0] sm:$0xff]
        %v2626 = vld [vmem:[%s2596 + $0xe8] sm:$0xff]
        %v2627 = vld [vmem:[%s2596 + $0xf0] sm:$0xff]
        %v2628 = vld [vmem:[%s2596 + $0xf8] sm:$0xff]
        %v2629 = vld [vmem:[%s2596 + $0x100] sm:$0xff]
        %v2630 = vld [vmem:[%s2596 + $0x108] sm:$0xff]
        %v2631 = vld [vmem:[%s2596 + $0x110] sm:$0xff]
        %v2632 = vld [vmem:[%s2596 + $0x118] sm:$0xff]
        %v2633 = vld [vmem:[%s2596 + $0x120] sm:$0xff]
        %v2634 = vld [vmem:[%s2596 + $0x128] sm:$0xff]
        %v2635 = vld [vmem:[%s2596 + $0x130] sm:$0xff]
        %v2636 = vld [vmem:[%s2596 + $0x138] sm:$0xff]
        %v2637 = vld [vmem:[%s2596 + $0x140] sm:$0xff]
        %v2638 = vld [vmem:[%s2596 + $0x148] sm:$0xff]
        %v2639 = vld [vmem:[%s2596 + $0x150] sm:$0xff]
        %v2640 = vld [vmem:[%s2596 + $0x158] sm:$0xff]
        %v2641 = vld [vmem:[%s2596 + $0x160] sm:$0xff]
        %v2642 = vld [vmem:[%s2596 + $0x168] sm:$0xff]
        %v2643 = vld [vmem:[%s2596 + $0x170] sm:$0xff]
        %v2644 = vld [vmem:[%s2596 + $0x178] sm:$0xff]
        %v2645 = vld [vmem:[%s2596 + $0x180] sm:$0xff]
        %v2646 = vld [vmem:[%s2596 + $0x188] sm:$0xff]
        %v2647 = vld [vmem:[%s2596 + $0x190] sm:$0xff]
        %v2648 = vld [vmem:[%s2596 + $0x198] sm:$0xff]
        %v2649 = vld [vmem:[%s2596 + $0x1a0] sm:$0xff]
        %v2650 = vld [vmem:[%s2596 + $0x1a8] sm:$0xff]
        %v2651 = vld [vmem:[%s2596 + $0x1b0] sm:$0xff]
        %v2652 = vld [vmem:[%s2596 + $0x1b8] sm:$0xff]
        %v2653 = vld [vmem:[%s2596 + $0x1c0] sm:$0xff]
        %v2654 = vld [vmem:[%s2596 + $0x1c8] sm:$0xff]
        %v2655 = vld [vmem:[%s2596 + $0x1d0] sm:$0xff]
        %v2656 = vld [vmem:[%s2596 + $0x1d8] sm:$0xff]
        %v2657 = vld [vmem:[%s2596 + $0x1e0] sm:$0xff]
        %v2658 = vld [vmem:[%s2596 + $0x1e8] sm:$0xff]
        %v2659 = vld [vmem:[%s2596 + $0x1f0] sm:$0xff]
        %v2660 = vld [vmem:[%s2596 + $0x1f8] sm:$0xff]
        %v2662 = vsel %vm353, %v2597, 0
        %v2665 = vsel %vm353, %v2598, 0
        %v2668 = vsel %vm353, %v2599, 0
        %v2671 = vsel %vm353, %v2600, 0
        %v2674 = vsel %vm353, %v2601, 0
        %v2677 = vsel %vm353, %v2602, 0
        %v2680 = vsel %vm353, %v2603, 0
        %v2683 = vsel %vm353, %v2604, 0
        %v2686 = vsel %vm353, %v2605, 0
        %v2689 = vsel %vm353, %v2606, 0
        %v2692 = vsel %vm353, %v2607, 0
        %v2695 = vsel %vm353, %v2608, 0
        %v2698 = vsel %vm353, %v2609, 0
        %v2701 = vsel %vm353, %v2610, 0
        %v2704 = vsel %vm353, %v2611, 0
        %v2707 = vsel %vm353, %v2612, 0
        %v2710 = vsel %vm353, %v2613, 0
        %v2713 = vsel %vm353, %v2614, 0
        %v2716 = vsel %vm353, %v2615, 0
        %v2719 = vsel %vm353, %v2616, 0
        %v2722 = vsel %vm353, %v2617, 0
        %v2725 = vsel %vm353, %v2618, 0
        %v2728 = vsel %vm353, %v2619, 0
        %v2731 = vsel %vm353, %v2620, 0
        %v2734 = vsel %vm353, %v2621, 0
        %v2737 = vsel %vm353, %v2622, 0
        %v2740 = vsel %vm353, %v2623, 0
        %v2743 = vsel %vm353, %v2624, 0
        %v2746 = vsel %vm353, %v2625, 0
        %v2749 = vsel %vm353, %v2626, 0
        %v2752 = vsel %vm353, %v2627, 0
        %v2755 = vsel %vm353, %v2628, 0
        %v2758 = vsel %vm353, %v2629, 0
        %v2761 = vsel %vm353, %v2630, 0
        %v2764 = vsel %vm353, %v2631, 0
        %v2767 = vsel %vm353, %v2632, 0
        %v2770 = vsel %vm353, %v2633, 0
        %v2773 = vsel %vm353, %v2634, 0
        %v2776 = vsel %vm353, %v2635, 0
        %v2779 = vsel %vm353, %v2636, 0
        %v2782 = vsel %vm353, %v2637, 0
        %v2785 = vsel %vm353, %v2638, 0
        %v2788 = vsel %vm353, %v2639, 0
        %v2791 = vsel %vm353, %v2640, 0
        %v2794 = vsel %vm353, %v2641, 0
        %v2797 = vsel %vm353, %v2642, 0
        %v2800 = vsel %vm353, %v2643, 0
        %v2803 = vsel %vm353, %v2644, 0
        %v2806 = vsel %vm353, %v2645, 0
        %v2809 = vsel %vm353, %v2646, 0
        %v2812 = vsel %vm353, %v2647, 0
        %v2815 = vsel %vm353, %v2648, 0
        %v2818 = vsel %vm353, %v2649, 0
        %v2821 = vsel %vm353, %v2650, 0
        %v2824 = vsel %vm353, %v2651, 0
        %v2827 = vsel %vm353, %v2652, 0
        %v2830 = vsel %vm353, %v2653, 0
        %v2833 = vsel %vm353, %v2654, 0
        %v2836 = vsel %vm353, %v2655, 0
        %v2839 = vsel %vm353, %v2656, 0
        %v2842 = vsel %vm353, %v2657, 0
        %v2845 = vsel %vm353, %v2658, 0
        %v2848 = vsel %vm353, %v2659, 0
        %v2851 = vsel %vm353, %v2660, 0
        %2853 = vmatprep.subr.mxu0 0.0
        %2854 = vmatpush1.msra.mxu0 %v340
        %2855 = vmatprep.subr.mxu0 0.0
        %2856 = vmatpush1.msra.mxu0 %v341
        %2857 = vmatprep.subr.mxu0 0.0
        %2858 = vmatpush1.msra.mxu0 %v342
        %2859 = vmatprep.subr.mxu0 0.0
        %2860 = vmatpush1.msra.mxu0 %v343
        %2861 = vmatprep.subr.mxu0 0.0
        %2862 = vmatpush1.msra.mxu0 %v344
        %2863 = vmatprep.subr.mxu0 0.0
        %2864 = vmatpush1.msra.mxu0 %v345
        %2865 = vmatprep.subr.mxu0 0.0
        %2866 = vmatpush1.msra.mxu0 0.0
        %2867 = vmatprep.subr.mxu0 0.0
        %2868 = vmatpush1.msra.mxu0 0.0
        %2869 = vmatprep.subr.mxu0 0.0
        %2870 = vmatpush1.msra.mxu0 0.0
        %2871 = vmatprep.subr.mxu0 0.0
        %2872 = vmatpush1.msra.mxu0 0.0
        %2873 = vmatprep.subr.mxu0 0.0
        %2874 = vmatpush1.msra.mxu0 0.0
        %2875 = vmatprep.subr.mxu0 0.0
        %2876 = vmatpush1.msra.mxu0 0.0
        %2877 = vmatprep.subr.mxu0 0.0
        %2878 = vmatpush1.msra.mxu0 0.0
        %2879 = vmatprep.subr.mxu0 0.0
        %2880 = vmatpush1.msra.mxu0 0.0
        %2881 = vmatprep.subr.mxu0 0.0
        %2882 = vmatpush1.msra.mxu0 0.0
        %2883 = vmatprep.subr.mxu0 0.0
        %2884 = vmatpush1.msra.mxu0 0.0
        %2885 = vmatprep.subr.mxu0 0.0
        %2886 = vmatpush1.msra.mxu0 0.0
        %2887 = vmatprep.subr.mxu0 0.0
        %2888 = vmatpush1.msra.mxu0 0.0
        %2889 = vmatprep.subr.mxu0 0.0
        %2890 = vmatpush1.msra.mxu0 0.0
        %2891 = vmatprep.subr.mxu0 0.0
        %2892 = vmatpush1.msra.mxu0 0.0
        %2893 = vmatprep.subr.mxu0 0.0
        %2894 = vmatpush1.msra.mxu0 0.0
        %2895 = vmatprep.subr.mxu0 0.0
        %2896 = vmatpush1.msra.mxu0 0.0
        %2897 = vmatprep.subr.mxu0 0.0
        %2898 = vmatpush1.msra.mxu0 0.0
        %2899 = vmatprep.subr.mxu0 0.0
        %2900 = vmatpush1.msra.mxu0 0.0
        %2901 = vmatprep.subr.mxu0 0.0
        %2902 = vmatpush1.msra.mxu0 0.0
        %2903 = vmatprep.subr.mxu0 0.0
        %2904 = vmatpush1.msra.mxu0 0.0
        %2905 = vmatprep.subr.mxu0 0.0
        %2906 = vmatpush1.msra.mxu0 0.0
        %2907 = vmatprep.subr.mxu0 0.0
        %2908 = vmatpush1.msra.mxu0 0.0
        %2909 = vmatprep.subr.mxu0 0.0
        %2910 = vmatpush1.msra.mxu0 0.0
        %2911 = vmatprep.subr.mxu0 0.0
        %2912 = vmatpush1.msra.mxu0 0.0
        %2913 = vmatprep.subr.mxu0 0.0
        %2914 = vmatpush1.msra.mxu0 0.0
        %2915 = vmatprep.subr.mxu0 0.0
        %2916 = vmatpush1.msra.mxu0 0.0
        %2917 = vmatprep.mubr.f32.mxu0 0.0
        %2918 = vmatmul.mubr.f32.gmra.mrb[0].mxu0 %v2662
        %v2919 = vpop.f32.mrb[0].mxu0
        %v2920 = vadd.f32 %v351, %v2919
        %v2921 = vpop.f32.mrb[0].mxu0
        %2922 = vmatprep.mubr.f32.mxu0 0.0
        %2923 = vmatmul.mubr.f32.gmra.mrb[0].mxu0 %v2665
        %v2924 = vpop.f32.mrb[0].mxu0
        %v2925 = vadd.f32 %v351, %v2924
        %v2926 = vpop.f32.mrb[0].mxu0
        %2927 = vmatprep.mubr.f32.mxu0 0.0
        %2928 = vmatmul.mubr.f32.gmra.mrb[0].mxu0 %v2668
        %v2929 = vpop.f32.mrb[0].mxu0
        %v2930 = vadd.f32 %v351, %v2929
        %v2931 = vpop.f32.mrb[0].mxu0
        %2932 = vmatprep.mubr.f32.mxu0 0.0
        %2933 = vmatmul.mubr.f32.gmra.mrb[0].mxu0 %v2671
        %v2934 = vpop.f32.mrb[0].mxu0
        %v2935 = vadd.f32 %v351, %v2934
        %v2936 = vpop.f32.mrb[0].mxu0
        %2937 = vmatprep.mubr.f32.mxu0 0.0
        %2938 = vmatmul.mubr.f32.gmra.mrb[0].mxu0 %v2674
        %v2939 = vpop.f32.mrb[0].mxu0
        %v2940 = vadd.f32 %v351, %v2939
        %v2941 = vpop.f32.mrb[0].mxu0
        %2942 = vmatprep.mubr.f32.mxu0 0.0
        %2943 = vmatmul.mubr.f32.gmra.mrb[0].mxu0 %v2677
        %v2944 = vpop.f32.mrb[0].mxu0
        %v2945 = vadd.f32 %v351, %v2944
        %v2946 = vpop.f32.mrb[0].mxu0
        %2947 = vmatprep.mubr.f32.mxu0 0.0
        %2948 = vmatmul.mubr.f32.gmra.mrb[0].mxu0 %v2680
        %v2949 = vpop.f32.mrb[0].mxu0
        %v2950 = vadd.f32 %v351, %v2949
        %v2951 = vpop.f32.mrb[0].mxu0
        %2952 = vmatprep.mubr.f32.mxu0 0.0
        %2953 = vmatmul.mubr.f32.gmra.mrb[0].mxu0 %v2683
        %v2954 = vpop.f32.mrb[0].mxu0
        %v2955 = vadd.f32 %v351, %v2954
        %v2956 = vpop.f32.mrb[0].mxu0
        %2957 = vmatprep.mubr.f32.mxu0 0.0
        %2958 = vmatmul.mubr.f32.gmra.mrb[0].mxu0 %v2686
        %v2959 = vpop.f32.mrb[0].mxu0
        %v2960 = vadd.f32 %v351, %v2959
        %v2961 = vpop.f32.mrb[0].mxu0
        %2962 = vmatprep.mubr.f32.mxu0 0.0
        %2963 = vmatmul.mubr.f32.gmra.mrb[0].mxu0 %v2689
        %v2964 = vpop.f32.mrb[0].mxu0
        %v2965 = vadd.f32 %v351, %v2964
        %v2966 = vpop.f32.mrb[0].mxu0
        %2967 = vmatprep.mubr.f32.mxu0 0.0
        %2968 = vmatmul.mubr.f32.gmra.mrb[0].mxu0 %v2692
        %v2969 = vpop.f32.mrb[0].mxu0
        %v2970 = vadd.f32 %v351, %v2969
        %v2971 = vpop.f32.mrb[0].mxu0
        %2972 = vmatprep.mubr.f32.mxu0 0.0
        %2973 = vmatmul.mubr.f32.gmra.mrb[0].mxu0 %v2695
        %v2974 = vpop.f32.mrb[0].mxu0
        %v2975 = vadd.f32 %v351, %v2974
        %v2976 = vpop.f32.mrb[0].mxu0
        %2977 = vmatprep.mubr.f32.mxu0 0.0
        %2978 = vmatmul.mubr.f32.gmra.mrb[0].mxu0 %v2698
        %v2979 = vpop.f32.mrb[0].mxu0
        %v2980 = vadd.f32 %v351, %v2979
        %v2981 = vpop.f32.mrb[0].mxu0
        %2982 = vmatprep.mubr.f32.mxu0 0.0
        %2983 = vmatmul.mubr.f32.gmra.mrb[0].mxu0 %v2701
        %v2984 = vpop.f32.mrb[0].mxu0
        %v2985 = vadd.f32 %v351, %v2984
        %v2986 = vpop.f32.mrb[0].mxu0
        %2987 = vmatprep.mubr.f32.mxu0 0.0
        %2988 = vmatmul.mubr.f32.gmra.mrb[0].mxu0 %v2704
        %v2989 = vpop.f32.mrb[0].mxu0
        %v2990 = vadd.f32 %v351, %v2989
        %v2991 = vpop.f32.mrb[0].mxu0
        %2992 = vmatprep.mubr.f32.mxu0 0.0
        %2993 = vmatmul.mubr.f32.gmra.mrb[0].mxu0 %v2707
        %v2994 = vpop.f32.mrb[0].mxu0
        %v2995 = vadd.f32 %v351, %v2994
        %v2996 = vpop.f32.mrb[0].mxu0
        %2997 = vmatprep.mubr.f32.mxu0 0.0
        %2998 = vmatmul.mubr.f32.gmra.mrb[0].mxu0 %v2710
        %v2999 = vpop.f32.mrb[0].mxu0
        %v3000 = vadd.f32 %v351, %v2999
        %v3001 = vpop.f32.mrb[0].mxu0
        %3002 = vmatprep.mubr.f32.mxu0 0.0
        %3003 = vmatmul.mubr.f32.gmra.mrb[0].mxu0 %v2713
        %v3004 = vpop.f32.mrb[0].mxu0
        %v3005 = vadd.f32 %v351, %v3004
        %v3006 = vpop.f32.mrb[0].mxu0
        %3007 = vmatprep.mubr.f32.mxu0 0.0
        %3008 = vmatmul.mubr.f32.gmra.mrb[0].mxu0 %v2716
        %v3009 = vpop.f32.mrb[0].mxu0
        %v3010 = vadd.f32 %v351, %v3009
        %v3011 = vpop.f32.mrb[0].mxu0
        %3012 = vmatprep.mubr.f32.mxu0 0.0
        %3013 = vmatmul.mubr.f32.gmra.mrb[0].mxu0 %v2719
        %v3014 = vpop.f32.mrb[0].mxu0
        %v3015 = vadd.f32 %v351, %v3014
        %v3016 = vpop.f32.mrb[0].mxu0
        %3017 = vmatprep.mubr.f32.mxu0 0.0
        %3018 = vmatmul.mubr.f32.gmra.mrb[0].mxu0 %v2722
        %v3019 = vpop.f32.mrb[0].mxu0
        %v3020 = vadd.f32 %v351, %v3019
        %v3021 = vpop.f32.mrb[0].mxu0
        %3022 = vmatprep.mubr.f32.mxu0 0.0
        %3023 = vmatmul.mubr.f32.gmra.mrb[0].mxu0 %v2725
        %v3024 = vpop.f32.mrb[0].mxu0
        %v3025 = vadd.f32 %v351, %v3024
        %v3026 = vpop.f32.mrb[0].mxu0
        %3027 = vmatprep.mubr.f32.mxu0 0.0
        %3028 = vmatmul.mubr.f32.gmra.mrb[0].mxu0 %v2728
        %v3029 = vpop.f32.mrb[0].mxu0
        %v3030 = vadd.f32 %v351, %v3029
        %v3031 = vpop.f32.mrb[0].mxu0
        %3032 = vmatprep.mubr.f32.mxu0 0.0
        %3033 = vmatmul.mubr.f32.gmra.mrb[0].mxu0 %v2731
        %v3034 = vpop.f32.mrb[0].mxu0
        %v3035 = vadd.f32 %v351, %v3034
        %v3036 = vpop.f32.mrb[0].mxu0
        %3037 = vmatprep.mubr.f32.mxu0 0.0
        %3038 = vmatmul.mubr.f32.gmra.mrb[0].mxu0 %v2734
        %v3039 = vpop.f32.mrb[0].mxu0
        %v3040 = vadd.f32 %v351, %v3039
        %v3041 = vpop.f32.mrb[0].mxu0
        %3042 = vmatprep.mubr.f32.mxu0 0.0
        %3043 = vmatmul.mubr.f32.gmra.mrb[0].mxu0 %v2737
        %v3044 = vpop.f32.mrb[0].mxu0
        %v3045 = vadd.f32 %v351, %v3044
        %v3046 = vpop.f32.mrb[0].mxu0
        %3047 = vmatprep.mubr.f32.mxu0 0.0
        %3048 = vmatmul.mubr.f32.gmra.mrb[0].mxu0 %v2740
        %v3049 = vpop.f32.mrb[0].mxu0
        %v3050 = vadd.f32 %v351, %v3049
        %v3051 = vpop.f32.mrb[0].mxu0
        %3052 = vmatprep.mubr.f32.mxu0 0.0
        %3053 = vmatmul.mubr.f32.gmra.mrb[0].mxu0 %v2743
        %v3054 = vpop.f32.mrb[0].mxu0
        %v3055 = vadd.f32 %v351, %v3054
        %v3056 = vpop.f32.mrb[0].mxu0
        %3057 = vmatprep.mubr.f32.mxu0 0.0
        %3058 = vmatmul.mubr.f32.gmra.mrb[0].mxu0 %v2746
        %v3059 = vpop.f32.mrb[0].mxu0
        %v3060 = vadd.f32 %v351, %v3059
        %v3061 = vpop.f32.mrb[0].mxu0
        %3062 = vmatprep.mubr.f32.mxu0 0.0
        %3063 = vmatmul.mubr.f32.gmra.mrb[0].mxu0 %v2749
        %v3064 = vpop.f32.mrb[0].mxu0
        %v3065 = vadd.f32 %v351, %v3064
        %v3066 = vpop.f32.mrb[0].mxu0
        %3067 = vmatprep.mubr.f32.mxu0 0.0
        %3068 = vmatmul.mubr.f32.gmra.mrb[0].mxu0 %v2752
        %v3069 = vpop.f32.mrb[0].mxu0
        %v3070 = vadd.f32 %v351, %v3069
        %v3071 = vpop.f32.mrb[0].mxu0
        %3072 = vmatprep.mubr.f32.mxu0 0.0
        %3073 = vmatmul.mubr.f32.gmra.mrb[0].mxu0 %v2755
        %v3074 = vpop.f32.mrb[0].mxu0
        %v3075 = vadd.f32 %v351, %v3074
        %v3076 = vpop.f32.mrb[0].mxu0
        %3077 = vmatprep.mubr.f32.mxu0 0.0
        %3078 = vmatmul.mubr.f32.gmra.mrb[0].mxu0 %v2758
        %v3079 = vpop.f32.mrb[0].mxu0
        %v3080 = vadd.f32 %v351, %v3079
        %v3081 = vpop.f32.mrb[0].mxu0
        %3082 = vmatprep.mubr.f32.mxu0 0.0
        %3083 = vmatmul.mubr.f32.gmra.mrb[0].mxu0 %v2761
        %v3084 = vpop.f32.mrb[0].mxu0
        %v3085 = vadd.f32 %v351, %v3084
        %v3086 = vpop.f32.mrb[0].mxu0
        %3087 = vmatprep.mubr.f32.mxu0 0.0
        %3088 = vmatmul.mubr.f32.gmra.mrb[0].mxu0 %v2764
        %v3089 = vpop.f32.mrb[0].mxu0
        %v3090 = vadd.f32 %v351, %v3089
        %v3091 = vpop.f32.mrb[0].mxu0
        %3092 = vmatprep.mubr.f32.mxu0 0.0
        %3093 = vmatmul.mubr.f32.gmra.mrb[0].mxu0 %v2767
        %v3094 = vpop.f32.mrb[0].mxu0
        %v3095 = vadd.f32 %v351, %v3094
        %v3096 = vpop.f32.mrb[0].mxu0
        %3097 = vmatprep.mubr.f32.mxu0 0.0
        %3098 = vmatmul.mubr.f32.gmra.mrb[0].mxu0 %v2770
        %v3099 = vpop.f32.mrb[0].mxu0
        %v3100 = vadd.f32 %v351, %v3099
        %v3101 = vpop.f32.mrb[0].mxu0
        %3102 = vmatprep.mubr.f32.mxu0 0.0
        %3103 = vmatmul.mubr.f32.gmra.mrb[0].mxu0 %v2773
        %v3104 = vpop.f32.mrb[0].mxu0
        %v3105 = vadd.f32 %v351, %v3104
        %v3106 = vpop.f32.mrb[0].mxu0
        %3107 = vmatprep.mubr.f32.mxu0 0.0
        %3108 = vmatmul.mubr.f32.gmra.mrb[0].mxu0 %v2776
        %v3109 = vpop.f32.mrb[0].mxu0
        %v3110 = vadd.f32 %v351, %v3109
        %v3111 = vpop.f32.mrb[0].mxu0
        %3112 = vmatprep.mubr.f32.mxu0 0.0
        %3113 = vmatmul.mubr.f32.gmra.mrb[0].mxu0 %v2779
        %v3114 = vpop.f32.mrb[0].mxu0
        %v3115 = vadd.f32 %v351, %v3114
        %v3116 = vpop.f32.mrb[0].mxu0
        %3117 = vmatprep.mubr.f32.mxu0 0.0
        %3118 = vmatmul.mubr.f32.gmra.mrb[0].mxu0 %v2782
        %v3119 = vpop.f32.mrb[0].mxu0
        %v3120 = vadd.f32 %v351, %v3119
        %v3121 = vpop.f32.mrb[0].mxu0
        %3122 = vmatprep.mubr.f32.mxu0 0.0
        %3123 = vmatmul.mubr.f32.gmra.mrb[0].mxu0 %v2785
        %v3124 = vpop.f32.mrb[0].mxu0
        %v3125 = vadd.f32 %v351, %v3124
        %v3126 = vpop.f32.mrb[0].mxu0
        %3127 = vmatprep.mubr.f32.mxu0 0.0
        %3128 = vmatmul.mubr.f32.gmra.mrb[0].mxu0 %v2788
        %v3129 = vpop.f32.mrb[0].mxu0
        %v3130 = vadd.f32 %v351, %v3129
        %v3131 = vpop.f32.mrb[0].mxu0
        %3132 = vmatprep.mubr.f32.mxu0 0.0
        %3133 = vmatmul.mubr.f32.gmra.mrb[0].mxu0 %v2791
        %v3134 = vpop.f32.mrb[0].mxu0
        %v3135 = vadd.f32 %v351, %v3134
        %v3136 = vpop.f32.mrb[0].mxu0
        %3137 = vmatprep.mubr.f32.mxu0 0.0
        %3138 = vmatmul.mubr.f32.gmra.mrb[0].mxu0 %v2794
        %v3139 = vpop.f32.mrb[0].mxu0
        %v3140 = vadd.f32 %v351, %v3139
        %v3141 = vpop.f32.mrb[0].mxu0
        %3142 = vmatprep.mubr.f32.mxu0 0.0
        %3143 = vmatmul.mubr.f32.gmra.mrb[0].mxu0 %v2797
        %v3144 = vpop.f32.mrb[0].mxu0
        %v3145 = vadd.f32 %v351, %v3144
        %v3146 = vpop.f32.mrb[0].mxu0
        %3147 = vmatprep.mubr.f32.mxu0 0.0
        %3148 = vmatmul.mubr.f32.gmra.mrb[0].mxu0 %v2800
        %v3149 = vpop.f32.mrb[0].mxu0
        %v3150 = vadd.f32 %v351, %v3149
        %v3151 = vpop.f32.mrb[0].mxu0
        %3152 = vmatprep.mubr.f32.mxu0 0.0
        %3153 = vmatmul.mubr.f32.gmra.mrb[0].mxu0 %v2803
        %v3154 = vpop.f32.mrb[0].mxu0
        %v3155 = vadd.f32 %v351, %v3154
        %v3156 = vpop.f32.mrb[0].mxu0
        %3157 = vmatprep.mubr.f32.mxu0 0.0
        %3158 = vmatmul.mubr.f32.gmra.mrb[0].mxu0 %v2806
        %v3159 = vpop.f32.mrb[0].mxu0
        %v3160 = vadd.f32 %v351, %v3159
        %v3161 = vpop.f32.mrb[0].mxu0
        %3162 = vmatprep.mubr.f32.mxu0 0.0
        %3163 = vmatmul.mubr.f32.gmra.mrb[0].mxu0 %v2809
        %v3164 = vpop.f32.mrb[0].mxu0
        %v3165 = vadd.f32 %v351, %v3164
        %v3166 = vpop.f32.mrb[0].mxu0
        %3167 = vmatprep.mubr.f32.mxu0 0.0
        %3168 = vmatmul.mubr.f32.gmra.mrb[0].mxu0 %v2812
        %v3169 = vpop.f32.mrb[0].mxu0
        %v3170 = vadd.f32 %v351, %v3169
        %v3171 = vpop.f32.mrb[0].mxu0
        %3172 = vmatprep.mubr.f32.mxu0 0.0
        %3173 = vmatmul.mubr.f32.gmra.mrb[0].mxu0 %v2815
        %v3174 = vpop.f32.mrb[0].mxu0
        %v3175 = vadd.f32 %v351, %v3174
        %v3176 = vpop.f32.mrb[0].mxu0
        %3177 = vmatprep.mubr.f32.mxu0 0.0
        %3178 = vmatmul.mubr.f32.gmra.mrb[0].mxu0 %v2818
        %v3179 = vpop.f32.mrb[0].mxu0
        %v3180 = vadd.f32 %v351, %v3179
        %v3181 = vpop.f32.mrb[0].mxu0
        %3182 = vmatprep.mubr.f32.mxu0 0.0
        %3183 = vmatmul.mubr.f32.gmra.mrb[0].mxu0 %v2821
        %v3184 = vpop.f32.mrb[0].mxu0
        %v3185 = vadd.f32 %v351, %v3184
        %v3186 = vpop.f32.mrb[0].mxu0
        %3187 = vmatprep.mubr.f32.mxu0 0.0
        %3188 = vmatmul.mubr.f32.gmra.mrb[0].mxu0 %v2824
        %v3189 = vpop.f32.mrb[0].mxu0
        %v3190 = vadd.f32 %v351, %v3189
        %v3191 = vpop.f32.mrb[0].mxu0
        %3192 = vmatprep.mubr.f32.mxu0 0.0
        %3193 = vmatmul.mubr.f32.gmra.mrb[0].mxu0 %v2827
        %v3194 = vpop.f32.mrb[0].mxu0
        %v3195 = vadd.f32 %v351, %v3194
        %v3196 = vpop.f32.mrb[0].mxu0
        %3197 = vmatprep.mubr.f32.mxu0 0.0
        %3198 = vmatmul.mubr.f32.gmra.mrb[0].mxu0 %v2830
        %v3199 = vpop.f32.mrb[0].mxu0
        %v3200 = vadd.f32 %v351, %v3199
        %v3201 = vpop.f32.mrb[0].mxu0
        %3202 = vmatprep.mubr.f32.mxu0 0.0
        %3203 = vmatmul.mubr.f32.gmra.mrb[0].mxu0 %v2833
        %v3204 = vpop.f32.mrb[0].mxu0
        %v3205 = vadd.f32 %v351, %v3204
        %v3206 = vpop.f32.mrb[0].mxu0
        %3207 = vmatprep.mubr.f32.mxu0 0.0
        %3208 = vmatmul.mubr.f32.gmra.mrb[0].mxu0 %v2836
        %v3209 = vpop.f32.mrb[0].mxu0
        %v3210 = vadd.f32 %v351, %v3209
        %v3211 = vpop.f32.mrb[0].mxu0
        %3212 = vmatprep.mubr.f32.mxu0 0.0
        %3213 = vmatmul.mubr.f32.gmra.mrb[0].mxu0 %v2839
        %v3214 = vpop.f32.mrb[0].mxu0
        %v3215 = vadd.f32 %v351, %v3214
        %v3216 = vpop.f32.mrb[0].mxu0
        %3217 = vmatprep.mubr.f32.mxu0 0.0
        %3218 = vmatmul.mubr.f32.gmra.mrb[0].mxu0 %v2842
        %v3219 = vpop.f32.mrb[0].mxu0
        %v3220 = vadd.f32 %v351, %v3219
        %v3221 = vpop.f32.mrb[0].mxu0
        %3222 = vmatprep.mubr.f32.mxu0 0.0
        %3223 = vmatmul.mubr.f32.gmra.mrb[0].mxu0 %v2845
        %v3224 = vpop.f32.mrb[0].mxu0
        %v3225 = vadd.f32 %v351, %v3224
        %v3226 = vpop.f32.mrb[0].mxu0
        %3227 = vmatprep.mubr.f32.mxu0 0.0
        %3228 = vmatmul.mubr.f32.gmra.mrb[0].mxu0 %v2848
        %v3229 = vpop.f32.mrb[0].mxu0
        %v3230 = vadd.f32 %v351, %v3229
        %v3231 = vpop.f32.mrb[0].mxu0
        %3232 = vmatprep.mubr.f32.mxu0 0.0
        %3233 = vmatmul.mubr.f32.gmra.mrb[0].mxu0 %v2851
        %v3234 = vpop.f32.mrb[0].mxu0
        %v3235 = vadd.f32 %v351, %v3234
        %v3236 = vpop.f32.mrb[0].mxu0
        %3237 = vdwg.mxu0
        %v3238 = vmax.f32 %v2920, 0.0
        %v3239 = vmax.f32 %v2925, 0.0
        %v3240 = vmax.f32 %v2930, 0.0
        %v3241 = vmax.f32 %v2935, 0.0
        %v3242 = vmax.f32 %v2940, 0.0
        %v3243 = vmax.f32 %v2945, 0.0
        %v3244 = vmax.f32 %v2950, 0.0
        %v3245 = vmax.f32 %v2955, 0.0
        %v3246 = vmax.f32 %v2960, 0.0
        %v3247 = vmax.f32 %v2965, 0.0
        %v3248 = vmax.f32 %v2970, 0.0
        %v3249 = vmax.f32 %v2975, 0.0
        %v3250 = vmax.f32 %v2980, 0.0
        %v3251 = vmax.f32 %v2985, 0.0
        %v3252 = vmax.f32 %v2990, 0.0
        %v3253 = vmax.f32 %v2995, 0.0
        %v3254 = vmax.f32 %v3000, 0.0
        %v3255 = vmax.f32 %v3005, 0.0
        %v3256 = vmax.f32 %v3010, 0.0
        %v3257 = vmax.f32 %v3015, 0.0
        %v3258 = vmax.f32 %v3020, 0.0
        %v3259 = vmax.f32 %v3025, 0.0
        %v3260 = vmax.f32 %v3030, 0.0
        %v3261 = vmax.f32 %v3035, 0.0
        %v3262 = vmax.f32 %v3040, 0.0
        %v3263 = vmax.f32 %v3045, 0.0
        %v3264 = vmax.f32 %v3050, 0.0
        %v3265 = vmax.f32 %v3055, 0.0
        %v3266 = vmax.f32 %v3060, 0.0
        %v3267 = vmax.f32 %v3065, 0.0
        %v3268 = vmax.f32 %v3070, 0.0
        %v3269 = vmax.f32 %v3075, 0.0
        %v3270 = vmax.f32 %v3080, 0.0
        %v3271 = vmax.f32 %v3085, 0.0
        %v3272 = vmax.f32 %v3090, 0.0
        %v3273 = vmax.f32 %v3095, 0.0
        %v3274 = vmax.f32 %v3100, 0.0
        %v3275 = vmax.f32 %v3105, 0.0
        %v3276 = vmax.f32 %v3110, 0.0
        %v3277 = vmax.f32 %v3115, 0.0
        %v3278 = vmax.f32 %v3120, 0.0
        %v3279 = vmax.f32 %v3125, 0.0
        %v3280 = vmax.f32 %v3130, 0.0
        %v3281 = vmax.f32 %v3135, 0.0
        %v3282 = vmax.f32 %v3140, 0.0
        %v3283 = vmax.f32 %v3145, 0.0
        %v3284 = vmax.f32 %v3150, 0.0
        %v3285 = vmax.f32 %v3155, 0.0
        %v3286 = vmax.f32 %v3160, 0.0
        %v3287 = vmax.f32 %v3165, 0.0
        %v3288 = vmax.f32 %v3170, 0.0
        %v3289 = vmax.f32 %v3175, 0.0
        %v3290 = vmax.f32 %v3180, 0.0
        %v3291 = vmax.f32 %v3185, 0.0
        %v3292 = vmax.f32 %v3190, 0.0
        %v3293 = vmax.f32 %v3195, 0.0
        %v3294 = vmax.f32 %v3200, 0.0
        %v3295 = vmax.f32 %v3205, 0.0
        %v3296 = vmax.f32 %v3210, 0.0
        %v3297 = vmax.f32 %v3215, 0.0
        %v3298 = vmax.f32 %v3220, 0.0
        %v3299 = vmax.f32 %v3225, 0.0
        %v3300 = vmax.f32 %v3230, 0.0
        %v3301 = vmax.f32 %v3235, 0.0
        %v3302 = vmax.f32 %v3238, %v3246
        %v3303 = vmax.f32 %v3239, %v3247
        %v3304 = vmax.f32 %v3240, %v3248
        %v3305 = vmax.f32 %v3241, %v3249
        %v3306 = vmax.f32 %v3242, %v3250
        %v3307 = vmax.f32 %v3243, %v3251
        %v3308 = vmax.f32 %v3244, %v3252
        %v3309 = vmax.f32 %v3245, %v3253
        %v3310 = vmax.f32 %v3302, %v3254
        %v3311 = vmax.f32 %v3303, %v3255
        %v3312 = vmax.f32 %v3304, %v3256
        %v3313 = vmax.f32 %v3305, %v3257
        %v3314 = vmax.f32 %v3306, %v3258
        %v3315 = vmax.f32 %v3307, %v3259
        %v3316 = vmax.f32 %v3308, %v3260
        %v3317 = vmax.f32 %v3309, %v3261
        %v3318 = vmax.f32 %v3310, %v3262
        %v3319 = vmax.f32 %v3311, %v3263
        %v3320 = vmax.f32 %v3312, %v3264
        %v3321 = vmax.f32 %v3313, %v3265
        %v3322 = vmax.f32 %v3314, %v3266
        %v3323 = vmax.f32 %v3315, %v3267
        %v3324 = vmax.f32 %v3316, %v3268
        %v3325 = vmax.f32 %v3317, %v3269
        %v3326 = vmax.f32 %v3318, %v3270
        %v3327 = vmax.f32 %v3319, %v3271
        %v3328 = vmax.f32 %v3320, %v3272
        %v3329 = vmax.f32 %v3321, %v3273
        %v3330 = vmax.f32 %v3322, %v3274
        %v3331 = vmax.f32 %v3323, %v3275
        %v3332 = vmax.f32 %v3324, %v3276
        %v3333 = vmax.f32 %v3325, %v3277
        %v3334 = vmax.f32 %v3326, %v3278
        %v3335 = vmax.f32 %v3327, %v3279
        %v3336 = vmax.f32 %v3328, %v3280
        %v3337 = vmax.f32 %v3329, %v3281
        %v3338 = vmax.f32 %v3330, %v3282
        %v3339 = vmax.f32 %v3331, %v3283
        %v3340 = vmax.f32 %v3332, %v3284
        %v3341 = vmax.f32 %v3333, %v3285
        %v3342 = vmax.f32 %v3334, %v3286
        %v3343 = vmax.f32 %v3335, %v3287
        %v3344 = vmax.f32 %v3336, %v3288
        %v3345 = vmax.f32 %v3337, %v3289
        %v3346 = vmax.f32 %v3338, %v3290
        %v3347 = vmax.f32 %v3339, %v3291
        %v3348 = vmax.f32 %v3340, %v3292
        %v3349 = vmax.f32 %v3341, %v3293
        %v3350 = vmax.f32 %v3342, %v3294
        %v3351 = vmax.f32 %v3343, %v3295
        %v3352 = vmax.f32 %v3344, %v3296
        %v3353 = vmax.f32 %v3345, %v3297
        %v3354 = vmax.f32 %v3346, %v3298
        %v3355 = vmax.f32 %v3347, %v3299
        %v3356 = vmax.f32 %v3348, %v3300
        %v3357 = vmax.f32 %v3349, %v3301
        %v3358 = vmax.f32 %v3350, %v3351
        %v3359 = vmax.f32 %v3358, %v3352
        %v3360 = vmax.f32 %v3359, %v3353
        %v3361 = vmax.f32 %v3360, %v3354
        %v3362 = vmax.f32 %v3361, %v3355
        %v3363 = vmax.f32 %v3362, %v3356
        %v3364 = vmax.f32 %v3363, %v3357
        %s3365 = scalar_lea.vmem %s275, 2048
        %v3366 = vld [vmem:[%s3365] sm:$0xff]
        %v3367 = vld [vmem:[%s3365 + $0x8] sm:$0xff]
        %v3368 = vld [vmem:[%s3365 + $0x10] sm:$0xff]
        %v3369 = vld [vmem:[%s3365 + $0x18] sm:$0xff]
        %v3370 = vld [vmem:[%s3365 + $0x20] sm:$0xff]
        %v3371 = vld [vmem:[%s3365 + $0x28] sm:$0xff]
        %v3372 = vld [vmem:[%s3365 + $0x30] sm:$0xff]
        %v3373 = vld [vmem:[%s3365 + $0x38] sm:$0xff]
        %v3374 = vld [vmem:[%s3365 + $0x40] sm:$0xff]
        %v3375 = vld [vmem:[%s3365 + $0x48] sm:$0xff]
        %v3376 = vld [vmem:[%s3365 + $0x50] sm:$0xff]
        %v3377 = vld [vmem:[%s3365 + $0x58] sm:$0xff]
        %v3378 = vld [vmem:[%s3365 + $0x60] sm:$0xff]
        %v3379 = vld [vmem:[%s3365 + $0x68] sm:$0xff]
        %v3380 = vld [vmem:[%s3365 + $0x70] sm:$0xff]
        %v3381 = vld [vmem:[%s3365 + $0x78] sm:$0xff]
        %v3382 = vld [vmem:[%s3365 + $0x80] sm:$0xff]
        %v3383 = vld [vmem:[%s3365 + $0x88] sm:$0xff]
        %v3384 = vld [vmem:[%s3365 + $0x90] sm:$0xff]
        %v3385 = vld [vmem:[%s3365 + $0x98] sm:$0xff]
        %v3386 = vld [vmem:[%s3365 + $0xa0] sm:$0xff]
        %v3387 = vld [vmem:[%s3365 + $0xa8] sm:$0xff]
        %v3388 = vld [vmem:[%s3365 + $0xb0] sm:$0xff]
        %v3389 = vld [vmem:[%s3365 + $0xb8] sm:$0xff]
        %v3390 = vld [vmem:[%s3365 + $0xc0] sm:$0xff]
        %v3391 = vld [vmem:[%s3365 + $0xc8] sm:$0xff]
        %v3392 = vld [vmem:[%s3365 + $0xd0] sm:$0xff]
        %v3393 = vld [vmem:[%s3365 + $0xd8] sm:$0xff]
        %v3394 = vld [vmem:[%s3365 + $0xe0] sm:$0xff]
        %v3395 = vld [vmem:[%s3365 + $0xe8] sm:$0xff]
        %v3396 = vld [vmem:[%s3365 + $0xf0] sm:$0xff]
        %v3397 = vld [vmem:[%s3365 + $0xf8] sm:$0xff]
        %v3398 = vld [vmem:[%s3365 + $0x100] sm:$0xff]
        %v3399 = vld [vmem:[%s3365 + $0x108] sm:$0xff]
        %v3400 = vld [vmem:[%s3365 + $0x110] sm:$0xff]
        %v3401 = vld [vmem:[%s3365 + $0x118] sm:$0xff]
        %v3402 = vld [vmem:[%s3365 + $0x120] sm:$0xff]
        %v3403 = vld [vmem:[%s3365 + $0x128] sm:$0xff]
        %v3404 = vld [vmem:[%s3365 + $0x130] sm:$0xff]
        %v3405 = vld [vmem:[%s3365 + $0x138] sm:$0xff]
        %v3406 = vld [vmem:[%s3365 + $0x140] sm:$0xff]
        %v3407 = vld [vmem:[%s3365 + $0x148] sm:$0xff]
        %v3408 = vld [vmem:[%s3365 + $0x150] sm:$0xff]
        %v3409 = vld [vmem:[%s3365 + $0x158] sm:$0xff]
        %v3410 = vld [vmem:[%s3365 + $0x160] sm:$0xff]
        %v3411 = vld [vmem:[%s3365 + $0x168] sm:$0xff]
        %v3412 = vld [vmem:[%s3365 + $0x170] sm:$0xff]
        %v3413 = vld [vmem:[%s3365 + $0x178] sm:$0xff]
        %v3414 = vld [vmem:[%s3365 + $0x180] sm:$0xff]
        %v3415 = vld [vmem:[%s3365 + $0x188] sm:$0xff]
        %v3416 = vld [vmem:[%s3365 + $0x190] sm:$0xff]
        %v3417 = vld [vmem:[%s3365 + $0x198] sm:$0xff]
        %v3418 = vld [vmem:[%s3365 + $0x1a0] sm:$0xff]
        %v3419 = vld [vmem:[%s3365 + $0x1a8] sm:$0xff]
        %v3420 = vld [vmem:[%s3365 + $0x1b0] sm:$0xff]
        %v3421 = vld [vmem:[%s3365 + $0x1b8] sm:$0xff]
        %v3422 = vld [vmem:[%s3365 + $0x1c0] sm:$0xff]
        %v3423 = vld [vmem:[%s3365 + $0x1c8] sm:$0xff]
        %v3424 = vld [vmem:[%s3365 + $0x1d0] sm:$0xff]
        %v3425 = vld [vmem:[%s3365 + $0x1d8] sm:$0xff]
        %v3426 = vld [vmem:[%s3365 + $0x1e0] sm:$0xff]
        %v3427 = vld [vmem:[%s3365 + $0x1e8] sm:$0xff]
        %v3428 = vld [vmem:[%s3365 + $0x1f0] sm:$0xff]
        %v3429 = vld [vmem:[%s3365 + $0x1f8] sm:$0xff]
        %v3431 = vsel %vm353, %v3366, 0
        %v3434 = vsel %vm353, %v3367, 0
        %v3437 = vsel %vm353, %v3368, 0
        %v3440 = vsel %vm353, %v3369, 0
        %v3443 = vsel %vm353, %v3370, 0
        %v3446 = vsel %vm353, %v3371, 0
        %v3449 = vsel %vm353, %v3372, 0
        %v3452 = vsel %vm353, %v3373, 0
        %v3455 = vsel %vm353, %v3374, 0
        %v3458 = vsel %vm353, %v3375, 0
        %v3461 = vsel %vm353, %v3376, 0
        %v3464 = vsel %vm353, %v3377, 0
        %v3467 = vsel %vm353, %v3378, 0
        %v3470 = vsel %vm353, %v3379, 0
        %v3473 = vsel %vm353, %v3380, 0
        %v3476 = vsel %vm353, %v3381, 0
        %v3479 = vsel %vm353, %v3382, 0
        %v3482 = vsel %vm353, %v3383, 0
        %v3485 = vsel %vm353, %v3384, 0
        %v3488 = vsel %vm353, %v3385, 0
        %v3491 = vsel %vm353, %v3386, 0
        %v3494 = vsel %vm353, %v3387, 0
        %v3497 = vsel %vm353, %v3388, 0
        %v3500 = vsel %vm353, %v3389, 0
        %v3503 = vsel %vm353, %v3390, 0
        %v3506 = vsel %vm353, %v3391, 0
        %v3509 = vsel %vm353, %v3392, 0
        %v3512 = vsel %vm353, %v3393, 0
        %v3515 = vsel %vm353, %v3394, 0
        %v3518 = vsel %vm353, %v3395, 0
        %v3521 = vsel %vm353, %v3396, 0
        %v3524 = vsel %vm353, %v3397, 0
        %v3527 = vsel %vm353, %v3398, 0
        %v3530 = vsel %vm353, %v3399, 0
        %v3533 = vsel %vm353, %v3400, 0
        %v3536 = vsel %vm353, %v3401, 0
        %v3539 = vsel %vm353, %v3402, 0
        %v3542 = vsel %vm353, %v3403, 0
        %v3545 = vsel %vm353, %v3404, 0
        %v3548 = vsel %vm353, %v3405, 0
        %v3551 = vsel %vm353, %v3406, 0
        %v3554 = vsel %vm353, %v3407, 0
        %v3557 = vsel %vm353, %v3408, 0
        %v3560 = vsel %vm353, %v3409, 0
        %v3563 = vsel %vm353, %v3410, 0
        %v3566 = vsel %vm353, %v3411, 0
        %v3569 = vsel %vm353, %v3412, 0
        %v3572 = vsel %vm353, %v3413, 0
        %v3575 = vsel %vm353, %v3414, 0
        %v3578 = vsel %vm353, %v3415, 0
        %v3581 = vsel %vm353, %v3416, 0
        %v3584 = vsel %vm353, %v3417, 0
        %v3587 = vsel %vm353, %v3418, 0
        %v3590 = vsel %vm353, %v3419, 0
        %v3593 = vsel %vm353, %v3420, 0
        %v3596 = vsel %vm353, %v3421, 0
        %v3599 = vsel %vm353, %v3422, 0
        %v3602 = vsel %vm353, %v3423, 0
        %v3605 = vsel %vm353, %v3424, 0
        %v3608 = vsel %vm353, %v3425, 0
        %v3611 = vsel %vm353, %v3426, 0
        %v3614 = vsel %vm353, %v3427, 0
        %v3617 = vsel %vm353, %v3428, 0
        %v3620 = vsel %vm353, %v3429, 0
        %3622 = vmatprep.subr.mxu0 0.0
        %3623 = vmatpush1.msra.mxu0 %v340
        %3624 = vmatprep.subr.mxu0 0.0
        %3625 = vmatpush1.msra.mxu0 %v341
        %3626 = vmatprep.subr.mxu0 0.0
        %3627 = vmatpush1.msra.mxu0 %v342
        %3628 = vmatprep.subr.mxu0 0.0
        %3629 = vmatpush1.msra.mxu0 %v343
        %3630 = vmatprep.subr.mxu0 0.0
        %3631 = vmatpush1.msra.mxu0 %v344
        %3632 = vmatprep.subr.mxu0 0.0
        %3633 = vmatpush1.msra.mxu0 %v345
        %3634 = vmatprep.subr.mxu0 0.0
        %3635 = vmatpush1.msra.mxu0 0.0
        %3636 = vmatprep.subr.mxu0 0.0
        %3637 = vmatpush1.msra.mxu0 0.0
        %3638 = vmatprep.subr.mxu0 0.0
        %3639 = vmatpush1.msra.mxu0 0.0
        %3640 = vmatprep.subr.mxu0 0.0
        %3641 = vmatpush1.msra.mxu0 0.0
        %3642 = vmatprep.subr.mxu0 0.0
        %3643 = vmatpush1.msra.mxu0 0.0
        %3644 = vmatprep.subr.mxu0 0.0
        %3645 = vmatpush1.msra.mxu0 0.0
        %3646 = vmatprep.subr.mxu0 0.0
        %3647 = vmatpush1.msra.mxu0 0.0
        %3648 = vmatprep.subr.mxu0 0.0
        %3649 = vmatpush1.msra.mxu0 0.0
        %3650 = vmatprep.subr.mxu0 0.0
        %3651 = vmatpush1.msra.mxu0 0.0
        %3652 = vmatprep.subr.mxu0 0.0
        %3653 = vmatpush1.msra.mxu0 0.0
        %3654 = vmatprep.subr.mxu0 0.0
        %3655 = vmatpush1.msra.mxu0 0.0
        %3656 = vmatprep.subr.mxu0 0.0
        %3657 = vmatpush1.msra.mxu0 0.0
        %3658 = vmatprep.subr.mxu0 0.0
        %3659 = vmatpush1.msra.mxu0 0.0
        %3660 = vmatprep.subr.mxu0 0.0
        %3661 = vmatpush1.msra.mxu0 0.0
        %3662 = vmatprep.subr.mxu0 0.0
        %3663 = vmatpush1.msra.mxu0 0.0
        %3664 = vmatprep.subr.mxu0 0.0
        %3665 = vmatpush1.msra.mxu0 0.0
        %3666 = vmatprep.subr.mxu0 0.0
        %3667 = vmatpush1.msra.mxu0 0.0
        %3668 = vmatprep.subr.mxu0 0.0
        %3669 = vmatpush1.msra.mxu0 0.0
        %3670 = vmatprep.subr.mxu0 0.0
        %3671 = vmatpush1.msra.mxu0 0.0
        %3672 = vmatprep.subr.mxu0 0.0
        %3673 = vmatpush1.msra.mxu0 0.0
        %3674 = vmatprep.subr.mxu0 0.0
        %3675 = vmatpush1.msra.mxu0 0.0
        %3676 = vmatprep.subr.mxu0 0.0
        %3677 = vmatpush1.msra.mxu0 0.0
        %3678 = vmatprep.subr.mxu0 0.0
        %3679 = vmatpush1.msra.mxu0 0.0
        %3680 = vmatprep.subr.mxu0 0.0
        %3681 = vmatpush1.msra.mxu0 0.0
        %3682 = vmatprep.subr.mxu0 0.0
        %3683 = vmatpush1.msra.mxu0 0.0
        %3684 = vmatprep.subr.mxu0 0.0
        %3685 = vmatpush1.msra.mxu0 0.0
        %3686 = vmatprep.mubr.f32.mxu0 0.0
        %3687 = vmatmul.mubr.f32.gmra.mrb[0].mxu0 %v3431
        %v3688 = vpop.f32.mrb[0].mxu0
        %v3689 = vadd.f32 %v351, %v3688
        %v3690 = vpop.f32.mrb[0].mxu0
        %3691 = vmatprep.mubr.f32.mxu0 0.0
        %3692 = vmatmul.mubr.f32.gmra.mrb[0].mxu0 %v3434
        %v3693 = vpop.f32.mrb[0].mxu0
        %v3694 = vadd.f32 %v351, %v3693
        %v3695 = vpop.f32.mrb[0].mxu0
        %3696 = vmatprep.mubr.f32.mxu0 0.0
        %3697 = vmatmul.mubr.f32.gmra.mrb[0].mxu0 %v3437
        %v3698 = vpop.f32.mrb[0].mxu0
        %v3699 = vadd.f32 %v351, %v3698
        %v3700 = vpop.f32.mrb[0].mxu0
        %3701 = vmatprep.mubr.f32.mxu0 0.0
        %3702 = vmatmul.mubr.f32.gmra.mrb[0].mxu0 %v3440
        %v3703 = vpop.f32.mrb[0].mxu0
        %v3704 = vadd.f32 %v351, %v3703
        %v3705 = vpop.f32.mrb[0].mxu0
        %3706 = vmatprep.mubr.f32.mxu0 0.0
        %3707 = vmatmul.mubr.f32.gmra.mrb[0].mxu0 %v3443
        %v3708 = vpop.f32.mrb[0].mxu0
        %v3709 = vadd.f32 %v351, %v3708
        %v3710 = vpop.f32.mrb[0].mxu0
        %3711 = vmatprep.mubr.f32.mxu0 0.0
        %3712 = vmatmul.mubr.f32.gmra.mrb[0].mxu0 %v3446
        %v3713 = vpop.f32.mrb[0].mxu0
        %v3714 = vadd.f32 %v351, %v3713
        %v3715 = vpop.f32.mrb[0].mxu0
        %3716 = vmatprep.mubr.f32.mxu0 0.0
        %3717 = vmatmul.mubr.f32.gmra.mrb[0].mxu0 %v3449
        %v3718 = vpop.f32.mrb[0].mxu0
        %v3719 = vadd.f32 %v351, %v3718
        %v3720 = vpop.f32.mrb[0].mxu0
        %3721 = vmatprep.mubr.f32.mxu0 0.0
        %3722 = vmatmul.mubr.f32.gmra.mrb[0].mxu0 %v3452
        %v3723 = vpop.f32.mrb[0].mxu0
        %v3724 = vadd.f32 %v351, %v3723
        %v3725 = vpop.f32.mrb[0].mxu0
        %3726 = vmatprep.mubr.f32.mxu0 0.0
        %3727 = vmatmul.mubr.f32.gmra.mrb[0].mxu0 %v3455
        %v3728 = vpop.f32.mrb[0].mxu0
        %v3729 = vadd.f32 %v351, %v3728
        %v3730 = vpop.f32.mrb[0].mxu0
        %3731 = vmatprep.mubr.f32.mxu0 0.0
        %3732 = vmatmul.mubr.f32.gmra.mrb[0].mxu0 %v3458
        %v3733 = vpop.f32.mrb[0].mxu0
        %v3734 = vadd.f32 %v351, %v3733
        %v3735 = vpop.f32.mrb[0].mxu0
        %3736 = vmatprep.mubr.f32.mxu0 0.0
        %3737 = vmatmul.mubr.f32.gmra.mrb[0].mxu0 %v3461
        %v3738 = vpop.f32.mrb[0].mxu0
        %v3739 = vadd.f32 %v351, %v3738
        %v3740 = vpop.f32.mrb[0].mxu0
        %3741 = vmatprep.mubr.f32.mxu0 0.0
        %3742 = vmatmul.mubr.f32.gmra.mrb[0].mxu0 %v3464
        %v3743 = vpop.f32.mrb[0].mxu0
        %v3744 = vadd.f32 %v351, %v3743
        %v3745 = vpop.f32.mrb[0].mxu0
        %3746 = vmatprep.mubr.f32.mxu0 0.0
        %3747 = vmatmul.mubr.f32.gmra.mrb[0].mxu0 %v3467
        %v3748 = vpop.f32.mrb[0].mxu0
        %v3749 = vadd.f32 %v351, %v3748
        %v3750 = vpop.f32.mrb[0].mxu0
        %3751 = vmatprep.mubr.f32.mxu0 0.0
        %3752 = vmatmul.mubr.f32.gmra.mrb[0].mxu0 %v3470
        %v3753 = vpop.f32.mrb[0].mxu0
        %v3754 = vadd.f32 %v351, %v3753
        %v3755 = vpop.f32.mrb[0].mxu0
        %3756 = vmatprep.mubr.f32.mxu0 0.0
        %3757 = vmatmul.mubr.f32.gmra.mrb[0].mxu0 %v3473
        %v3758 = vpop.f32.mrb[0].mxu0
        %v3759 = vadd.f32 %v351, %v3758
        %v3760 = vpop.f32.mrb[0].mxu0
        %3761 = vmatprep.mubr.f32.mxu0 0.0
        %3762 = vmatmul.mubr.f32.gmra.mrb[0].mxu0 %v3476
        %v3763 = vpop.f32.mrb[0].mxu0
        %v3764 = vadd.f32 %v351, %v3763
        %v3765 = vpop.f32.mrb[0].mxu0
        %3766 = vmatprep.mubr.f32.mxu0 0.0
        %3767 = vmatmul.mubr.f32.gmra.mrb[0].mxu0 %v3479
        %v3768 = vpop.f32.mrb[0].mxu0
        %v3769 = vadd.f32 %v351, %v3768
        %v3770 = vpop.f32.mrb[0].mxu0
        %3771 = vmatprep.mubr.f32.mxu0 0.0
        %3772 = vmatmul.mubr.f32.gmra.mrb[0].mxu0 %v3482
        %v3773 = vpop.f32.mrb[0].mxu0
        %v3774 = vadd.f32 %v351, %v3773
        %v3775 = vpop.f32.mrb[0].mxu0
        %3776 = vmatprep.mubr.f32.mxu0 0.0
        %3777 = vmatmul.mubr.f32.gmra.mrb[0].mxu0 %v3485
        %v3778 = vpop.f32.mrb[0].mxu0
        %v3779 = vadd.f32 %v351, %v3778
        %v3780 = vpop.f32.mrb[0].mxu0
        %3781 = vmatprep.mubr.f32.mxu0 0.0
        %3782 = vmatmul.mubr.f32.gmra.mrb[0].mxu0 %v3488
        %v3783 = vpop.f32.mrb[0].mxu0
        %v3784 = vadd.f32 %v351, %v3783
        %v3785 = vpop.f32.mrb[0].mxu0
        %3786 = vmatprep.mubr.f32.mxu0 0.0
        %3787 = vmatmul.mubr.f32.gmra.mrb[0].mxu0 %v3491
        %v3788 = vpop.f32.mrb[0].mxu0
        %v3789 = vadd.f32 %v351, %v3788
        %v3790 = vpop.f32.mrb[0].mxu0
        %3791 = vmatprep.mubr.f32.mxu0 0.0
        %3792 = vmatmul.mubr.f32.gmra.mrb[0].mxu0 %v3494
        %v3793 = vpop.f32.mrb[0].mxu0
        %v3794 = vadd.f32 %v351, %v3793
        %v3795 = vpop.f32.mrb[0].mxu0
        %3796 = vmatprep.mubr.f32.mxu0 0.0
        %3797 = vmatmul.mubr.f32.gmra.mrb[0].mxu0 %v3497
        %v3798 = vpop.f32.mrb[0].mxu0
        %v3799 = vadd.f32 %v351, %v3798
        %v3800 = vpop.f32.mrb[0].mxu0
        %3801 = vmatprep.mubr.f32.mxu0 0.0
        %3802 = vmatmul.mubr.f32.gmra.mrb[0].mxu0 %v3500
        %v3803 = vpop.f32.mrb[0].mxu0
        %v3804 = vadd.f32 %v351, %v3803
        %v3805 = vpop.f32.mrb[0].mxu0
        %3806 = vmatprep.mubr.f32.mxu0 0.0
        %3807 = vmatmul.mubr.f32.gmra.mrb[0].mxu0 %v3503
        %v3808 = vpop.f32.mrb[0].mxu0
        %v3809 = vadd.f32 %v351, %v3808
        %v3810 = vpop.f32.mrb[0].mxu0
        %3811 = vmatprep.mubr.f32.mxu0 0.0
        %3812 = vmatmul.mubr.f32.gmra.mrb[0].mxu0 %v3506
        %v3813 = vpop.f32.mrb[0].mxu0
        %v3814 = vadd.f32 %v351, %v3813
        %v3815 = vpop.f32.mrb[0].mxu0
        %3816 = vmatprep.mubr.f32.mxu0 0.0
        %3817 = vmatmul.mubr.f32.gmra.mrb[0].mxu0 %v3509
        %v3818 = vpop.f32.mrb[0].mxu0
        %v3819 = vadd.f32 %v351, %v3818
        %v3820 = vpop.f32.mrb[0].mxu0
        %3821 = vmatprep.mubr.f32.mxu0 0.0
        %3822 = vmatmul.mubr.f32.gmra.mrb[0].mxu0 %v3512
        %v3823 = vpop.f32.mrb[0].mxu0
        %v3824 = vadd.f32 %v351, %v3823
        %v3825 = vpop.f32.mrb[0].mxu0
        %3826 = vmatprep.mubr.f32.mxu0 0.0
        %3827 = vmatmul.mubr.f32.gmra.mrb[0].mxu0 %v3515
        %v3828 = vpop.f32.mrb[0].mxu0
        %v3829 = vadd.f32 %v351, %v3828
        %v3830 = vpop.f32.mrb[0].mxu0
        %3831 = vmatprep.mubr.f32.mxu0 0.0
        %3832 = vmatmul.mubr.f32.gmra.mrb[0].mxu0 %v3518
        %v3833 = vpop.f32.mrb[0].mxu0
        %v3834 = vadd.f32 %v351, %v3833
        %v3835 = vpop.f32.mrb[0].mxu0
        %3836 = vmatprep.mubr.f32.mxu0 0.0
        %3837 = vmatmul.mubr.f32.gmra.mrb[0].mxu0 %v3521
        %v3838 = vpop.f32.mrb[0].mxu0
        %v3839 = vadd.f32 %v351, %v3838
        %v3840 = vpop.f32.mrb[0].mxu0
        %3841 = vmatprep.mubr.f32.mxu0 0.0
        %3842 = vmatmul.mubr.f32.gmra.mrb[0].mxu0 %v3524
        %v3843 = vpop.f32.mrb[0].mxu0
        %v3844 = vadd.f32 %v351, %v3843
        %v3845 = vpop.f32.mrb[0].mxu0
        %3846 = vmatprep.mubr.f32.mxu0 0.0
        %3847 = vmatmul.mubr.f32.gmra.mrb[0].mxu0 %v3527
        %v3848 = vpop.f32.mrb[0].mxu0
        %v3849 = vadd.f32 %v351, %v3848
        %v3850 = vpop.f32.mrb[0].mxu0
        %3851 = vmatprep.mubr.f32.mxu0 0.0
        %3852 = vmatmul.mubr.f32.gmra.mrb[0].mxu0 %v3530
        %v3853 = vpop.f32.mrb[0].mxu0
        %v3854 = vadd.f32 %v351, %v3853
        %v3855 = vpop.f32.mrb[0].mxu0
        %3856 = vmatprep.mubr.f32.mxu0 0.0
        %3857 = vmatmul.mubr.f32.gmra.mrb[0].mxu0 %v3533
        %v3858 = vpop.f32.mrb[0].mxu0
        %v3859 = vadd.f32 %v351, %v3858
        %v3860 = vpop.f32.mrb[0].mxu0
        %3861 = vmatprep.mubr.f32.mxu0 0.0
        %3862 = vmatmul.mubr.f32.gmra.mrb[0].mxu0 %v3536
        %v3863 = vpop.f32.mrb[0].mxu0
        %v3864 = vadd.f32 %v351, %v3863
        %v3865 = vpop.f32.mrb[0].mxu0
        %3866 = vmatprep.mubr.f32.mxu0 0.0
        %3867 = vmatmul.mubr.f32.gmra.mrb[0].mxu0 %v3539
        %v3868 = vpop.f32.mrb[0].mxu0
        %v3869 = vadd.f32 %v351, %v3868
        %v3870 = vpop.f32.mrb[0].mxu0
        %3871 = vmatprep.mubr.f32.mxu0 0.0
        %3872 = vmatmul.mubr.f32.gmra.mrb[0].mxu0 %v3542
        %v3873 = vpop.f32.mrb[0].mxu0
        %v3874 = vadd.f32 %v351, %v3873
        %v3875 = vpop.f32.mrb[0].mxu0
        %3876 = vmatprep.mubr.f32.mxu0 0.0
        %3877 = vmatmul.mubr.f32.gmra.mrb[0].mxu0 %v3545
        %v3878 = vpop.f32.mrb[0].mxu0
        %v3879 = vadd.f32 %v351, %v3878
        %v3880 = vpop.f32.mrb[0].mxu0
        %3881 = vmatprep.mubr.f32.mxu0 0.0
        %3882 = vmatmul.mubr.f32.gmra.mrb[0].mxu0 %v3548
        %v3883 = vpop.f32.mrb[0].mxu0
        %v3884 = vadd.f32 %v351, %v3883
        %v3885 = vpop.f32.mrb[0].mxu0
        %3886 = vmatprep.mubr.f32.mxu0 0.0
        %3887 = vmatmul.mubr.f32.gmra.mrb[0].mxu0 %v3551
        %v3888 = vpop.f32.mrb[0].mxu0
        %v3889 = vadd.f32 %v351, %v3888
        %v3890 = vpop.f32.mrb[0].mxu0
        %3891 = vmatprep.mubr.f32.mxu0 0.0
        %3892 = vmatmul.mubr.f32.gmra.mrb[0].mxu0 %v3554
        %v3893 = vpop.f32.mrb[0].mxu0
        %v3894 = vadd.f32 %v351, %v3893
        %v3895 = vpop.f32.mrb[0].mxu0
        %3896 = vmatprep.mubr.f32.mxu0 0.0
        %3897 = vmatmul.mubr.f32.gmra.mrb[0].mxu0 %v3557
        %v3898 = vpop.f32.mrb[0].mxu0
        %v3899 = vadd.f32 %v351, %v3898
        %v3900 = vpop.f32.mrb[0].mxu0
        %3901 = vmatprep.mubr.f32.mxu0 0.0
        %3902 = vmatmul.mubr.f32.gmra.mrb[0].mxu0 %v3560
        %v3903 = vpop.f32.mrb[0].mxu0
        %v3904 = vadd.f32 %v351, %v3903
        %v3905 = vpop.f32.mrb[0].mxu0
        %3906 = vmatprep.mubr.f32.mxu0 0.0
        %3907 = vmatmul.mubr.f32.gmra.mrb[0].mxu0 %v3563
        %v3908 = vpop.f32.mrb[0].mxu0
        %v3909 = vadd.f32 %v351, %v3908
        %v3910 = vpop.f32.mrb[0].mxu0
        %3911 = vmatprep.mubr.f32.mxu0 0.0
        %3912 = vmatmul.mubr.f32.gmra.mrb[0].mxu0 %v3566
        %v3913 = vpop.f32.mrb[0].mxu0
        %v3914 = vadd.f32 %v351, %v3913
        %v3915 = vpop.f32.mrb[0].mxu0
        %3916 = vmatprep.mubr.f32.mxu0 0.0
        %3917 = vmatmul.mubr.f32.gmra.mrb[0].mxu0 %v3569
        %v3918 = vpop.f32.mrb[0].mxu0
        %v3919 = vadd.f32 %v351, %v3918
        %v3920 = vpop.f32.mrb[0].mxu0
        %3921 = vmatprep.mubr.f32.mxu0 0.0
        %3922 = vmatmul.mubr.f32.gmra.mrb[0].mxu0 %v3572
        %v3923 = vpop.f32.mrb[0].mxu0
        %v3924 = vadd.f32 %v351, %v3923
        %v3925 = vpop.f32.mrb[0].mxu0
        %3926 = vmatprep.mubr.f32.mxu0 0.0
        %3927 = vmatmul.mubr.f32.gmra.mrb[0].mxu0 %v3575
        %v3928 = vpop.f32.mrb[0].mxu0
        %v3929 = vadd.f32 %v351, %v3928
        %v3930 = vpop.f32.mrb[0].mxu0
        %3931 = vmatprep.mubr.f32.mxu0 0.0
        %3932 = vmatmul.mubr.f32.gmra.mrb[0].mxu0 %v3578
        %v3933 = vpop.f32.mrb[0].mxu0
        %v3934 = vadd.f32 %v351, %v3933
        %v3935 = vpop.f32.mrb[0].mxu0
        %3936 = vmatprep.mubr.f32.mxu0 0.0
        %3937 = vmatmul.mubr.f32.gmra.mrb[0].mxu0 %v3581
        %v3938 = vpop.f32.mrb[0].mxu0
        %v3939 = vadd.f32 %v351, %v3938
        %v3940 = vpop.f32.mrb[0].mxu0
        %3941 = vmatprep.mubr.f32.mxu0 0.0
        %3942 = vmatmul.mubr.f32.gmra.mrb[0].mxu0 %v3584
        %v3943 = vpop.f32.mrb[0].mxu0
        %v3944 = vadd.f32 %v351, %v3943
        %v3945 = vpop.f32.mrb[0].mxu0
        %3946 = vmatprep.mubr.f32.mxu0 0.0
        %3947 = vmatmul.mubr.f32.gmra.mrb[0].mxu0 %v3587
        %v3948 = vpop.f32.mrb[0].mxu0
        %v3949 = vadd.f32 %v351, %v3948
        %v3950 = vpop.f32.mrb[0].mxu0
        %3951 = vmatprep.mubr.f32.mxu0 0.0
        %3952 = vmatmul.mubr.f32.gmra.mrb[0].mxu0 %v3590
        %v3953 = vpop.f32.mrb[0].mxu0
        %v3954 = vadd.f32 %v351, %v3953
        %v3955 = vpop.f32.mrb[0].mxu0
        %3956 = vmatprep.mubr.f32.mxu0 0.0
        %3957 = vmatmul.mubr.f32.gmra.mrb[0].mxu0 %v3593
        %v3958 = vpop.f32.mrb[0].mxu0
        %v3959 = vadd.f32 %v351, %v3958
        %v3960 = vpop.f32.mrb[0].mxu0
        %3961 = vmatprep.mubr.f32.mxu0 0.0
        %3962 = vmatmul.mubr.f32.gmra.mrb[0].mxu0 %v3596
        %v3963 = vpop.f32.mrb[0].mxu0
        %v3964 = vadd.f32 %v351, %v3963
        %v3965 = vpop.f32.mrb[0].mxu0
        %3966 = vmatprep.mubr.f32.mxu0 0.0
        %3967 = vmatmul.mubr.f32.gmra.mrb[0].mxu0 %v3599
        %v3968 = vpop.f32.mrb[0].mxu0
        %v3969 = vadd.f32 %v351, %v3968
        %v3970 = vpop.f32.mrb[0].mxu0
        %3971 = vmatprep.mubr.f32.mxu0 0.0
        %3972 = vmatmul.mubr.f32.gmra.mrb[0].mxu0 %v3602
        %v3973 = vpop.f32.mrb[0].mxu0
        %v3974 = vadd.f32 %v351, %v3973
        %v3975 = vpop.f32.mrb[0].mxu0
        %3976 = vmatprep.mubr.f32.mxu0 0.0
        %3977 = vmatmul.mubr.f32.gmra.mrb[0].mxu0 %v3605
        %v3978 = vpop.f32.mrb[0].mxu0
        %v3979 = vadd.f32 %v351, %v3978
        %v3980 = vpop.f32.mrb[0].mxu0
        %3981 = vmatprep.mubr.f32.mxu0 0.0
        %3982 = vmatmul.mubr.f32.gmra.mrb[0].mxu0 %v3608
        %v3983 = vpop.f32.mrb[0].mxu0
        %v3984 = vadd.f32 %v351, %v3983
        %v3985 = vpop.f32.mrb[0].mxu0
        %3986 = vmatprep.mubr.f32.mxu0 0.0
        %3987 = vmatmul.mubr.f32.gmra.mrb[0].mxu0 %v3611
        %v3988 = vpop.f32.mrb[0].mxu0
        %v3989 = vadd.f32 %v351, %v3988
        %v3990 = vpop.f32.mrb[0].mxu0
        %3991 = vmatprep.mubr.f32.mxu0 0.0
        %3992 = vmatmul.mubr.f32.gmra.mrb[0].mxu0 %v3614
        %v3993 = vpop.f32.mrb[0].mxu0
        %v3994 = vadd.f32 %v351, %v3993
        %v3995 = vpop.f32.mrb[0].mxu0
        %3996 = vmatprep.mubr.f32.mxu0 0.0
        %3997 = vmatmul.mubr.f32.gmra.mrb[0].mxu0 %v3617
        %v3998 = vpop.f32.mrb[0].mxu0
        %v3999 = vadd.f32 %v351, %v3998
        %v4000 = vpop.f32.mrb[0].mxu0
        %4001 = vmatprep.mubr.f32.mxu0 0.0
        %4002 = vmatmul.mubr.f32.gmra.mrb[0].mxu0 %v3620
        %v4003 = vpop.f32.mrb[0].mxu0
        %v4004 = vadd.f32 %v351, %v4003
        %v4005 = vpop.f32.mrb[0].mxu0
        %4006 = vdwg.mxu0
        %v4007 = vmax.f32 %v3689, 0.0
        %v4008 = vmax.f32 %v3694, 0.0
        %v4009 = vmax.f32 %v3699, 0.0
        %v4010 = vmax.f32 %v3704, 0.0
        %v4011 = vmax.f32 %v3709, 0.0
        %v4012 = vmax.f32 %v3714, 0.0
        %v4013 = vmax.f32 %v3719, 0.0
        %v4014 = vmax.f32 %v3724, 0.0
        %v4015 = vmax.f32 %v3729, 0.0
        %v4016 = vmax.f32 %v3734, 0.0
        %v4017 = vmax.f32 %v3739, 0.0
        %v4018 = vmax.f32 %v3744, 0.0
        %v4019 = vmax.f32 %v3749, 0.0
        %v4020 = vmax.f32 %v3754, 0.0
        %v4021 = vmax.f32 %v3759, 0.0
        %v4022 = vmax.f32 %v3764, 0.0
        %v4023 = vmax.f32 %v3769, 0.0
        %v4024 = vmax.f32 %v3774, 0.0
        %v4025 = vmax.f32 %v3779, 0.0
        %v4026 = vmax.f32 %v3784, 0.0
        %v4027 = vmax.f32 %v3789, 0.0
        %v4028 = vmax.f32 %v3794, 0.0
        %v4029 = vmax.f32 %v3799, 0.0
        %v4030 = vmax.f32 %v3804, 0.0
        %v4031 = vmax.f32 %v3809, 0.0
        %v4032 = vmax.f32 %v3814, 0.0
        %v4033 = vmax.f32 %v3819, 0.0
        %v4034 = vmax.f32 %v3824, 0.0
        %v4035 = vmax.f32 %v3829, 0.0
        %v4036 = vmax.f32 %v3834, 0.0
        %v4037 = vmax.f32 %v3839, 0.0
        %v4038 = vmax.f32 %v3844, 0.0
        %v4039 = vmax.f32 %v3849, 0.0
        %v4040 = vmax.f32 %v3854, 0.0
        %v4041 = vmax.f32 %v3859, 0.0
        %v4042 = vmax.f32 %v3864, 0.0
        %v4043 = vmax.f32 %v3869, 0.0
        %v4044 = vmax.f32 %v3874, 0.0
        %v4045 = vmax.f32 %v3879, 0.0
        %v4046 = vmax.f32 %v3884, 0.0
        %v4047 = vmax.f32 %v3889, 0.0
        %v4048 = vmax.f32 %v3894, 0.0
        %v4049 = vmax.f32 %v3899, 0.0
        %v4050 = vmax.f32 %v3904, 0.0
        %v4051 = vmax.f32 %v3909, 0.0
        %v4052 = vmax.f32 %v3914, 0.0
        %v4053 = vmax.f32 %v3919, 0.0
        %v4054 = vmax.f32 %v3924, 0.0
        %v4055 = vmax.f32 %v3929, 0.0
        %v4056 = vmax.f32 %v3934, 0.0
        %v4057 = vmax.f32 %v3939, 0.0
        %v4058 = vmax.f32 %v3944, 0.0
        %v4059 = vmax.f32 %v3949, 0.0
        %v4060 = vmax.f32 %v3954, 0.0
        %v4061 = vmax.f32 %v3959, 0.0
        %v4062 = vmax.f32 %v3964, 0.0
        %v4063 = vmax.f32 %v3969, 0.0
        %v4064 = vmax.f32 %v3974, 0.0
        %v4065 = vmax.f32 %v3979, 0.0
        %v4066 = vmax.f32 %v3984, 0.0
        %v4067 = vmax.f32 %v3989, 0.0
        %v4068 = vmax.f32 %v3994, 0.0
        %v4069 = vmax.f32 %v3999, 0.0
        %v4070 = vmax.f32 %v4004, 0.0
        %v4071 = vmax.f32 %v4007, %v4015
        %v4072 = vmax.f32 %v4008, %v4016
        %v4073 = vmax.f32 %v4009, %v4017
        %v4074 = vmax.f32 %v4010, %v4018
        %v4075 = vmax.f32 %v4011, %v4019
        %v4076 = vmax.f32 %v4012, %v4020
        %v4077 = vmax.f32 %v4013, %v4021
        %v4078 = vmax.f32 %v4014, %v4022
        %v4079 = vmax.f32 %v4071, %v4023
        %v4080 = vmax.f32 %v4072, %v4024
        %v4081 = vmax.f32 %v4073, %v4025
        %v4082 = vmax.f32 %v4074, %v4026
        %v4083 = vmax.f32 %v4075, %v4027
        %v4084 = vmax.f32 %v4076, %v4028
        %v4085 = vmax.f32 %v4077, %v4029
        %v4086 = vmax.f32 %v4078, %v4030
        %v4087 = vmax.f32 %v4079, %v4031
        %v4088 = vmax.f32 %v4080, %v4032
        %v4089 = vmax.f32 %v4081, %v4033
        %v4090 = vmax.f32 %v4082, %v4034
        %v4091 = vmax.f32 %v4083, %v4035
        %v4092 = vmax.f32 %v4084, %v4036
        %v4093 = vmax.f32 %v4085, %v4037
        %v4094 = vmax.f32 %v4086, %v4038
        %v4095 = vmax.f32 %v4087, %v4039
        %v4096 = vmax.f32 %v4088, %v4040
        %v4097 = vmax.f32 %v4089, %v4041
        %v4098 = vmax.f32 %v4090, %v4042
        %v4099 = vmax.f32 %v4091, %v4043
        %v4100 = vmax.f32 %v4092, %v4044
        %v4101 = vmax.f32 %v4093, %v4045
        %v4102 = vmax.f32 %v4094, %v4046
        %v4103 = vmax.f32 %v4095, %v4047
        %v4104 = vmax.f32 %v4096, %v4048
        %v4105 = vmax.f32 %v4097, %v4049
        %v4106 = vmax.f32 %v4098, %v4050
        %v4107 = vmax.f32 %v4099, %v4051
        %v4108 = vmax.f32 %v4100, %v4052
        %v4109 = vmax.f32 %v4101, %v4053
        %v4110 = vmax.f32 %v4102, %v4054
        %v4111 = vmax.f32 %v4103, %v4055
        %v4112 = vmax.f32 %v4104, %v4056
        %v4113 = vmax.f32 %v4105, %v4057
        %v4114 = vmax.f32 %v4106, %v4058
        %v4115 = vmax.f32 %v4107, %v4059
        %v4116 = vmax.f32 %v4108, %v4060
        %v4117 = vmax.f32 %v4109, %v4061
        %v4118 = vmax.f32 %v4110, %v4062
        %v4119 = vmax.f32 %v4111, %v4063
        %v4120 = vmax.f32 %v4112, %v4064
        %v4121 = vmax.f32 %v4113, %v4065
        %v4122 = vmax.f32 %v4114, %v4066
        %v4123 = vmax.f32 %v4115, %v4067
        %v4124 = vmax.f32 %v4116, %v4068
        %v4125 = vmax.f32 %v4117, %v4069
        %v4126 = vmax.f32 %v4118, %v4070
        %v4127 = vmax.f32 %v4119, %v4120
        %v4128 = vmax.f32 %v4127, %v4121
        %v4129 = vmax.f32 %v4128, %v4122
        %v4130 = vmax.f32 %v4129, %v4123
        %v4131 = vmax.f32 %v4130, %v4124
        %v4132 = vmax.f32 %v4131, %v4125
        %v4133 = vmax.f32 %v4132, %v4126
        %v4134 = vld [vmem:[%s3] sm:$0xff]
        %s4135 = scalar_lea.vmem %s3, 8
        %v4136 = vld [vmem:[%s4135] sm:$0xff]
        %v4138 = vrot.slane %v1057, 1
        %vm4139 = vcmask 64512
        %v4140 = vsel %vm4139, %v4138, 0
        %4142 = vmatprep.subr.mxu0 0.0
        %4143 = vmatpush1.msra.mxu0 %v4136
        %4144 = vmatprep.subr.mxu0 0.0
        %4145 = vmatpush1.msra.mxu0 0.0
        %4146 = vmatprep.subr.mxu0 0.0
        %4147 = vmatpush1.msra.mxu0 0.0
        %4148 = vmatprep.subr.mxu0 0.0
        %4149 = vmatpush1.msra.mxu0 0.0
        %4150 = vmatprep.subr.mxu0 0.0
        %4151 = vmatpush1.msra.mxu0 0.0
        %4152 = vmatprep.subr.mxu0 0.0
        %4153 = vmatpush1.msra.mxu0 0.0
        %4154 = vmatprep.subr.mxu0 0.0
        %4155 = vmatpush1.msra.mxu0 0.0
        %4156 = vmatprep.subr.mxu0 0.0
        %4157 = vmatpush1.msra.mxu0 0.0
        %4158 = vmatprep.subr.mxu0 0.0
        %4159 = vmatpush1.msra.mxu0 0.0
        %4160 = vmatprep.subr.mxu0 0.0
        %4161 = vmatpush1.msra.mxu0 0.0
        %4162 = vmatprep.subr.mxu0 0.0
        %4163 = vmatpush1.msra.mxu0 0.0
        %4164 = vmatprep.subr.mxu0 0.0
        %4165 = vmatpush1.msra.mxu0 0.0
        %4166 = vmatprep.subr.mxu0 0.0
        %4167 = vmatpush1.msra.mxu0 0.0
        %4168 = vmatprep.subr.mxu0 0.0
        %4169 = vmatpush1.msra.mxu0 0.0
        %4170 = vmatprep.subr.mxu0 0.0
        %4171 = vmatpush1.msra.mxu0 0.0
        %4172 = vmatprep.subr.mxu0 0.0
        %4173 = vmatpush1.msra.mxu0 0.0
        %4174 = vmatprep.subr.mxu0 0.0
        %4175 = vmatpush1.msra.mxu0 0.0
        %4176 = vmatprep.subr.mxu0 0.0
        %4177 = vmatpush1.msra.mxu0 0.0
        %4178 = vmatprep.subr.mxu0 0.0
        %4179 = vmatpush1.msra.mxu0 0.0
        %4180 = vmatprep.subr.mxu0 0.0
        %4181 = vmatpush1.msra.mxu0 0.0
        %4182 = vmatprep.subr.mxu0 0.0
        %4183 = vmatpush1.msra.mxu0 0.0
        %4184 = vmatprep.subr.mxu0 0.0
        %4185 = vmatpush1.msra.mxu0 0.0
        %4186 = vmatprep.subr.mxu0 0.0
        %4187 = vmatpush1.msra.mxu0 0.0
        %4188 = vmatprep.subr.mxu0 0.0
        %4189 = vmatpush1.msra.mxu0 0.0
        %4190 = vmatprep.subr.mxu0 0.0
        %4191 = vmatpush1.msra.mxu0 0.0
        %4192 = vmatprep.subr.mxu0 0.0
        %4193 = vmatpush1.msra.mxu0 0.0
        %4194 = vmatprep.subr.mxu0 0.0
        %4195 = vmatpush1.msra.mxu0 0.0
        %4196 = vmatprep.subr.mxu0 0.0
        %4197 = vmatpush1.msra.mxu0 0.0
        %4198 = vmatprep.subr.mxu0 0.0
        %4199 = vmatpush1.msra.mxu0 0.0
        %4200 = vmatprep.subr.mxu0 0.0
        %4201 = vmatpush1.msra.mxu0 0.0
        %4202 = vmatprep.subr.mxu0 0.0
        %4203 = vmatpush1.msra.mxu0 0.0
        %4204 = vmatprep.subr.mxu0 0.0
        %4205 = vmatpush1.msra.mxu0 0.0
        %4206 = vmatprep.mubr.f32.mxu0 0.0
        %4207 = vmatmul.mubr.f32.gmra.mrb[0].mxu0 %v4140
        %v4208 = vpop.f32.mrb[0].mxu0
        %v4209 = vadd.f32 0.0, %v4208
        %v4210 = vpop.f32.mrb[0].mxu0
        %4211 = vdwg.mxu0
        %v4212 = vsel %vm4139, %v1057, 0
        %4214 = vmatprep.subr.mxu0 0.0
        %4215 = vmatpush1.msra.mxu0 %v4134
        %4216 = vmatprep.subr.mxu0 0.0
        %4217 = vmatpush1.msra.mxu0 0.0
        %4218 = vmatprep.subr.mxu0 0.0
        %4219 = vmatpush1.msra.mxu0 0.0
        %4220 = vmatprep.subr.mxu0 0.0
        %4221 = vmatpush1.msra.mxu0 0.0
        %4222 = vmatprep.subr.mxu0 0.0
        %4223 = vmatpush1.msra.mxu0 0.0
        %4224 = vmatprep.subr.mxu0 0.0
        %4225 = vmatpush1.msra.mxu0 0.0
        %4226 = vmatprep.subr.mxu0 0.0
        %4227 = vmatpush1.msra.mxu0 0.0
        %4228 = vmatprep.subr.mxu0 0.0
        %4229 = vmatpush1.msra.mxu0 0.0
        %4230 = vmatprep.subr.mxu0 0.0
        %4231 = vmatpush1.msra.mxu0 0.0
        %4232 = vmatprep.subr.mxu0 0.0
        %4233 = vmatpush1.msra.mxu0 0.0
        %4234 = vmatprep.subr.mxu0 0.0
        %4235 = vmatpush1.msra.mxu0 0.0
        %4236 = vmatprep.subr.mxu0 0.0
        %4237 = vmatpush1.msra.mxu0 0.0
        %4238 = vmatprep.subr.mxu0 0.0
        %4239 = vmatpush1.msra.mxu0 0.0
        %4240 = vmatprep.subr.mxu0 0.0
        %4241 = vmatpush1.msra.mxu0 0.0
        %4242 = vmatprep.subr.mxu0 0.0
        %4243 = vmatpush1.msra.mxu0 0.0
        %4244 = vmatprep.subr.mxu0 0.0
        %4245 = vmatpush1.msra.mxu0 0.0
        %4246 = vmatprep.subr.mxu0 0.0
        %4247 = vmatpush1.msra.mxu0 0.0
        %4248 = vmatprep.subr.mxu0 0.0
        %4249 = vmatpush1.msra.mxu0 0.0
        %4250 = vmatprep.subr.mxu0 0.0
        %4251 = vmatpush1.msra.mxu0 0.0
        %4252 = vmatprep.subr.mxu0 0.0
        %4253 = vmatpush1.msra.mxu0 0.0
        %4254 = vmatprep.subr.mxu0 0.0
        %4255 = vmatpush1.msra.mxu0 0.0
        %4256 = vmatprep.subr.mxu0 0.0
        %4257 = vmatpush1.msra.mxu0 0.0
        %4258 = vmatprep.subr.mxu0 0.0
        %4259 = vmatpush1.msra.mxu0 0.0
        %4260 = vmatprep.subr.mxu0 0.0
        %4261 = vmatpush1.msra.mxu0 0.0
        %4262 = vmatprep.subr.mxu0 0.0
        %4263 = vmatpush1.msra.mxu0 0.0
        %4264 = vmatprep.subr.mxu0 0.0
        %4265 = vmatpush1.msra.mxu0 0.0
        %4266 = vmatprep.subr.mxu0 0.0
        %4267 = vmatpush1.msra.mxu0 0.0
        %4268 = vmatprep.subr.mxu0 0.0
        %4269 = vmatpush1.msra.mxu0 0.0
        %4270 = vmatprep.subr.mxu0 0.0
        %4271 = vmatpush1.msra.mxu0 0.0
        %4272 = vmatprep.subr.mxu0 0.0
        %4273 = vmatpush1.msra.mxu0 0.0
        %4274 = vmatprep.subr.mxu0 0.0
        %4275 = vmatpush1.msra.mxu0 0.0
        %4276 = vmatprep.subr.mxu0 0.0
        %4277 = vmatpush1.msra.mxu0 0.0
        %4278 = vmatprep.mubr.f32.mxu0 0.0
        %4279 = vmatmul.mubr.f32.gmra.mrb[0].mxu0 %v4212
        %v4280 = vpop.f32.mrb[0].mxu0
        %v4281 = vadd.f32 %v4209, %v4280
        %v4282 = vpop.f32.mrb[0].mxu0
        %4283 = vdwg.mxu0
        %s4284 = scalar_lea.vmem %s3, 16
        %v4285 = vld [vmem:[%s4284] sm:$0xff]
        %v4287 = vsel %vm4139, %v1826, 0
        %4289 = vmatprep.subr.mxu0 0.0
        %4290 = vmatpush1.msra.mxu0 %v4285
        %4291 = vmatprep.subr.mxu0 0.0
        %4292 = vmatpush1.msra.mxu0 0.0
        %4293 = vmatprep.subr.mxu0 0.0
        %4294 = vmatpush1.msra.mxu0 0.0
        %4295 = vmatprep.subr.mxu0 0.0
        %4296 = vmatpush1.msra.mxu0 0.0
        %4297 = vmatprep.subr.mxu0 0.0
        %4298 = vmatpush1.msra.mxu0 0.0
        %4299 = vmatprep.subr.mxu0 0.0
        %4300 = vmatpush1.msra.mxu0 0.0
        %4301 = vmatprep.subr.mxu0 0.0
        %4302 = vmatpush1.msra.mxu0 0.0
        %4303 = vmatprep.subr.mxu0 0.0
        %4304 = vmatpush1.msra.mxu0 0.0
        %4305 = vmatprep.subr.mxu0 0.0
        %4306 = vmatpush1.msra.mxu0 0.0
        %4307 = vmatprep.subr.mxu0 0.0
        %4308 = vmatpush1.msra.mxu0 0.0
        %4309 = vmatprep.subr.mxu0 0.0
        %4310 = vmatpush1.msra.mxu0 0.0
        %4311 = vmatprep.subr.mxu0 0.0
        %4312 = vmatpush1.msra.mxu0 0.0
        %4313 = vmatprep.subr.mxu0 0.0
        %4314 = vmatpush1.msra.mxu0 0.0
        %4315 = vmatprep.subr.mxu0 0.0
        %4316 = vmatpush1.msra.mxu0 0.0
        %4317 = vmatprep.subr.mxu0 0.0
        %4318 = vmatpush1.msra.mxu0 0.0
        %4319 = vmatprep.subr.mxu0 0.0
        %4320 = vmatpush1.msra.mxu0 0.0
        %4321 = vmatprep.subr.mxu0 0.0
        %4322 = vmatpush1.msra.mxu0 0.0
        %4323 = vmatprep.subr.mxu0 0.0
        %4324 = vmatpush1.msra.mxu0 0.0
        %4325 = vmatprep.subr.mxu0 0.0
        %4326 = vmatpush1.msra.mxu0 0.0
        %4327 = vmatprep.subr.mxu0 0.0
        %4328 = vmatpush1.msra.mxu0 0.0
        %4329 = vmatprep.subr.mxu0 0.0
        %4330 = vmatpush1.msra.mxu0 0.0
        %4331 = vmatprep.subr.mxu0 0.0
        %4332 = vmatpush1.msra.mxu0 0.0
        %4333 = vmatprep.subr.mxu0 0.0
        %4334 = vmatpush1.msra.mxu0 0.0
        %4335 = vmatprep.subr.mxu0 0.0
        %4336 = vmatpush1.msra.mxu0 0.0
        %4337 = vmatprep.subr.mxu0 0.0
        %4338 = vmatpush1.msra.mxu0 0.0
        %4339 = vmatprep.subr.mxu0 0.0
        %4340 = vmatpush1.msra.mxu0 0.0
        %4341 = vmatprep.subr.mxu0 0.0
        %4342 = vmatpush1.msra.mxu0 0.0
        %4343 = vmatprep.subr.mxu0 0.0
        %4344 = vmatpush1.msra.mxu0 0.0
        %4345 = vmatprep.subr.mxu0 0.0
        %4346 = vmatpush1.msra.mxu0 0.0
        %4347 = vmatprep.subr.mxu0 0.0
        %4348 = vmatpush1.msra.mxu0 0.0
        %4349 = vmatprep.subr.mxu0 0.0
        %4350 = vmatpush1.msra.mxu0 0.0
        %4351 = vmatprep.subr.mxu0 0.0
        %4352 = vmatpush1.msra.mxu0 0.0
        %4353 = vmatprep.mubr.f32.mxu0 0.0
        %4354 = vmatmul.mubr.f32.gmra.mrb[0].mxu0 %v4287
        %v4355 = vpop.f32.mrb[0].mxu0
        %v4356 = vadd.f32 0.0, %v4355
        %v4357 = vpop.f32.mrb[0].mxu0
        %4358 = vdwg.mxu0
        %v4359 = vadd.f32 %v4281, %v4356
        %s4360 = scalar_lea.vmem %s3, 24
        %v4361 = vld [vmem:[%s4360] sm:$0xff]
        %v4362 = vrot.slane %v1826, 1
        %v4363 = vsel %vm4139, %v4362, 0
        %4365 = vmatprep.subr.mxu0 0.0
        %4366 = vmatpush1.msra.mxu0 %v4361
        %4367 = vmatprep.subr.mxu0 0.0
        %4368 = vmatpush1.msra.mxu0 0.0
        %4369 = vmatprep.subr.mxu0 0.0
        %4370 = vmatpush1.msra.mxu0 0.0
        %4371 = vmatprep.subr.mxu0 0.0
        %4372 = vmatpush1.msra.mxu0 0.0
        %4373 = vmatprep.subr.mxu0 0.0
        %4374 = vmatpush1.msra.mxu0 0.0
        %4375 = vmatprep.subr.mxu0 0.0
        %4376 = vmatpush1.msra.mxu0 0.0
        %4377 = vmatprep.subr.mxu0 0.0
        %4378 = vmatpush1.msra.mxu0 0.0
        %4379 = vmatprep.subr.mxu0 0.0
        %4380 = vmatpush1.msra.mxu0 0.0
        %4381 = vmatprep.subr.mxu0 0.0
        %4382 = vmatpush1.msra.mxu0 0.0
        %4383 = vmatprep.subr.mxu0 0.0
        %4384 = vmatpush1.msra.mxu0 0.0
        %4385 = vmatprep.subr.mxu0 0.0
        %4386 = vmatpush1.msra.mxu0 0.0
        %4387 = vmatprep.subr.mxu0 0.0
        %4388 = vmatpush1.msra.mxu0 0.0
        %4389 = vmatprep.subr.mxu0 0.0
        %4390 = vmatpush1.msra.mxu0 0.0
        %4391 = vmatprep.subr.mxu0 0.0
        %4392 = vmatpush1.msra.mxu0 0.0
        %4393 = vmatprep.subr.mxu0 0.0
        %4394 = vmatpush1.msra.mxu0 0.0
        %4395 = vmatprep.subr.mxu0 0.0
        %4396 = vmatpush1.msra.mxu0 0.0
        %4397 = vmatprep.subr.mxu0 0.0
        %4398 = vmatpush1.msra.mxu0 0.0
        %4399 = vmatprep.subr.mxu0 0.0
        %4400 = vmatpush1.msra.mxu0 0.0
        %4401 = vmatprep.subr.mxu0 0.0
        %4402 = vmatpush1.msra.mxu0 0.0
        %4403 = vmatprep.subr.mxu0 0.0
        %4404 = vmatpush1.msra.mxu0 0.0
        %4405 = vmatprep.subr.mxu0 0.0
        %4406 = vmatpush1.msra.mxu0 0.0
        %4407 = vmatprep.subr.mxu0 0.0
        %4408 = vmatpush1.msra.mxu0 0.0
        %4409 = vmatprep.subr.mxu0 0.0
        %4410 = vmatpush1.msra.mxu0 0.0
        %4411 = vmatprep.subr.mxu0 0.0
        %4412 = vmatpush1.msra.mxu0 0.0
        %4413 = vmatprep.subr.mxu0 0.0
        %4414 = vmatpush1.msra.mxu0 0.0
        %4415 = vmatprep.subr.mxu0 0.0
        %4416 = vmatpush1.msra.mxu0 0.0
        %4417 = vmatprep.subr.mxu0 0.0
        %4418 = vmatpush1.msra.mxu0 0.0
        %4419 = vmatprep.subr.mxu0 0.0
        %4420 = vmatpush1.msra.mxu0 0.0
        %4421 = vmatprep.subr.mxu0 0.0
        %4422 = vmatpush1.msra.mxu0 0.0
        %4423 = vmatprep.subr.mxu0 0.0
        %4424 = vmatpush1.msra.mxu0 0.0
        %4425 = vmatprep.subr.mxu0 0.0
        %4426 = vmatpush1.msra.mxu0 0.0
        %4427 = vmatprep.subr.mxu0 0.0
        %4428 = vmatpush1.msra.mxu0 0.0
        %4429 = vmatprep.mubr.f32.mxu0 0.0
        %4430 = vmatmul.mubr.f32.gmra.mrb[0].mxu0 %v4363
        %v4431 = vpop.f32.mrb[0].mxu0
        %v4432 = vadd.f32 0.0, %v4431
        %v4433 = vpop.f32.mrb[0].mxu0
        %4434 = vdwg.mxu0
        %v4435 = vadd.f32 %v4359, %v4432
        %v4436 = vld [vmem:[%s4] sm:$0x1]
        %v4438 = vlaneseq
        %v4439 = vshrl.u32 %v4438, 7
        %v4440 = vsub.s32 0, %v4439
        %v4441 = vrot.slane %v4436, %v4440
        %v4443 = vadd.f32 %v4435, %v4441
        %v4444 = vmax.f32 %v4443, 0.0
        %vm4445 = vcmask 125952
        %v4446 = vsel %vm4445, %v4444, -inf
        %v4447 = vrot.slane %v4446, 4
        %v4448 = vmax.f32 %v4446, %v4447
        %v4449 = vrot.slane %v4448, 2
        %v4450 = vmax.f32 %v4448, %v4449
        %v4451 = vrot.slane %v4450, 1
        %v4452 = vmax.f32 %v4450, %v4451
        %4453 = vmatprep.subr.mxu0 0.0
        %4454 = vmatpush1.msra.mxu0 %v4136
        %4455 = vmatprep.subr.mxu0 0.0
        %4456 = vmatpush1.msra.mxu0 0.0
        %4457 = vmatprep.subr.mxu0 0.0
        %4458 = vmatpush1.msra.mxu0 0.0
        %4459 = vmatprep.subr.mxu0 0.0
        %4460 = vmatpush1.msra.mxu0 0.0
        %4461 = vmatprep.subr.mxu0 0.0
        %4462 = vmatpush1.msra.mxu0 0.0
        %4463 = vmatprep.subr.mxu0 0.0
        %4464 = vmatpush1.msra.mxu0 0.0
        %4465 = vmatprep.subr.mxu0 0.0
        %4466 = vmatpush1.msra.mxu0 0.0
        %4467 = vmatprep.subr.mxu0 0.0
        %4468 = vmatpush1.msra.mxu0 0.0
        %4469 = vmatprep.subr.mxu0 0.0
        %4470 = vmatpush1.msra.mxu0 0.0
        %4471 = vmatprep.subr.mxu0 0.0
        %4472 = vmatpush1.msra.mxu0 0.0
        %4473 = vmatprep.subr.mxu0 0.0
        %4474 = vmatpush1.msra.mxu0 0.0
        %4475 = vmatprep.subr.mxu0 0.0
        %4476 = vmatpush1.msra.mxu0 0.0
        %4477 = vmatprep.subr.mxu0 0.0
        %4478 = vmatpush1.msra.mxu0 0.0
        %4479 = vmatprep.subr.mxu0 0.0
        %4480 = vmatpush1.msra.mxu0 0.0
        %4481 = vmatprep.subr.mxu0 0.0
        %4482 = vmatpush1.msra.mxu0 0.0
        %4483 = vmatprep.subr.mxu0 0.0
        %4484 = vmatpush1.msra.mxu0 0.0
        %4485 = vmatprep.subr.mxu0 0.0
        %4486 = vmatpush1.msra.mxu0 0.0
        %4487 = vmatprep.subr.mxu0 0.0
        %4488 = vmatpush1.msra.mxu0 0.0
        %4489 = vmatprep.subr.mxu0 0.0
        %4490 = vmatpush1.msra.mxu0 0.0
        %4491 = vmatprep.subr.mxu0 0.0
        %4492 = vmatpush1.msra.mxu0 0.0
        %4493 = vmatprep.subr.mxu0 0.0
        %4494 = vmatpush1.msra.mxu0 0.0
        %4495 = vmatprep.subr.mxu0 0.0
        %4496 = vmatpush1.msra.mxu0 0.0
        %4497 = vmatprep.subr.mxu0 0.0
        %4498 = vmatpush1.msra.mxu0 0.0
        %4499 = vmatprep.subr.mxu0 0.0
        %4500 = vmatpush1.msra.mxu0 0.0
        %4501 = vmatprep.subr.mxu0 0.0
        %4502 = vmatpush1.msra.mxu0 0.0
        %4503 = vmatprep.subr.mxu0 0.0
        %4504 = vmatpush1.msra.mxu0 0.0
        %4505 = vmatprep.subr.mxu0 0.0
        %4506 = vmatpush1.msra.mxu0 0.0
        %4507 = vmatprep.subr.mxu0 0.0
        %4508 = vmatpush1.msra.mxu0 0.0
        %4509 = vmatprep.subr.mxu0 0.0
        %4510 = vmatpush1.msra.mxu0 0.0
        %4511 = vmatprep.subr.mxu0 0.0
        %4512 = vmatpush1.msra.mxu0 0.0
        %4513 = vmatprep.subr.mxu0 0.0
        %4514 = vmatpush1.msra.mxu0 0.0
        %4515 = vmatprep.subr.mxu0 0.0
        %4516 = vmatpush1.msra.mxu0 0.0
        %4517 = vmatprep.mubr.f32.mxu0 0.0
        %4518 = vmatmul.mubr.f32.gmra.mrb[0].mxu0 %v4363
        %v4519 = vpop.f32.mrb[0].mxu0
        %v4520 = vadd.f32 0.0, %v4519
        %v4521 = vpop.f32.mrb[0].mxu0
        %4522 = vdwg.mxu0
        %4523 = vmatprep.subr.mxu0 0.0
        %4524 = vmatpush1.msra.mxu0 %v4134
        %4525 = vmatprep.subr.mxu0 0.0
        %4526 = vmatpush1.msra.mxu0 0.0
        %4527 = vmatprep.subr.mxu0 0.0
        %4528 = vmatpush1.msra.mxu0 0.0
        %4529 = vmatprep.subr.mxu0 0.0
        %4530 = vmatpush1.msra.mxu0 0.0
        %4531 = vmatprep.subr.mxu0 0.0
        %4532 = vmatpush1.msra.mxu0 0.0
        %4533 = vmatprep.subr.mxu0 0.0
        %4534 = vmatpush1.msra.mxu0 0.0
        %4535 = vmatprep.subr.mxu0 0.0
        %4536 = vmatpush1.msra.mxu0 0.0
        %4537 = vmatprep.subr.mxu0 0.0
        %4538 = vmatpush1.msra.mxu0 0.0
        %4539 = vmatprep.subr.mxu0 0.0
        %4540 = vmatpush1.msra.mxu0 0.0
        %4541 = vmatprep.subr.mxu0 0.0
        %4542 = vmatpush1.msra.mxu0 0.0
        %4543 = vmatprep.subr.mxu0 0.0
        %4544 = vmatpush1.msra.mxu0 0.0
        %4545 = vmatprep.subr.mxu0 0.0
        %4546 = vmatpush1.msra.mxu0 0.0
        %4547 = vmatprep.subr.mxu0 0.0
        %4548 = vmatpush1.msra.mxu0 0.0
        %4549 = vmatprep.subr.mxu0 0.0
        %4550 = vmatpush1.msra.mxu0 0.0
        %4551 = vmatprep.subr.mxu0 0.0
        %4552 = vmatpush1.msra.mxu0 0.0
        %4553 = vmatprep.subr.mxu0 0.0
        %4554 = vmatpush1.msra.mxu0 0.0
        %4555 = vmatprep.subr.mxu0 0.0
        %4556 = vmatpush1.msra.mxu0 0.0
        %4557 = vmatprep.subr.mxu0 0.0
        %4558 = vmatpush1.msra.mxu0 0.0
        %4559 = vmatprep.subr.mxu0 0.0
        %4560 = vmatpush1.msra.mxu0 0.0
        %4561 = vmatprep.subr.mxu0 0.0
        %4562 = vmatpush1.msra.mxu0 0.0
        %4563 = vmatprep.subr.mxu0 0.0
        %4564 = vmatpush1.msra.mxu0 0.0
        %4565 = vmatprep.subr.mxu0 0.0
        %4566 = vmatpush1.msra.mxu0 0.0
        %4567 = vmatprep.subr.mxu0 0.0
        %4568 = vmatpush1.msra.mxu0 0.0
        %4569 = vmatprep.subr.mxu0 0.0
        %4570 = vmatpush1.msra.mxu0 0.0
        %4571 = vmatprep.subr.mxu0 0.0
        %4572 = vmatpush1.msra.mxu0 0.0
        %4573 = vmatprep.subr.mxu0 0.0
        %4574 = vmatpush1.msra.mxu0 0.0
        %4575 = vmatprep.subr.mxu0 0.0
        %4576 = vmatpush1.msra.mxu0 0.0
        %4577 = vmatprep.subr.mxu0 0.0
        %4578 = vmatpush1.msra.mxu0 0.0
        %4579 = vmatprep.subr.mxu0 0.0
        %4580 = vmatpush1.msra.mxu0 0.0
        %4581 = vmatprep.subr.mxu0 0.0
        %4582 = vmatpush1.msra.mxu0 0.0
        %4583 = vmatprep.subr.mxu0 0.0
        %4584 = vmatpush1.msra.mxu0 0.0
        %4585 = vmatprep.subr.mxu0 0.0
        %4586 = vmatpush1.msra.mxu0 0.0
        %4587 = vmatprep.mubr.f32.mxu0 0.0
        %4588 = vmatmul.mubr.f32.gmra.mrb[0].mxu0 %v4287
        %v4589 = vpop.f32.mrb[0].mxu0
        %v4590 = vadd.f32 %v4520, %v4589
        %v4591 = vpop.f32.mrb[0].mxu0
        %4592 = vdwg.mxu0
        %v4594 = vsel %vm4139, %v2595, 0
        %4596 = vmatprep.subr.mxu0 0.0
        %4597 = vmatpush1.msra.mxu0 %v4285
        %4598 = vmatprep.subr.mxu0 0.0
        %4599 = vmatpush1.msra.mxu0 0.0
        %4600 = vmatprep.subr.mxu0 0.0
        %4601 = vmatpush1.msra.mxu0 0.0
        %4602 = vmatprep.subr.mxu0 0.0
        %4603 = vmatpush1.msra.mxu0 0.0
        %4604 = vmatprep.subr.mxu0 0.0
        %4605 = vmatpush1.msra.mxu0 0.0
        %4606 = vmatprep.subr.mxu0 0.0
        %4607 = vmatpush1.msra.mxu0 0.0
        %4608 = vmatprep.subr.mxu0 0.0
        %4609 = vmatpush1.msra.mxu0 0.0
        %4610 = vmatprep.subr.mxu0 0.0
        %4611 = vmatpush1.msra.mxu0 0.0
        %4612 = vmatprep.subr.mxu0 0.0
        %4613 = vmatpush1.msra.mxu0 0.0
        %4614 = vmatprep.subr.mxu0 0.0
        %4615 = vmatpush1.msra.mxu0 0.0
        %4616 = vmatprep.subr.mxu0 0.0
        %4617 = vmatpush1.msra.mxu0 0.0
        %4618 = vmatprep.subr.mxu0 0.0
        %4619 = vmatpush1.msra.mxu0 0.0
        %4620 = vmatprep.subr.mxu0 0.0
        %4621 = vmatpush1.msra.mxu0 0.0
        %4622 = vmatprep.subr.mxu0 0.0
        %4623 = vmatpush1.msra.mxu0 0.0
        %4624 = vmatprep.subr.mxu0 0.0
        %4625 = vmatpush1.msra.mxu0 0.0
        %4626 = vmatprep.subr.mxu0 0.0
        %4627 = vmatpush1.msra.mxu0 0.0
        %4628 = vmatprep.subr.mxu0 0.0
        %4629 = vmatpush1.msra.mxu0 0.0
        %4630 = vmatprep.subr.mxu0 0.0
        %4631 = vmatpush1.msra.mxu0 0.0
        %4632 = vmatprep.subr.mxu0 0.0
        %4633 = vmatpush1.msra.mxu0 0.0
        %4634 = vmatprep.subr.mxu0 0.0
        %4635 = vmatpush1.msra.mxu0 0.0
        %4636 = vmatprep.subr.mxu0 0.0
        %4637 = vmatpush1.msra.mxu0 0.0
        %4638 = vmatprep.subr.mxu0 0.0
        %4639 = vmatpush1.msra.mxu0 0.0
        %4640 = vmatprep.subr.mxu0 0.0
        %4641 = vmatpush1.msra.mxu0 0.0
        %4642 = vmatprep.subr.mxu0 0.0
        %4643 = vmatpush1.msra.mxu0 0.0
        %4644 = vmatprep.subr.mxu0 0.0
        %4645 = vmatpush1.msra.mxu0 0.0
        %4646 = vmatprep.subr.mxu0 0.0
        %4647 = vmatpush1.msra.mxu0 0.0
        %4648 = vmatprep.subr.mxu0 0.0
        %4649 = vmatpush1.msra.mxu0 0.0
        %4650 = vmatprep.subr.mxu0 0.0
        %4651 = vmatpush1.msra.mxu0 0.0
        %4652 = vmatprep.subr.mxu0 0.0
        %4653 = vmatpush1.msra.mxu0 0.0
        %4654 = vmatprep.subr.mxu0 0.0
        %4655 = vmatpush1.msra.mxu0 0.0
        %4656 = vmatprep.subr.mxu0 0.0
        %4657 = vmatpush1.msra.mxu0 0.0
        %4658 = vmatprep.subr.mxu0 0.0
        %4659 = vmatpush1.msra.mxu0 0.0
        %4660 = vmatprep.mubr.f32.mxu0 0.0
        %4661 = vmatmul.mubr.f32.gmra.mrb[0].mxu0 %v4594
        %v4662 = vpop.f32.mrb[0].mxu0
        %v4663 = vadd.f32 0.0, %v4662
        %v4664 = vpop.f32.mrb[0].mxu0
        %4665 = vdwg.mxu0
        %v4666 = vadd.f32 %v4590, %v4663
        %v4667 = vrot.slane %v2595, 1
        %v4668 = vsel %vm4139, %v4667, 0
        %4670 = vmatprep.subr.mxu0 0.0
        %4671 = vmatpush1.msra.mxu0 %v4361
        %4672 = vmatprep.subr.mxu0 0.0
        %4673 = vmatpush1.msra.mxu0 0.0
        %4674 = vmatprep.subr.mxu0 0.0
        %4675 = vmatpush1.msra.mxu0 0.0
        %4676 = vmatprep.subr.mxu0 0.0
        %4677 = vmatpush1.msra.mxu0 0.0
        %4678 = vmatprep.subr.mxu0 0.0
        %4679 = vmatpush1.msra.mxu0 0.0
        %4680 = vmatprep.subr.mxu0 0.0
        %4681 = vmatpush1.msra.mxu0 0.0
        %4682 = vmatprep.subr.mxu0 0.0
        %4683 = vmatpush1.msra.mxu0 0.0
        %4684 = vmatprep.subr.mxu0 0.0
        %4685 = vmatpush1.msra.mxu0 0.0
        %4686 = vmatprep.subr.mxu0 0.0
        %4687 = vmatpush1.msra.mxu0 0.0
        %4688 = vmatprep.subr.mxu0 0.0
        %4689 = vmatpush1.msra.mxu0 0.0
        %4690 = vmatprep.subr.mxu0 0.0
        %4691 = vmatpush1.msra.mxu0 0.0
        %4692 = vmatprep.subr.mxu0 0.0
        %4693 = vmatpush1.msra.mxu0 0.0
        %4694 = vmatprep.subr.mxu0 0.0
        %4695 = vmatpush1.msra.mxu0 0.0
        %4696 = vmatprep.subr.mxu0 0.0
        %4697 = vmatpush1.msra.mxu0 0.0
        %4698 = vmatprep.subr.mxu0 0.0
        %4699 = vmatpush1.msra.mxu0 0.0
        %4700 = vmatprep.subr.mxu0 0.0
        %4701 = vmatpush1.msra.mxu0 0.0
        %4702 = vmatprep.subr.mxu0 0.0
        %4703 = vmatpush1.msra.mxu0 0.0
        %4704 = vmatprep.subr.mxu0 0.0
        %4705 = vmatpush1.msra.mxu0 0.0
        %4706 = vmatprep.subr.mxu0 0.0
        %4707 = vmatpush1.msra.mxu0 0.0
        %4708 = vmatprep.subr.mxu0 0.0
        %4709 = vmatpush1.msra.mxu0 0.0
        %4710 = vmatprep.subr.mxu0 0.0
        %4711 = vmatpush1.msra.mxu0 0.0
        %4712 = vmatprep.subr.mxu0 0.0
        %4713 = vmatpush1.msra.mxu0 0.0
        %4714 = vmatprep.subr.mxu0 0.0
        %4715 = vmatpush1.msra.mxu0 0.0
        %4716 = vmatprep.subr.mxu0 0.0
        %4717 = vmatpush1.msra.mxu0 0.0
        %4718 = vmatprep.subr.mxu0 0.0
        %4719 = vmatpush1.msra.mxu0 0.0
        %4720 = vmatprep.subr.mxu0 0.0
        %4721 = vmatpush1.msra.mxu0 0.0
        %4722 = vmatprep.subr.mxu0 0.0
        %4723 = vmatpush1.msra.mxu0 0.0
        %4724 = vmatprep.subr.mxu0 0.0
        %4725 = vmatpush1.msra.mxu0 0.0
        %4726 = vmatprep.subr.mxu0 0.0
        %4727 = vmatpush1.msra.mxu0 0.0
        %4728 = vmatprep.subr.mxu0 0.0
        %4729 = vmatpush1.msra.mxu0 0.0
        %4730 = vmatprep.subr.mxu0 0.0
        %4731 = vmatpush1.msra.mxu0 0.0
        %4732 = vmatprep.subr.mxu0 0.0
        %4733 = vmatpush1.msra.mxu0 0.0
        %4734 = vmatprep.mubr.f32.mxu0 0.0
        %4735 = vmatmul.mubr.f32.gmra.mrb[0].mxu0 %v4668
        %v4736 = vpop.f32.mrb[0].mxu0
        %v4737 = vadd.f32 0.0, %v4736
        %v4738 = vpop.f32.mrb[0].mxu0
        %4739 = vdwg.mxu0
        %v4740 = vadd.f32 %v4666, %v4737
        %v4741 = vadd.f32 %v4740, %v4441
        %v4742 = vmax.f32 %v4741, 0.0
        %v4743 = vsel %vm4445, %v4742, -inf
        %v4744 = vrot.slane %v4743, 4
        %v4745 = vmax.f32 %v4743, %v4744
        %v4746 = vrot.slane %v4745, 2
        %v4747 = vmax.f32 %v4745, %v4746
        %v4748 = vrot.slane %v4747, 1
        %v4749 = vmax.f32 %v4747, %v4748
        %v4750 = vmax.f32 %v4452, %v4749
        %4751 = vmatprep.subr.mxu0 0.0
        %4752 = vmatpush1.msra.mxu0 %v4136
        %4753 = vmatprep.subr.mxu0 0.0
        %4754 = vmatpush1.msra.mxu0 0.0
        %4755 = vmatprep.subr.mxu0 0.0
        %4756 = vmatpush1.msra.mxu0 0.0
        %4757 = vmatprep.subr.mxu0 0.0
        %4758 = vmatpush1.msra.mxu0 0.0
        %4759 = vmatprep.subr.mxu0 0.0
        %4760 = vmatpush1.msra.mxu0 0.0
        %4761 = vmatprep.subr.mxu0 0.0
        %4762 = vmatpush1.msra.mxu0 0.0
        %4763 = vmatprep.subr.mxu0 0.0
        %4764 = vmatpush1.msra.mxu0 0.0
        %4765 = vmatprep.subr.mxu0 0.0
        %4766 = vmatpush1.msra.mxu0 0.0
        %4767 = vmatprep.subr.mxu0 0.0
        %4768 = vmatpush1.msra.mxu0 0.0
        %4769 = vmatprep.subr.mxu0 0.0
        %4770 = vmatpush1.msra.mxu0 0.0
        %4771 = vmatprep.subr.mxu0 0.0
        %4772 = vmatpush1.msra.mxu0 0.0
        %4773 = vmatprep.subr.mxu0 0.0
        %4774 = vmatpush1.msra.mxu0 0.0
        %4775 = vmatprep.subr.mxu0 0.0
        %4776 = vmatpush1.msra.mxu0 0.0
        %4777 = vmatprep.subr.mxu0 0.0
        %4778 = vmatpush1.msra.mxu0 0.0
        %4779 = vmatprep.subr.mxu0 0.0
        %4780 = vmatpush1.msra.mxu0 0.0
        %4781 = vmatprep.subr.mxu0 0.0
        %4782 = vmatpush1.msra.mxu0 0.0
        %4783 = vmatprep.subr.mxu0 0.0
        %4784 = vmatpush1.msra.mxu0 0.0
        %4785 = vmatprep.subr.mxu0 0.0
        %4786 = vmatpush1.msra.mxu0 0.0
        %4787 = vmatprep.subr.mxu0 0.0
        %4788 = vmatpush1.msra.mxu0 0.0
        %4789 = vmatprep.subr.mxu0 0.0
        %4790 = vmatpush1.msra.mxu0 0.0
        %4791 = vmatprep.subr.mxu0 0.0
        %4792 = vmatpush1.msra.mxu0 0.0
        %4793 = vmatprep.subr.mxu0 0.0
        %4794 = vmatpush1.msra.mxu0 0.0
        %4795 = vmatprep.subr.mxu0 0.0
        %4796 = vmatpush1.msra.mxu0 0.0
        %4797 = vmatprep.subr.mxu0 0.0
        %4798 = vmatpush1.msra.mxu0 0.0
        %4799 = vmatprep.subr.mxu0 0.0
        %4800 = vmatpush1.msra.mxu0 0.0
        %4801 = vmatprep.subr.mxu0 0.0
        %4802 = vmatpush1.msra.mxu0 0.0
        %4803 = vmatprep.subr.mxu0 0.0
        %4804 = vmatpush1.msra.mxu0 0.0
        %4805 = vmatprep.subr.mxu0 0.0
        %4806 = vmatpush1.msra.mxu0 0.0
        %4807 = vmatprep.subr.mxu0 0.0
        %4808 = vmatpush1.msra.mxu0 0.0
        %4809 = vmatprep.subr.mxu0 0.0
        %4810 = vmatpush1.msra.mxu0 0.0
        %4811 = vmatprep.subr.mxu0 0.0
        %4812 = vmatpush1.msra.mxu0 0.0
        %4813 = vmatprep.subr.mxu0 0.0
        %4814 = vmatpush1.msra.mxu0 0.0
        %4815 = vmatprep.mubr.f32.mxu0 0.0
        %4816 = vmatmul.mubr.f32.gmra.mrb[0].mxu0 %v4668
        %v4817 = vpop.f32.mrb[0].mxu0
        %v4818 = vadd.f32 0.0, %v4817
        %v4819 = vpop.f32.mrb[0].mxu0
        %4820 = vdwg.mxu0
        %4821 = vmatprep.subr.mxu0 0.0
        %4822 = vmatpush1.msra.mxu0 %v4134
        %4823 = vmatprep.subr.mxu0 0.0
        %4824 = vmatpush1.msra.mxu0 0.0
        %4825 = vmatprep.subr.mxu0 0.0
        %4826 = vmatpush1.msra.mxu0 0.0
        %4827 = vmatprep.subr.mxu0 0.0
        %4828 = vmatpush1.msra.mxu0 0.0
        %4829 = vmatprep.subr.mxu0 0.0
        %4830 = vmatpush1.msra.mxu0 0.0
        %4831 = vmatprep.subr.mxu0 0.0
        %4832 = vmatpush1.msra.mxu0 0.0
        %4833 = vmatprep.subr.mxu0 0.0
        %4834 = vmatpush1.msra.mxu0 0.0
        %4835 = vmatprep.subr.mxu0 0.0
        %4836 = vmatpush1.msra.mxu0 0.0
        %4837 = vmatprep.subr.mxu0 0.0
        %4838 = vmatpush1.msra.mxu0 0.0
        %4839 = vmatprep.subr.mxu0 0.0
        %4840 = vmatpush1.msra.mxu0 0.0
        %4841 = vmatprep.subr.mxu0 0.0
        %4842 = vmatpush1.msra.mxu0 0.0
        %4843 = vmatprep.subr.mxu0 0.0
        %4844 = vmatpush1.msra.mxu0 0.0
        %4845 = vmatprep.subr.mxu0 0.0
        %4846 = vmatpush1.msra.mxu0 0.0
        %4847 = vmatprep.subr.mxu0 0.0
        %4848 = vmatpush1.msra.mxu0 0.0
        %4849 = vmatprep.subr.mxu0 0.0
        %4850 = vmatpush1.msra.mxu0 0.0
        %4851 = vmatprep.subr.mxu0 0.0
        %4852 = vmatpush1.msra.mxu0 0.0
        %4853 = vmatprep.subr.mxu0 0.0
        %4854 = vmatpush1.msra.mxu0 0.0
        %4855 = vmatprep.subr.mxu0 0.0
        %4856 = vmatpush1.msra.mxu0 0.0
        %4857 = vmatprep.subr.mxu0 0.0
        %4858 = vmatpush1.msra.mxu0 0.0
        %4859 = vmatprep.subr.mxu0 0.0
        %4860 = vmatpush1.msra.mxu0 0.0
        %4861 = vmatprep.subr.mxu0 0.0
        %4862 = vmatpush1.msra.mxu0 0.0
        %4863 = vmatprep.subr.mxu0 0.0
        %4864 = vmatpush1.msra.mxu0 0.0
        %4865 = vmatprep.subr.mxu0 0.0
        %4866 = vmatpush1.msra.mxu0 0.0
        %4867 = vmatprep.subr.mxu0 0.0
        %4868 = vmatpush1.msra.mxu0 0.0
        %4869 = vmatprep.subr.mxu0 0.0
        %4870 = vmatpush1.msra.mxu0 0.0
        %4871 = vmatprep.subr.mxu0 0.0
        %4872 = vmatpush1.msra.mxu0 0.0
        %4873 = vmatprep.subr.mxu0 0.0
        %4874 = vmatpush1.msra.mxu0 0.0
        %4875 = vmatprep.subr.mxu0 0.0
        %4876 = vmatpush1.msra.mxu0 0.0
        %4877 = vmatprep.subr.mxu0 0.0
        %4878 = vmatpush1.msra.mxu0 0.0
        %4879 = vmatprep.subr.mxu0 0.0
        %4880 = vmatpush1.msra.mxu0 0.0
        %4881 = vmatprep.subr.mxu0 0.0
        %4882 = vmatpush1.msra.mxu0 0.0
        %4883 = vmatprep.subr.mxu0 0.0
        %4884 = vmatpush1.msra.mxu0 0.0
        %4885 = vmatprep.mubr.f32.mxu0 0.0
        %4886 = vmatmul.mubr.f32.gmra.mrb[0].mxu0 %v4594
        %v4887 = vpop.f32.mrb[0].mxu0
        %v4888 = vadd.f32 %v4818, %v4887
        %v4889 = vpop.f32.mrb[0].mxu0
        %4890 = vdwg.mxu0
        %v4892 = vsel %vm4139, %v3364, 0
        %4894 = vmatprep.subr.mxu0 0.0
        %4895 = vmatpush1.msra.mxu0 %v4285
        %4896 = vmatprep.subr.mxu0 0.0
        %4897 = vmatpush1.msra.mxu0 0.0
        %4898 = vmatprep.subr.mxu0 0.0
        %4899 = vmatpush1.msra.mxu0 0.0
        %4900 = vmatprep.subr.mxu0 0.0
        %4901 = vmatpush1.msra.mxu0 0.0
        %4902 = vmatprep.subr.mxu0 0.0
        %4903 = vmatpush1.msra.mxu0 0.0
        %4904 = vmatprep.subr.mxu0 0.0
        %4905 = vmatpush1.msra.mxu0 0.0
        %4906 = vmatprep.subr.mxu0 0.0
        %4907 = vmatpush1.msra.mxu0 0.0
        %4908 = vmatprep.subr.mxu0 0.0
        %4909 = vmatpush1.msra.mxu0 0.0
        %4910 = vmatprep.subr.mxu0 0.0
        %4911 = vmatpush1.msra.mxu0 0.0
        %4912 = vmatprep.subr.mxu0 0.0
        %4913 = vmatpush1.msra.mxu0 0.0
        %4914 = vmatprep.subr.mxu0 0.0
        %4915 = vmatpush1.msra.mxu0 0.0
        %4916 = vmatprep.subr.mxu0 0.0
        %4917 = vmatpush1.msra.mxu0 0.0
        %4918 = vmatprep.subr.mxu0 0.0
        %4919 = vmatpush1.msra.mxu0 0.0
        %4920 = vmatprep.subr.mxu0 0.0
        %4921 = vmatpush1.msra.mxu0 0.0
        %4922 = vmatprep.subr.mxu0 0.0
        %4923 = vmatpush1.msra.mxu0 0.0
        %4924 = vmatprep.subr.mxu0 0.0
        %4925 = vmatpush1.msra.mxu0 0.0
        %4926 = vmatprep.subr.mxu0 0.0
        %4927 = vmatpush1.msra.mxu0 0.0
        %4928 = vmatprep.subr.mxu0 0.0
        %4929 = vmatpush1.msra.mxu0 0.0
        %4930 = vmatprep.subr.mxu0 0.0
        %4931 = vmatpush1.msra.mxu0 0.0
        %4932 = vmatprep.subr.mxu0 0.0
        %4933 = vmatpush1.msra.mxu0 0.0
        %4934 = vmatprep.subr.mxu0 0.0
        %4935 = vmatpush1.msra.mxu0 0.0
        %4936 = vmatprep.subr.mxu0 0.0
        %4937 = vmatpush1.msra.mxu0 0.0
        %4938 = vmatprep.subr.mxu0 0.0
        %4939 = vmatpush1.msra.mxu0 0.0
        %4940 = vmatprep.subr.mxu0 0.0
        %4941 = vmatpush1.msra.mxu0 0.0
        %4942 = vmatprep.subr.mxu0 0.0
        %4943 = vmatpush1.msra.mxu0 0.0
        %4944 = vmatprep.subr.mxu0 0.0
        %4945 = vmatpush1.msra.mxu0 0.0
        %4946 = vmatprep.subr.mxu0 0.0
        %4947 = vmatpush1.msra.mxu0 0.0
        %4948 = vmatprep.subr.mxu0 0.0
        %4949 = vmatpush1.msra.mxu0 0.0
        %4950 = vmatprep.subr.mxu0 0.0
        %4951 = vmatpush1.msra.mxu0 0.0
        %4952 = vmatprep.subr.mxu0 0.0
        %4953 = vmatpush1.msra.mxu0 0.0
        %4954 = vmatprep.subr.mxu0 0.0
        %4955 = vmatpush1.msra.mxu0 0.0
        %4956 = vmatprep.subr.mxu0 0.0
        %4957 = vmatpush1.msra.mxu0 0.0
        %4958 = vmatprep.mubr.f32.mxu0 0.0
        %4959 = vmatmul.mubr.f32.gmra.mrb[0].mxu0 %v4892
        %v4960 = vpop.f32.mrb[0].mxu0
        %v4961 = vadd.f32 0.0, %v4960
        %v4962 = vpop.f32.mrb[0].mxu0
        %4963 = vdwg.mxu0
        %v4964 = vadd.f32 %v4888, %v4961
        %v4965 = vrot.slane %v3364, 1
        %v4966 = vsel %vm4139, %v4965, 0
        %4968 = vmatprep.subr.mxu0 0.0
        %4969 = vmatpush1.msra.mxu0 %v4361
        %4970 = vmatprep.subr.mxu0 0.0
        %4971 = vmatpush1.msra.mxu0 0.0
        %4972 = vmatprep.subr.mxu0 0.0
        %4973 = vmatpush1.msra.mxu0 0.0
        %4974 = vmatprep.subr.mxu0 0.0
        %4975 = vmatpush1.msra.mxu0 0.0
        %4976 = vmatprep.subr.mxu0 0.0
        %4977 = vmatpush1.msra.mxu0 0.0
        %4978 = vmatprep.subr.mxu0 0.0
        %4979 = vmatpush1.msra.mxu0 0.0
        %4980 = vmatprep.subr.mxu0 0.0
        %4981 = vmatpush1.msra.mxu0 0.0
        %4982 = vmatprep.subr.mxu0 0.0
        %4983 = vmatpush1.msra.mxu0 0.0
        %4984 = vmatprep.subr.mxu0 0.0
        %4985 = vmatpush1.msra.mxu0 0.0
        %4986 = vmatprep.subr.mxu0 0.0
        %4987 = vmatpush1.msra.mxu0 0.0
        %4988 = vmatprep.subr.mxu0 0.0
        %4989 = vmatpush1.msra.mxu0 0.0
        %4990 = vmatprep.subr.mxu0 0.0
        %4991 = vmatpush1.msra.mxu0 0.0
        %4992 = vmatprep.subr.mxu0 0.0
        %4993 = vmatpush1.msra.mxu0 0.0
        %4994 = vmatprep.subr.mxu0 0.0
        %4995 = vmatpush1.msra.mxu0 0.0
        %4996 = vmatprep.subr.mxu0 0.0
        %4997 = vmatpush1.msra.mxu0 0.0
        %4998 = vmatprep.subr.mxu0 0.0
        %4999 = vmatpush1.msra.mxu0 0.0
        %5000 = vmatprep.subr.mxu0 0.0
        %5001 = vmatpush1.msra.mxu0 0.0
        %5002 = vmatprep.subr.mxu0 0.0
        %5003 = vmatpush1.msra.mxu0 0.0
        %5004 = vmatprep.subr.mxu0 0.0
        %5005 = vmatpush1.msra.mxu0 0.0
        %5006 = vmatprep.subr.mxu0 0.0
        %5007 = vmatpush1.msra.mxu0 0.0
        %5008 = vmatprep.subr.mxu0 0.0
        %5009 = vmatpush1.msra.mxu0 0.0
        %5010 = vmatprep.subr.mxu0 0.0
        %5011 = vmatpush1.msra.mxu0 0.0
        %5012 = vmatprep.subr.mxu0 0.0
        %5013 = vmatpush1.msra.mxu0 0.0
        %5014 = vmatprep.subr.mxu0 0.0
        %5015 = vmatpush1.msra.mxu0 0.0
        %5016 = vmatprep.subr.mxu0 0.0
        %5017 = vmatpush1.msra.mxu0 0.0
        %5018 = vmatprep.subr.mxu0 0.0
        %5019 = vmatpush1.msra.mxu0 0.0
        %5020 = vmatprep.subr.mxu0 0.0
        %5021 = vmatpush1.msra.mxu0 0.0
        %5022 = vmatprep.subr.mxu0 0.0
        %5023 = vmatpush1.msra.mxu0 0.0
        %5024 = vmatprep.subr.mxu0 0.0
        %5025 = vmatpush1.msra.mxu0 0.0
        %5026 = vmatprep.subr.mxu0 0.0
        %5027 = vmatpush1.msra.mxu0 0.0
        %5028 = vmatprep.subr.mxu0 0.0
        %5029 = vmatpush1.msra.mxu0 0.0
        %5030 = vmatprep.subr.mxu0 0.0
        %5031 = vmatpush1.msra.mxu0 0.0
        %5032 = vmatprep.mubr.f32.mxu0 0.0
        %5033 = vmatmul.mubr.f32.gmra.mrb[0].mxu0 %v4966
        %v5034 = vpop.f32.mrb[0].mxu0
        %v5035 = vadd.f32 0.0, %v5034
        %v5036 = vpop.f32.mrb[0].mxu0
        %5037 = vdwg.mxu0
        %v5038 = vadd.f32 %v4964, %v5035
        %v5039 = vadd.f32 %v5038, %v4441
        %v5040 = vmax.f32 %v5039, 0.0
        %v5041 = vsel %vm4445, %v5040, -inf
        %v5042 = vrot.slane %v5041, 4
        %v5043 = vmax.f32 %v5041, %v5042
        %v5044 = vrot.slane %v5043, 2
        %v5045 = vmax.f32 %v5043, %v5044
        %v5046 = vrot.slane %v5045, 1
        %v5047 = vmax.f32 %v5045, %v5046
        %v5048 = vmax.f32 %v4750, %v5047
        %5049 = vmatprep.subr.mxu0 0.0
        %5050 = vmatpush1.msra.mxu0 %v4136
        %5051 = vmatprep.subr.mxu0 0.0
        %5052 = vmatpush1.msra.mxu0 0.0
        %5053 = vmatprep.subr.mxu0 0.0
        %5054 = vmatpush1.msra.mxu0 0.0
        %5055 = vmatprep.subr.mxu0 0.0
        %5056 = vmatpush1.msra.mxu0 0.0
        %5057 = vmatprep.subr.mxu0 0.0
        %5058 = vmatpush1.msra.mxu0 0.0
        %5059 = vmatprep.subr.mxu0 0.0
        %5060 = vmatpush1.msra.mxu0 0.0
        %5061 = vmatprep.subr.mxu0 0.0
        %5062 = vmatpush1.msra.mxu0 0.0
        %5063 = vmatprep.subr.mxu0 0.0
        %5064 = vmatpush1.msra.mxu0 0.0
        %5065 = vmatprep.subr.mxu0 0.0
        %5066 = vmatpush1.msra.mxu0 0.0
        %5067 = vmatprep.subr.mxu0 0.0
        %5068 = vmatpush1.msra.mxu0 0.0
        %5069 = vmatprep.subr.mxu0 0.0
        %5070 = vmatpush1.msra.mxu0 0.0
        %5071 = vmatprep.subr.mxu0 0.0
        %5072 = vmatpush1.msra.mxu0 0.0
        %5073 = vmatprep.subr.mxu0 0.0
        %5074 = vmatpush1.msra.mxu0 0.0
        %5075 = vmatprep.subr.mxu0 0.0
        %5076 = vmatpush1.msra.mxu0 0.0
        %5077 = vmatprep.subr.mxu0 0.0
        %5078 = vmatpush1.msra.mxu0 0.0
        %5079 = vmatprep.subr.mxu0 0.0
        %5080 = vmatpush1.msra.mxu0 0.0
        %5081 = vmatprep.subr.mxu0 0.0
        %5082 = vmatpush1.msra.mxu0 0.0
        %5083 = vmatprep.subr.mxu0 0.0
        %5084 = vmatpush1.msra.mxu0 0.0
        %5085 = vmatprep.subr.mxu0 0.0
        %5086 = vmatpush1.msra.mxu0 0.0
        %5087 = vmatprep.subr.mxu0 0.0
        %5088 = vmatpush1.msra.mxu0 0.0
        %5089 = vmatprep.subr.mxu0 0.0
        %5090 = vmatpush1.msra.mxu0 0.0
        %5091 = vmatprep.subr.mxu0 0.0
        %5092 = vmatpush1.msra.mxu0 0.0
        %5093 = vmatprep.subr.mxu0 0.0
        %5094 = vmatpush1.msra.mxu0 0.0
        %5095 = vmatprep.subr.mxu0 0.0
        %5096 = vmatpush1.msra.mxu0 0.0
        %5097 = vmatprep.subr.mxu0 0.0
        %5098 = vmatpush1.msra.mxu0 0.0
        %5099 = vmatprep.subr.mxu0 0.0
        %5100 = vmatpush1.msra.mxu0 0.0
        %5101 = vmatprep.subr.mxu0 0.0
        %5102 = vmatpush1.msra.mxu0 0.0
        %5103 = vmatprep.subr.mxu0 0.0
        %5104 = vmatpush1.msra.mxu0 0.0
        %5105 = vmatprep.subr.mxu0 0.0
        %5106 = vmatpush1.msra.mxu0 0.0
        %5107 = vmatprep.subr.mxu0 0.0
        %5108 = vmatpush1.msra.mxu0 0.0
        %5109 = vmatprep.subr.mxu0 0.0
        %5110 = vmatpush1.msra.mxu0 0.0
        %5111 = vmatprep.subr.mxu0 0.0
        %5112 = vmatpush1.msra.mxu0 0.0
        %5113 = vmatprep.mubr.f32.mxu0 0.0
        %5114 = vmatmul.mubr.f32.gmra.mrb[0].mxu0 %v4966
        %v5115 = vpop.f32.mrb[0].mxu0
        %v5116 = vadd.f32 0.0, %v5115
        %v5117 = vpop.f32.mrb[0].mxu0
        %5118 = vdwg.mxu0
        %5119 = vmatprep.subr.mxu0 0.0
        %5120 = vmatpush1.msra.mxu0 %v4134
        %5121 = vmatprep.subr.mxu0 0.0
        %5122 = vmatpush1.msra.mxu0 0.0
        %5123 = vmatprep.subr.mxu0 0.0
        %5124 = vmatpush1.msra.mxu0 0.0
        %5125 = vmatprep.subr.mxu0 0.0
        %5126 = vmatpush1.msra.mxu0 0.0
        %5127 = vmatprep.subr.mxu0 0.0
        %5128 = vmatpush1.msra.mxu0 0.0
        %5129 = vmatprep.subr.mxu0 0.0
        %5130 = vmatpush1.msra.mxu0 0.0
        %5131 = vmatprep.subr.mxu0 0.0
        %5132 = vmatpush1.msra.mxu0 0.0
        %5133 = vmatprep.subr.mxu0 0.0
        %5134 = vmatpush1.msra.mxu0 0.0
        %5135 = vmatprep.subr.mxu0 0.0
        %5136 = vmatpush1.msra.mxu0 0.0
        %5137 = vmatprep.subr.mxu0 0.0
        %5138 = vmatpush1.msra.mxu0 0.0
        %5139 = vmatprep.subr.mxu0 0.0
        %5140 = vmatpush1.msra.mxu0 0.0
        %5141 = vmatprep.subr.mxu0 0.0
        %5142 = vmatpush1.msra.mxu0 0.0
        %5143 = vmatprep.subr.mxu0 0.0
        %5144 = vmatpush1.msra.mxu0 0.0
        %5145 = vmatprep.subr.mxu0 0.0
        %5146 = vmatpush1.msra.mxu0 0.0
        %5147 = vmatprep.subr.mxu0 0.0
        %5148 = vmatpush1.msra.mxu0 0.0
        %5149 = vmatprep.subr.mxu0 0.0
        %5150 = vmatpush1.msra.mxu0 0.0
        %5151 = vmatprep.subr.mxu0 0.0
        %5152 = vmatpush1.msra.mxu0 0.0
        %5153 = vmatprep.subr.mxu0 0.0
        %5154 = vmatpush1.msra.mxu0 0.0
        %5155 = vmatprep.subr.mxu0 0.0
        %5156 = vmatpush1.msra.mxu0 0.0
        %5157 = vmatprep.subr.mxu0 0.0
        %5158 = vmatpush1.msra.mxu0 0.0
        %5159 = vmatprep.subr.mxu0 0.0
        %5160 = vmatpush1.msra.mxu0 0.0
        %5161 = vmatprep.subr.mxu0 0.0
        %5162 = vmatpush1.msra.mxu0 0.0
        %5163 = vmatprep.subr.mxu0 0.0
        %5164 = vmatpush1.msra.mxu0 0.0
        %5165 = vmatprep.subr.mxu0 0.0
        %5166 = vmatpush1.msra.mxu0 0.0
        %5167 = vmatprep.subr.mxu0 0.0
        %5168 = vmatpush1.msra.mxu0 0.0
        %5169 = vmatprep.subr.mxu0 0.0
        %5170 = vmatpush1.msra.mxu0 0.0
        %5171 = vmatprep.subr.mxu0 0.0
        %5172 = vmatpush1.msra.mxu0 0.0
        %5173 = vmatprep.subr.mxu0 0.0
        %5174 = vmatpush1.msra.mxu0 0.0
        %5175 = vmatprep.subr.mxu0 0.0
        %5176 = vmatpush1.msra.mxu0 0.0
        %5177 = vmatprep.subr.mxu0 0.0
        %5178 = vmatpush1.msra.mxu0 0.0
        %5179 = vmatprep.subr.mxu0 0.0
        %5180 = vmatpush1.msra.mxu0 0.0
        %5181 = vmatprep.subr.mxu0 0.0
        %5182 = vmatpush1.msra.mxu0 0.0
        %5183 = vmatprep.mubr.f32.mxu0 0.0
        %5184 = vmatmul.mubr.f32.gmra.mrb[0].mxu0 %v4892
        %v5185 = vpop.f32.mrb[0].mxu0
        %v5186 = vadd.f32 %v5116, %v5185
        %v5187 = vpop.f32.mrb[0].mxu0
        %5188 = vdwg.mxu0
        %v5190 = vsel %vm4139, %v4133, 0
        %5192 = vmatprep.subr.mxu0 0.0
        %5193 = vmatpush1.msra.mxu0 %v4285
        %5194 = vmatprep.subr.mxu0 0.0
        %5195 = vmatpush1.msra.mxu0 0.0
        %5196 = vmatprep.subr.mxu0 0.0
        %5197 = vmatpush1.msra.mxu0 0.0
        %5198 = vmatprep.subr.mxu0 0.0
        %5199 = vmatpush1.msra.mxu0 0.0
        %5200 = vmatprep.subr.mxu0 0.0
        %5201 = vmatpush1.msra.mxu0 0.0
        %5202 = vmatprep.subr.mxu0 0.0
        %5203 = vmatpush1.msra.mxu0 0.0
        %5204 = vmatprep.subr.mxu0 0.0
        %5205 = vmatpush1.msra.mxu0 0.0
        %5206 = vmatprep.subr.mxu0 0.0
        %5207 = vmatpush1.msra.mxu0 0.0
        %5208 = vmatprep.subr.mxu0 0.0
        %5209 = vmatpush1.msra.mxu0 0.0
        %5210 = vmatprep.subr.mxu0 0.0
        %5211 = vmatpush1.msra.mxu0 0.0
        %5212 = vmatprep.subr.mxu0 0.0
        %5213 = vmatpush1.msra.mxu0 0.0
        %5214 = vmatprep.subr.mxu0 0.0
        %5215 = vmatpush1.msra.mxu0 0.0
        %5216 = vmatprep.subr.mxu0 0.0
        %5217 = vmatpush1.msra.mxu0 0.0
        %5218 = vmatprep.subr.mxu0 0.0
        %5219 = vmatpush1.msra.mxu0 0.0
        %5220 = vmatprep.subr.mxu0 0.0
        %5221 = vmatpush1.msra.mxu0 0.0
        %5222 = vmatprep.subr.mxu0 0.0
        %5223 = vmatpush1.msra.mxu0 0.0
        %5224 = vmatprep.subr.mxu0 0.0
        %5225 = vmatpush1.msra.mxu0 0.0
        %5226 = vmatprep.subr.mxu0 0.0
        %5227 = vmatpush1.msra.mxu0 0.0
        %5228 = vmatprep.subr.mxu0 0.0
        %5229 = vmatpush1.msra.mxu0 0.0
        %5230 = vmatprep.subr.mxu0 0.0
        %5231 = vmatpush1.msra.mxu0 0.0
        %5232 = vmatprep.subr.mxu0 0.0
        %5233 = vmatpush1.msra.mxu0 0.0
        %5234 = vmatprep.subr.mxu0 0.0
        %5235 = vmatpush1.msra.mxu0 0.0
        %5236 = vmatprep.subr.mxu0 0.0
        %5237 = vmatpush1.msra.mxu0 0.0
        %5238 = vmatprep.subr.mxu0 0.0
        %5239 = vmatpush1.msra.mxu0 0.0
        %5240 = vmatprep.subr.mxu0 0.0
        %5241 = vmatpush1.msra.mxu0 0.0
        %5242 = vmatprep.subr.mxu0 0.0
        %5243 = vmatpush1.msra.mxu0 0.0
        %5244 = vmatprep.subr.mxu0 0.0
        %5245 = vmatpush1.msra.mxu0 0.0
        %5246 = vmatprep.subr.mxu0 0.0
        %5247 = vmatpush1.msra.mxu0 0.0
        %5248 = vmatprep.subr.mxu0 0.0
        %5249 = vmatpush1.msra.mxu0 0.0
        %5250 = vmatprep.subr.mxu0 0.0
        %5251 = vmatpush1.msra.mxu0 0.0
        %5252 = vmatprep.subr.mxu0 0.0
        %5253 = vmatpush1.msra.mxu0 0.0
        %5254 = vmatprep.subr.mxu0 0.0
        %5255 = vmatpush1.msra.mxu0 0.0
        %5256 = vmatprep.mubr.f32.mxu0 0.0
        %5257 = vmatmul.mubr.f32.gmra.mrb[0].mxu0 %v5190
        %v5258 = vpop.f32.mrb[0].mxu0
        %v5259 = vadd.f32 0.0, %v5258
        %v5260 = vpop.f32.mrb[0].mxu0
        %5261 = vdwg.mxu0
        %v5262 = vadd.f32 %v5186, %v5259
        %v5263 = vrot.slane %v4133, 1
        %v5264 = vsel %vm4139, %v5263, 0
        %5266 = vmatprep.subr.mxu0 0.0
        %5267 = vmatpush1.msra.mxu0 %v4361
        %5268 = vmatprep.subr.mxu0 0.0
        %5269 = vmatpush1.msra.mxu0 0.0
        %5270 = vmatprep.subr.mxu0 0.0
        %5271 = vmatpush1.msra.mxu0 0.0
        %5272 = vmatprep.subr.mxu0 0.0
        %5273 = vmatpush1.msra.mxu0 0.0
        %5274 = vmatprep.subr.mxu0 0.0
        %5275 = vmatpush1.msra.mxu0 0.0
        %5276 = vmatprep.subr.mxu0 0.0
        %5277 = vmatpush1.msra.mxu0 0.0
        %5278 = vmatprep.subr.mxu0 0.0
        %5279 = vmatpush1.msra.mxu0 0.0
        %5280 = vmatprep.subr.mxu0 0.0
        %5281 = vmatpush1.msra.mxu0 0.0
        %5282 = vmatprep.subr.mxu0 0.0
        %5283 = vmatpush1.msra.mxu0 0.0
        %5284 = vmatprep.subr.mxu0 0.0
        %5285 = vmatpush1.msra.mxu0 0.0
        %5286 = vmatprep.subr.mxu0 0.0
        %5287 = vmatpush1.msra.mxu0 0.0
        %5288 = vmatprep.subr.mxu0 0.0
        %5289 = vmatpush1.msra.mxu0 0.0
        %5290 = vmatprep.subr.mxu0 0.0
        %5291 = vmatpush1.msra.mxu0 0.0
        %5292 = vmatprep.subr.mxu0 0.0
        %5293 = vmatpush1.msra.mxu0 0.0
        %5294 = vmatprep.subr.mxu0 0.0
        %5295 = vmatpush1.msra.mxu0 0.0
        %5296 = vmatprep.subr.mxu0 0.0
        %5297 = vmatpush1.msra.mxu0 0.0
        %5298 = vmatprep.subr.mxu0 0.0
        %5299 = vmatpush1.msra.mxu0 0.0
        %5300 = vmatprep.subr.mxu0 0.0
        %5301 = vmatpush1.msra.mxu0 0.0
        %5302 = vmatprep.subr.mxu0 0.0
        %5303 = vmatpush1.msra.mxu0 0.0
        %5304 = vmatprep.subr.mxu0 0.0
        %5305 = vmatpush1.msra.mxu0 0.0
        %5306 = vmatprep.subr.mxu0 0.0
        %5307 = vmatpush1.msra.mxu0 0.0
        %5308 = vmatprep.subr.mxu0 0.0
        %5309 = vmatpush1.msra.mxu0 0.0
        %5310 = vmatprep.subr.mxu0 0.0
        %5311 = vmatpush1.msra.mxu0 0.0
        %5312 = vmatprep.subr.mxu0 0.0
        %5313 = vmatpush1.msra.mxu0 0.0
        %5314 = vmatprep.subr.mxu0 0.0
        %5315 = vmatpush1.msra.mxu0 0.0
        %5316 = vmatprep.subr.mxu0 0.0
        %5317 = vmatpush1.msra.mxu0 0.0
        %5318 = vmatprep.subr.mxu0 0.0
        %5319 = vmatpush1.msra.mxu0 0.0
        %5320 = vmatprep.subr.mxu0 0.0
        %5321 = vmatpush1.msra.mxu0 0.0
        %5322 = vmatprep.subr.mxu0 0.0
        %5323 = vmatpush1.msra.mxu0 0.0
        %5324 = vmatprep.subr.mxu0 0.0
        %5325 = vmatpush1.msra.mxu0 0.0
        %5326 = vmatprep.subr.mxu0 0.0
        %5327 = vmatpush1.msra.mxu0 0.0
        %5328 = vmatprep.subr.mxu0 0.0
        %5329 = vmatpush1.msra.mxu0 0.0
        %5330 = vmatprep.mubr.f32.mxu0 0.0
        %5331 = vmatmul.mubr.f32.gmra.mrb[0].mxu0 %v5264
        %v5332 = vpop.f32.mrb[0].mxu0
        %v5333 = vadd.f32 0.0, %v5332
        %v5334 = vpop.f32.mrb[0].mxu0
        %5335 = vdwg.mxu0
        %v5336 = vadd.f32 %v5262, %v5333
        %v5337 = vadd.f32 %v5336, %v4441
        %v5338 = vmax.f32 %v5337, 0.0
        %v5339 = vsel %vm4445, %v5338, -inf
        %v5340 = vrot.slane %v5339, 4
        %v5341 = vmax.f32 %v5339, %v5340
        %v5342 = vrot.slane %v5341, 2
        %v5343 = vmax.f32 %v5341, %v5342
        %v5344 = vrot.slane %v5343, 1
        %v5345 = vmax.f32 %v5343, %v5344
        %v5346 = vmax.f32 %v5048, %v5345
        %v5347 = vld [vmem:[%s5] sm:$0xff]
        %v5348 = vld [vmem:[%s5 + $0x8] sm:$0xff]
        %v5349 = vld [vmem:[%s6] sm:$0x1]
        %vm5350 = vcmask 130048
        %v5352 = vsel %vm5350, %v5346, 0
        %5354 = vmatprep.subr.mxu0 0.0
        %5355 = vmatpush1.msra.mxu0 %v5347
        %5356 = vmatprep.subr.mxu0 0.0
        %5357 = vmatpush1.msra.mxu0 %v5348
        %5358 = vmatprep.subr.mxu0 0.0
        %5359 = vmatpush1.msra.mxu0 0.0
        %5360 = vmatprep.subr.mxu0 0.0
        %5361 = vmatpush1.msra.mxu0 0.0
        %5362 = vmatprep.subr.mxu0 0.0
        %5363 = vmatpush1.msra.mxu0 0.0
        %5364 = vmatprep.subr.mxu0 0.0
        %5365 = vmatpush1.msra.mxu0 0.0
        %5366 = vmatprep.subr.mxu0 0.0
        %5367 = vmatpush1.msra.mxu0 0.0
        %5368 = vmatprep.subr.mxu0 0.0
        %5369 = vmatpush1.msra.mxu0 0.0
        %5370 = vmatprep.subr.mxu0 0.0
        %5371 = vmatpush1.msra.mxu0 0.0
        %5372 = vmatprep.subr.mxu0 0.0
        %5373 = vmatpush1.msra.mxu0 0.0
        %5374 = vmatprep.subr.mxu0 0.0
        %5375 = vmatpush1.msra.mxu0 0.0
        %5376 = vmatprep.subr.mxu0 0.0
        %5377 = vmatpush1.msra.mxu0 0.0
        %5378 = vmatprep.subr.mxu0 0.0
        %5379 = vmatpush1.msra.mxu0 0.0
        %5380 = vmatprep.subr.mxu0 0.0
        %5381 = vmatpush1.msra.mxu0 0.0
        %5382 = vmatprep.subr.mxu0 0.0
        %5383 = vmatpush1.msra.mxu0 0.0
        %5384 = vmatprep.subr.mxu0 0.0
        %5385 = vmatpush1.msra.mxu0 0.0
        %5386 = vmatprep.subr.mxu0 0.0
        %5387 = vmatpush1.msra.mxu0 0.0
        %5388 = vmatprep.subr.mxu0 0.0
        %5389 = vmatpush1.msra.mxu0 0.0
        %5390 = vmatprep.subr.mxu0 0.0
        %5391 = vmatpush1.msra.mxu0 0.0
        %5392 = vmatprep.subr.mxu0 0.0
        %5393 = vmatpush1.msra.mxu0 0.0
        %5394 = vmatprep.subr.mxu0 0.0
        %5395 = vmatpush1.msra.mxu0 0.0
        %5396 = vmatprep.subr.mxu0 0.0
        %5397 = vmatpush1.msra.mxu0 0.0
        %5398 = vmatprep.subr.mxu0 0.0
        %5399 = vmatpush1.msra.mxu0 0.0
        %5400 = vmatprep.subr.mxu0 0.0
        %5401 = vmatpush1.msra.mxu0 0.0
        %5402 = vmatprep.subr.mxu0 0.0
        %5403 = vmatpush1.msra.mxu0 0.0
        %5404 = vmatprep.subr.mxu0 0.0
        %5405 = vmatpush1.msra.mxu0 0.0
        %5406 = vmatprep.subr.mxu0 0.0
        %5407 = vmatpush1.msra.mxu0 0.0
        %5408 = vmatprep.subr.mxu0 0.0
        %5409 = vmatpush1.msra.mxu0 0.0
        %5410 = vmatprep.subr.mxu0 0.0
        %5411 = vmatpush1.msra.mxu0 0.0
        %5412 = vmatprep.subr.mxu0 0.0
        %5413 = vmatpush1.msra.mxu0 0.0
        %5414 = vmatprep.subr.mxu0 0.0
        %5415 = vmatpush1.msra.mxu0 0.0
        %5416 = vmatprep.subr.mxu0 0.0
        %5417 = vmatpush1.msra.mxu0 0.0
        %5418 = vmatprep.mubr.f32.mxu0 0.0
        %5419 = vmatmul.mubr.f32.gmra.mrb[0].mxu0 %v5352
        %v5420 = vpop.f32.mrb[0].mxu0
        %v5421 = vadd.f32 %v5349, %v5420
        %v5422 = vpop.f32.mrb[0].mxu0
        %5423 = vdwg.mxu0
        %vm5424 = vcmask 40960
        %5425 = vst.msk [vmem:[%s270] sm:$0x1] %vm5424, %v5421
        %s5426 = sand.u32 %s181, 1
        %s5427 = scalar_lea.sflag [#allocation3], %s5426
        %s5428 = sand.u32 %s181, 1
        %s5429 = scalar_lea.vmem [#allocation2], %s5428
        // Predicated region
        $region49: #{cnn_digit_forward.1} parent=47 // pred_check
          %p5430 = pneg %p191
        $region50: #{cnn_digit_forward.1} parent=47 // pred_check_branch
          %5432 = sbr.rel (%p5430) target = $region52
        $region51: #{cnn_digit_forward.1} parent=47 // pred_region
          %s5434 = ssub.s32 16, 16
          %5435 = vsyncadd %s5427, %s5434
          %s5436 = smul.addr %s21, 16
          %s5437 = scalar_lea.hbm %s7, %s5436
          %s5439 = sshll.u32 %s5429, 4
          %s5440 = int_to_ptr.vmem [resolvable:$true] %s5439
          %5442 = dma.vmem_to_hbm [thread:$0]  %s5440, 16, %s5437, %s5427
        $region52: #{cnn_digit_forward.1} parent=47 // pred_fallthru
          _
      $region48: #{cnn_digit_forward.1} parent=5 // pred_fallthru
        _
      %p5443 = scmp.le.s32.totalorder 2, %s16
      // Predicated region
      $region53: #{cnn_digit_forward.1} parent=5 // pred_check
        %p5444 = pneg %p5443
      $region54: #{cnn_digit_forward.1} parent=5 // pred_check_branch
        %5446 = sbr.rel (%p5444) target = $region56
      $region55: #{cnn_digit_forward.1} parent=5 // pred_region
        %s5447 = ssub.s32 %s16, 2
        // Predicated region
        $region57: #{cnn_digit_forward.1} parent=55 // pred_check
          %p5448 = pneg %p197
        $region58: #{cnn_digit_forward.1} parent=55 // pred_check_branch
          %5450 = sbr.rel (%p5448) target = $region60
        $region59: #{cnn_digit_forward.1} parent=55 // pred_region
          %s5451 = sand.u32 %s182, 1
          %s5452 = scalar_lea.sflag [#allocation3], %s5451
          %s5453 = sand.u32 %s182, 1
          %s5454 = scalar_lea.vmem [#allocation2], %s5453
          %5455 = dma.done %s5452, 16
        $region60: #{cnn_digit_forward.1} parent=55 // pred_fallthru
          _
      $region56: #{cnn_digit_forward.1} parent=5 // pred_fallthru
        _
    $region6: #{cnn_digit_forward.1} parent=1 // loop_footer
      %s20 = sadd.s32 1, %s16
    $region7: #{cnn_digit_forward.1} parent=1 // loop_footer_branch
      %15 = sbr.rel target = $region3
    $region8: #{cnn_digit_forward.1} parent=1 // loop_exit
      _
    %5456 = vsyncpa [#allocation3], 1
    %s5457 = scalar_lea.sflag [#allocation3], 1
    %5458 = vsyncpa %s5457, 1

</llo_original>
